<compile_context>
chip_gen: v6e
topology: v6e:2x2x1
jax: 0.10.0
libtpu: 0.0.40
codegen_flags: <defaults>
</compile_context>

<pallas_src>
import functools

import jax
import jax.numpy as jnp
from jax.experimental import pallas as pl
from jax.experimental.pallas import tpu as pltpu


# ------------------------- in-kernel helpers -------------------------------

def _layer_norm(x, gamma, beta, eps=1e-5):
    mu = jnp.mean(x, axis=-1, keepdims=True)
    var = jnp.mean((x - mu) ** 2, axis=-1, keepdims=True)
    return (x - mu) * jax.lax.rsqrt(var + eps) * gamma + beta


def _softmax_last(x):
    m = jnp.max(x, axis=-1, keepdims=True)
    e = jnp.exp(x - m)
    s = jnp.sum(e, axis=-1, keepdims=True)
    # approx reciprocal runs in the (otherwise idle) EUP slot on the softmax
    # hot path, freeing VALU bundles.
    return e * pl.reciprocal(s, approx=True)


def _gelu_exact(x):
    # nn.GELU() default = exact erf formulation
    return 0.5 * x * (1.0 + jax.lax.erf(x * jnp.float32(0.7071067811865476)))


# ------------------------------ kernel --------------------------------------

def _encoder_layer_kernel(emb_ref, mask_ref, ln_emb_ref,
                          wqkv_ref, bqkv_ref, wao_ref, bao_ref, ln1_ref,
                          wi_ref, bi_ref, wo_ref, bo_ref, ln2_ref,
                          out_ref, h_ref, *, B, S, H, NH):
    l = pl.program_id(0)
    hd = H // NH
    BS = B * S
    scale = jnp.float32(1.0) / jnp.sqrt(jnp.float32(hd))

    # Layer 0: embeddings LayerNorm (+ embeddings dropout == identity in eval).
    @pl.when(l == 0)
    def _():
        ln_emb = ln_emb_ref[...]                              # (2, H) f32
        x = emb_ref[...].astype(jnp.float32).reshape(BS, H)   # (BS, H)
        h_ref[...] = _layer_norm(x, ln_emb[0], ln_emb[1])
    # TODO(synk): for v7x, give `emb` memory_space=pl.ANY and DMA it in only
    # at l==0 instead of keeping its block resident for all L steps.

    h = h_ref[...]                                            # (BS, H) f32 carry
    # Additive key mask, (B, 1, S): broadcasts over query rows (and heads).
    neg = (1.0 - mask_ref[...].astype(jnp.float32)) * jnp.float32(-10000.0)

    # ---- multi-head self-attention (fused QKV projection, bf16 MXU) ----
    h_bf = h.astype(jnp.bfloat16)
    qkv = jnp.dot(h_bf, wqkv_ref[0],
                  preferred_element_type=jnp.float32) + bqkv_ref[0]   # (BS, 3H)
    q = qkv[:, 0 * H:1 * H].reshape(B, S, H)
    k = qkv[:, 1 * H:2 * H].reshape(B, S, H)
    v = qkv[:, 2 * H:3 * H].reshape(B, S, H)
    wao = wao_ref[0]                                          # (H, H) bf16

    # Per-head scores are batched over B in one dot_general; each head's
    # context is folded straight into the output projection through its wao
    # row-slab, so no (BS, H) ctx concatenate is ever materialized.
    # TODO(synk): with production head_dim (multiples of 128 lanes), pack head
    # columns to 128-lane boundaries wrapper-side and batch heads into the
    # dot_general batch dim instead of this static unroll (NH small & fixed).
    attn = jnp.zeros((BS, H), jnp.float32)
    for head in range(NH):
        sl = slice(head * hd, (head + 1) * hd)
        qh = q[:, :, sl].astype(jnp.bfloat16)
        kh = k[:, :, sl].astype(jnp.bfloat16)
        vh = v[:, :, sl].astype(jnp.bfloat16)
        scores = jax.lax.dot_general(
            qh, kh, (((2,), (2,)), ((0,), (0,))),
            preferred_element_type=jnp.float32) * scale       # (B, S, S) f32
        probs = _softmax_last(scores + neg)                   # dropout: identity
        ctx = jax.lax.dot_general(
            probs.astype(jnp.bfloat16), vh, (((2,), (1,)), ((0,), (0,))),
            preferred_element_type=jnp.float32)               # (B, S, hd) f32
        attn = attn + jnp.dot(ctx.reshape(BS, hd).astype(jnp.bfloat16),
                              wao[sl, :],
                              preferred_element_type=jnp.float32)

    attn = attn + bao_ref[0]
    ln1 = ln1_ref[0]                                          # (2, H)
    attn_out = _layer_norm(h + attn, ln1[0], ln1[1])          # dropout: identity

    # ---- feed-forward ----
    # TODO(synk): for v7x (64 MiB VMEM) at production H/I, chunk the FFN over
    # the intermediate dim I (K-tiled wi/wo with an f32 accumulator) instead
    # of one full (BS, I) activation.
    inter = jnp.dot(attn_out.astype(jnp.bfloat16), wi_ref[0],
                    preferred_element_type=jnp.float32) + bi_ref[0]
    inter = _gelu_exact(inter)
    ffn = jnp.dot(inter.astype(jnp.bfloat16), wo_ref[0],
                  preferred_element_type=jnp.float32) + bo_ref[0]
    ln2 = ln2_ref[0]
    h_new = _layer_norm(attn_out + ffn, ln2[0], ln2[1])       # dropout: identity

    h_ref[...] = h_new                                        # carry to next layer

    @pl.when(l == pl.num_programs(0) - 1)
    def _():
        out_ref[...] = h_new.reshape(B, S, H).astype(out_ref.dtype)


# ------------------------------ wrapper --------------------------------------

def transformer_encoder(emb, mask, params, *, num_heads, num_layers,
                        intermediate_size):
    B, S, H = emb.shape
    I = intermediate_size
    L = num_layers

    kernel = functools.partial(_encoder_layer_kernel, B=B, S=S, H=H,
                               NH=num_heads)

    inputs = (emb, mask, params["ln_emb"],
              params["w_qkv"], params["b_qkv"],
              params["w_ao"], params["b_ao"], params["ln1"],
              params["wi"], params["bi"],
              params["wo"], params["bo"], params["ln2"])

    fixed3 = lambda l: (0, 0, 0)      # resident across the layer loop
    fixed2 = lambda l: (0, 0)
    per_layer = lambda l: (l, 0, 0)   # streamed layer-by-layer

    in_specs = [
        pl.BlockSpec((B, S, H), fixed3),             # embeddings (read at l==0)
        pl.BlockSpec((B, 1, S), fixed3),             # attention mask
        pl.BlockSpec((2, H), fixed2),                # embeddings LayerNorm
        pl.BlockSpec((1, H, 3 * H), per_layer),      # fused QKV weight (bf16)
        pl.BlockSpec((1, 1, 3 * H), per_layer),      # fused QKV bias
        pl.BlockSpec((1, H, H), per_layer),          # attention output weight
        pl.BlockSpec((1, 1, H), per_layer),          # attention output bias
        pl.BlockSpec((1, 2, H), per_layer),          # attention LayerNorm
        pl.BlockSpec((1, H, I), per_layer),          # intermediate weight
        pl.BlockSpec((1, 1, I), per_layer),          # intermediate bias
        pl.BlockSpec((1, I, H), per_layer),          # FFN output weight
        pl.BlockSpec((1, 1, H), per_layer),          # FFN output bias
        pl.BlockSpec((1, 2, H), per_layer),          # output LayerNorm
    ]

    # Advisory cost estimate: weights are counted ONCE (they stream once).
    flops = 2 * L * (B * S * H * 3 * H            # fused QKV
                     + 2 * B * S * S * H          # scores + probs @ V
                     + B * S * H * H              # attention output proj
                     + 2 * B * S * H * I)         # FFN
    transcendentals = L * (num_heads * B * S * S + B * S * I)
    weight_bytes = L * 2 * (3 * H * H + H * H + 2 * H * I)            # bf16
    small_bytes = L * 4 * (3 * H + H + I + H + 6 * H) + 4 * 2 * H     # f32
    act_bytes = B * S * H * 4 * 2 + B * S * 4
    cost = pl.CostEstimate(
        flops=int(flops), transcendentals=int(transcendentals),
        bytes_accessed=int(weight_bytes + small_bytes + act_bytes))

    # VMEM budget: double-buffered bf16 per-layer weights + resident
    # emb/mask/out blocks + f32 carry + f32 activation headroom.  Clamp to
    # 64 MiB so the budget is legal on v7x as well as v5e/v6e (128 MiB parts
    # could go higher, e.g. ~100 MiB, via the same knob).
    weight_buf = 2 * 2 * (H * 3 * H + H * H + 2 * H * I)
    resident = 4 * (2 * B * S * H + B * S) + 4 * B * S * H
    acts = 4 * (B * S * 3 * H + B * S * I + B * S * S + 4 * B * S * H)
    budget = 2 * (weight_buf + resident + acts) + (8 << 20)
    vmem_limit = int(min(max(budget, 32 << 20), 64 << 20))

    # TODO(synk): on v7x keep a small leading "parallel" grid axis (split B in
    # two) so both TensorCores are used; grid=(L,) runs on a single core.
    return pl.pallas_call(
        kernel,
        out_shape=jax.ShapeDtypeStruct((B, S, H), jnp.float32),
        grid_spec=pltpu.PrefetchScalarGridSpec(
            num_scalar_prefetch=0,
            grid=(L,),                         # layer axis only: weights stream once
            in_specs=in_specs,
            out_specs=pl.BlockSpec((B, S, H), fixed3),
            scratch_shapes=[pltpu.VMEM((B * S, H), jnp.float32)],  # hidden carry
        ),
        compiler_params=pltpu.CompilerParams(
            dimension_semantics=("arbitrary",),
            vmem_limit_bytes=vmem_limit),
        cost_estimate=cost,
    )(*inputs)


# ---------------------------- param init -------------------------------------

def init_params(key, *, hidden, num_layers, intermediate,
                weight_dtype=jnp.bfloat16):
    H, L, I = hidden, num_layers, intermediate
    ks = jax.random.split(key, 4)
    std = 0.02
    ones_lh = jnp.ones((L, H), jnp.float32)
    zeros_lh = jnp.zeros((L, H), jnp.float32)
    # Weights are stored (in, out) — the transpose of PyTorch nn.Linear's
    # (out, in) — and Q/K/V are packed into a single (H, 3H) slab per layer.
    return {
        "ln_emb": jnp.stack([jnp.ones((H,), jnp.float32),
                             jnp.zeros((H,), jnp.float32)]),             # (2, H)
        "w_qkv": (std * jax.random.normal(ks[0], (L, H, 3 * H),
                                          jnp.float32)).astype(weight_dtype),
        "b_qkv": jnp.zeros((L, 1, 3 * H), jnp.float32),
        "w_ao": (std * jax.random.normal(ks[1], (L, H, H),
                                         jnp.float32)).astype(weight_dtype),
        "b_ao": jnp.zeros((L, 1, H), jnp.float32),
        "ln1": jnp.stack([ones_lh, zeros_lh], axis=1),                   # (L, 2, H)
        "wi": (std * jax.random.normal(ks[2], (L, H, I),
                                       jnp.float32)).astype(weight_dtype),
        "bi": jnp.zeros((L, 1, I), jnp.float32),
        "wo": (std * jax.random.normal(ks[3], (L, I, H),
                                       jnp.float32)).astype(weight_dtype),
        "bo": jnp.zeros((L, 1, H), jnp.float32),
        "ln2": jnp.stack([ones_lh, zeros_lh], axis=1),                   # (L, 2, H)
    }


# --------------------------- pure-JAX reference -------------------------------

def _reference(emb, mask, params, *, num_heads, num_layers):
    H = emb.shape[-1]
    hd = H // num_heads

    def ln(x, g, b, eps=1e-5):
        mu = x.mean(-1, keepdims=True)
        var = ((x - mu) ** 2).mean(-1, keepdims=True)
        return (x - mu) / jnp.sqrt(var + eps) * g + b

    h = ln(emb, params["ln_emb"][0], params["ln_emb"][1])
    neg = (1.0 - mask[:, None, :, :]) * -10000.0          # (B,1,1,S)
    for l in range(num_layers):
        qkv = h @ params["w_qkv"][l].astype(jnp.float32) + params["b_qkv"][l]
        q, k, v = jnp.split(qkv, 3, axis=-1)

        def heads(x):
            B, S, _ = x.shape
            return x.reshape(B, S, num_heads, hd).transpose(0, 2, 1, 3)

        qh, kh, vh = heads(q), heads(k), heads(v)
        scores = qh @ kh.transpose(0, 1, 3, 2) / jnp.sqrt(jnp.float32(hd))
        probs = jax.nn.softmax(scores + neg, axis=-1)
        ctx = (probs @ vh).transpose(0, 2, 1, 3).reshape(h.shape)
        ao = ctx @ params["w_ao"][l].astype(jnp.float32) + params["b_ao"][l]
        h1 = ln(h + ao, params["ln1"][l, 0], params["ln1"][l, 1])
        inter = jax.nn.gelu(h1 @ params["wi"][l].astype(jnp.float32)
                            + params["bi"][l], approximate=False)
        ffn = inter @ params["wo"][l].astype(jnp.float32) + params["bo"][l]
        h = ln(h1 + ffn, params["ln2"][l, 0], params["ln2"][l, 1])
    return h


# ------------------------------- demo -----------------------------------------

if __name__ == "__main__":
    B, S, H = 2, 8, 32
    NUM_HEADS, NUM_LAYERS, INTERMEDIATE = 8, 2, 1024

    key = jax.random.PRNGKey(0)
    k_emb, k_par = jax.random.split(key)

    embeddings = jax.random.normal(k_emb, (B, S, H), jnp.float32)
    attention_mask = jnp.ones((B, 1, S), jnp.float32)
    attention_mask = attention_mask.at[1, 0, -2:].set(0.0)   # mask 2 tokens

    params = init_params(k_par, hidden=H, num_layers=NUM_LAYERS,
                         intermediate=INTERMEDIATE)

    out = transformer_encoder(embeddings, attention_mask, params,
                              num_heads=NUM_HEADS, num_layers=NUM_LAYERS,
                              intermediate_size=INTERMEDIATE)
    out = jax.block_until_ready(out)
    assert out.shape == (B, S, H)

    ref = jax.block_until_ready(
        _reference(embeddings, attention_mask, params,
                   num_heads=NUM_HEADS, num_layers=NUM_LAYERS))
    # bf16 weights / bf16 MXU inputs vs f32 reference: generous tolerance.
    assert float(jnp.max(jnp.abs(out - ref))) < 0.1

    print("KERNEL_OK")
</pallas_src>

<mosaic_0001>
module attributes {stable_mosaic.version = 11 : i64} {
  func.func @_encoder_layer_kernel(%arg0: i32, %arg1: memref<2x8x32xf32, #tpu.memory_space<vmem>>, %arg2: memref<2x1x8xf32, #tpu.memory_space<vmem>>, %arg3: memref<2x32xf32, #tpu.memory_space<vmem>>, %arg4: memref<1x32x96xbf16, #tpu.memory_space<vmem>>, %arg5: memref<1x1x96xf32, #tpu.memory_space<vmem>>, %arg6: memref<1x32x32xbf16, #tpu.memory_space<vmem>>, %arg7: memref<1x1x32xf32, #tpu.memory_space<vmem>>, %arg8: memref<1x2x32xf32, #tpu.memory_space<vmem>>, %arg9: memref<1x32x1024xbf16, #tpu.memory_space<vmem>>, %arg10: memref<1x1x1024xf32, #tpu.memory_space<vmem>>, %arg11: memref<1x1024x32xbf16, #tpu.memory_space<vmem>>, %arg12: memref<1x1x32xf32, #tpu.memory_space<vmem>>, %arg13: memref<1x2x32xf32, #tpu.memory_space<vmem>>, %arg14: memref<2x8x32xf32, #tpu.memory_space<vmem>>, %arg15: memref<16x32xf32, #tpu.memory_space<vmem>>) attributes {dimension_semantics = [#tpu.dimension_semantics<arbitrary>], iteration_bounds = array<i64: 2>, scalar_prefetch = 0 : i64, scratch_operands = 1 : i64, tpu.core_type = #tpu.core_type<tc>, window_params = [{pipeline_mode = #tpu.pipeline_mode<synchronous>, transform_indices = @transform_0, window_bounds = array<i64: 2, 8, 32>}, {pipeline_mode = #tpu.pipeline_mode<synchronous>, transform_indices = @transform_1, window_bounds = array<i64: 2, 1, 8>}, {pipeline_mode = #tpu.pipeline_mode<synchronous>, transform_indices = @transform_2, window_bounds = array<i64: 2, 32>}, {transform_indices = @transform_3, window_bounds = array<i64: 1, 32, 96>}, {transform_indices = @transform_4, window_bounds = array<i64: 1, 1, 96>}, {transform_indices = @transform_5, window_bounds = array<i64: 1, 32, 32>}, {transform_indices = @transform_6, window_bounds = array<i64: 1, 1, 32>}, {transform_indices = @transform_7, window_bounds = array<i64: 1, 2, 32>}, {transform_indices = @transform_8, window_bounds = array<i64: 1, 32, 1024>}, {transform_indices = @transform_9, window_bounds = array<i64: 1, 1, 1024>}, {transform_indices = @transform_10, window_bounds = array<i64: 1, 1024, 32>}, {transform_indices = @transform_11, window_bounds = array<i64: 1, 1, 32>}, {transform_indices = @transform_12, window_bounds = array<i64: 1, 2, 32>}, {pipeline_mode = #tpu.pipeline_mode<synchronous>, transform_indices = @transform_13, window_bounds = array<i64: 2, 8, 32>}]} {
    %cst = arith.constant 4.000000e+00 : f32
    %0 = math.sqrt %cst : f32
    %cst_0 = arith.constant 1.000000e+00 : f32
    %1 = arith.divf %cst_0, %0 : f32
    %c0_i32 = arith.constant 0 : i32
    %2 = arith.cmpi eq, %arg0, %c0_i32 : i32
    %3 = arith.extui %2 : i1 to i32
    %c0_i32_1 = arith.constant 0 : i32
    %4 = arith.cmpi ne, %3, %c0_i32_1 : i32
    scf.if %4 {
      %c0_98 = arith.constant 0 : index
      %c0_99 = arith.constant 0 : index
      %346 = vector.load %arg3[%c0_98, %c0_99] : memref<2x32xf32, #tpu.memory_space<vmem>>, vector<2x32xf32>
      %c0_100 = arith.constant 0 : index
      %c0_101 = arith.constant 0 : index
      %c0_102 = arith.constant 0 : index
      %347 = vector.load %arg1[%c0_100, %c0_101, %c0_102] : memref<2x8x32xf32, #tpu.memory_space<vmem>>, vector<2x8x32xf32>
      %348 = vector.shape_cast %347 : vector<2x8x32xf32> to vector<16x32xf32>
      %349 = vector.extract_strided_slice %346 {offsets = [0, 0], sizes = [1, 32], strides = [1, 1]} : vector<2x32xf32> to vector<1x32xf32>
      %350 = vector.shape_cast %349 : vector<1x32xf32> to vector<32xf32>
      %351 = vector.extract_strided_slice %346 {offsets = [1, 0], sizes = [1, 32], strides = [1, 1]} : vector<2x32xf32> to vector<1x32xf32>
      %352 = vector.shape_cast %351 : vector<1x32xf32> to vector<32xf32>
      %cst_103 = arith.constant dense<0.000000e+00> : vector<16xf32>
      %353 = vector.multi_reduction <add>, %348, %cst_103 [1] : vector<16x32xf32> to vector<16xf32>
      %354 = vector.shape_cast %353 : vector<16xf32> to vector<16x1xf32>
      %cst_104 = arith.constant 3.200000e+01 : f32
      %355 = vector.broadcast %cst_104 : f32 to vector<16x1xf32>
      %356 = arith.divf %354, %355 : vector<16x1xf32>
      %357 = vector.broadcast %356 : vector<16x1xf32> to vector<16x32xf32>
      %358 = arith.subf %348, %357 : vector<16x32xf32>
      %359 = arith.mulf %358, %358 : vector<16x32xf32>
      %cst_105 = arith.constant dense<0.000000e+00> : vector<16xf32>
      %360 = vector.multi_reduction <add>, %359, %cst_105 [1] : vector<16x32xf32> to vector<16xf32>
      %361 = vector.shape_cast %360 : vector<16xf32> to vector<16x1xf32>
      %cst_106 = arith.constant 3.200000e+01 : f32
      %362 = vector.broadcast %cst_106 : f32 to vector<16x1xf32>
      %363 = arith.divf %361, %362 : vector<16x1xf32>
      %364 = vector.broadcast %356 : vector<16x1xf32> to vector<16x32xf32>
      %365 = arith.subf %348, %364 : vector<16x32xf32>
      %cst_107 = arith.constant 9.99999974E-6 : f32
      %366 = vector.broadcast %cst_107 : f32 to vector<16x1xf32>
      %367 = arith.addf %363, %366 : vector<16x1xf32>
      %368 = math.rsqrt %367 : vector<16x1xf32>
      %369 = vector.broadcast %368 : vector<16x1xf32> to vector<16x32xf32>
      %370 = arith.mulf %365, %369 : vector<16x32xf32>
      %371 = vector.shape_cast %350 : vector<32xf32> to vector<1x32xf32>
      %372 = vector.broadcast %371 : vector<1x32xf32> to vector<16x32xf32>
      %373 = arith.mulf %370, %372 : vector<16x32xf32>
      %374 = vector.shape_cast %352 : vector<32xf32> to vector<1x32xf32>
      %375 = vector.broadcast %374 : vector<1x32xf32> to vector<16x32xf32>
      %376 = arith.addf %373, %375 : vector<16x32xf32>
      %c0_108 = arith.constant 0 : index
      %c0_109 = arith.constant 0 : index
      %377 = vector.load %arg15[%c0_108, %c0_109] : memref<16x32xf32, #tpu.memory_space<vmem>>, vector<16x32xf32>
      tpu.vector_store %arg15[%c0_108, %c0_109], %376 {strides = array<i32>} : memref<16x32xf32, #tpu.memory_space<vmem>>, vector<16x32xf32>,
    } else {
    }
    %c0 = arith.constant 0 : index
    %c0_2 = arith.constant 0 : index
    %5 = vector.load %arg15[%c0, %c0_2] : memref<16x32xf32, #tpu.memory_space<vmem>>, vector<16x32xf32>
    %c0_3 = arith.constant 0 : index
    %c0_4 = arith.constant 0 : index
    %c0_5 = arith.constant 0 : index
    %6 = vector.load %arg2[%c0_3, %c0_4, %c0_5] : memref<2x1x8xf32, #tpu.memory_space<vmem>>, vector<2x1x8xf32>
    %cst_6 = arith.constant 1.000000e+00 : f32
    %7 = vector.broadcast %cst_6 : f32 to vector<2x1x8xf32>
    %8 = arith.subf %7, %6 : vector<2x1x8xf32>
    %cst_7 = arith.constant -1.000000e+04 : f32
    %9 = vector.broadcast %cst_7 : f32 to vector<2x1x8xf32>
    %10 = arith.mulf %8, %9 : vector<2x1x8xf32>
    %11 = arith.truncf %5 : vector<16x32xf32> to vector<16x32xbf16>
    %c0_8 = arith.constant 0 : index
    %c0_9 = arith.constant 0 : index
    %c0_10 = arith.constant 0 : index
    %12 = vector.load %arg4[%c0_8, %c0_9, %c0_10] : memref<1x32x96xbf16, #tpu.memory_space<vmem>>, vector<1x32x96xbf16>
    %13 = vector.shape_cast %12 : vector<1x32x96xbf16> to vector<32x96xbf16>
    %cst_11 = arith.constant dense<0.000000e+00> : vector<16x96xf32>
    %14 = tpu.matmul %11, %13, %cst_11 {dimension_numbers = #tpu.dot_dimension_numbers<[1], [0], [0], [1], [0, 0, 1, 1], [], []>} : vector<16x32xbf16>, vector<32x96xbf16>, vector<16x96xf32> -> vector<16x96xf32>
    %c0_12 = arith.constant 0 : index
    %c0_13 = arith.constant 0 : index
    %c0_14 = arith.constant 0 : index
    %15 = vector.load %arg5[%c0_12, %c0_13, %c0_14] : memref<1x1x96xf32, #tpu.memory_space<vmem>>, vector<1x1x96xf32>
    %16 = vector.shape_cast %15 : vector<1x1x96xf32> to vector<1x96xf32>
    %17 = vector.broadcast %16 : vector<1x96xf32> to vector<16x96xf32>
    %18 = arith.addf %14, %17 : vector<16x96xf32>
    %19 = vector.extract_strided_slice %18 {offsets = [0, 0], sizes = [16, 32], strides = [1, 1]} : vector<16x96xf32> to vector<16x32xf32>
    %20 = vector.shape_cast %19 : vector<16x32xf32> to vector<2x8x32xf32>
    %21 = vector.extract_strided_slice %18 {offsets = [0, 32], sizes = [16, 32], strides = [1, 1]} : vector<16x96xf32> to vector<16x32xf32>
    %22 = vector.shape_cast %21 : vector<16x32xf32> to vector<2x8x32xf32>
    %23 = vector.extract_strided_slice %18 {offsets = [0, 64], sizes = [16, 32], strides = [1, 1]} : vector<16x96xf32> to vector<16x32xf32>
    %24 = vector.shape_cast %23 : vector<16x32xf32> to vector<2x8x32xf32>
    %c0_15 = arith.constant 0 : index
    %c0_16 = arith.constant 0 : index
    %c0_17 = arith.constant 0 : index
    %25 = vector.load %arg6[%c0_15, %c0_16, %c0_17] : memref<1x32x32xbf16, #tpu.memory_space<vmem>>, vector<1x32x32xbf16>
    %26 = vector.shape_cast %25 : vector<1x32x32xbf16> to vector<32x32xbf16>
    %cst_18 = arith.constant 0.000000e+00 : f32
    %27 = vector.broadcast %cst_18 : f32 to vector<16x32xf32>
    %28 = vector.extract_strided_slice %20 {offsets = [0, 0, 0], sizes = [2, 8, 4], strides = [1, 1, 1]} : vector<2x8x32xf32> to vector<2x8x4xf32>
    %29 = arith.truncf %28 : vector<2x8x4xf32> to vector<2x8x4xbf16>
    %30 = vector.extract_strided_slice %22 {offsets = [0, 0, 0], sizes = [2, 8, 4], strides = [1, 1, 1]} : vector<2x8x32xf32> to vector<2x8x4xf32>
    %31 = arith.truncf %30 : vector<2x8x4xf32> to vector<2x8x4xbf16>
    %32 = vector.extract_strided_slice %24 {offsets = [0, 0, 0], sizes = [2, 8, 4], strides = [1, 1, 1]} : vector<2x8x32xf32> to vector<2x8x4xf32>
    %33 = arith.truncf %32 : vector<2x8x4xf32> to vector<2x8x4xbf16>
    %cst_19 = arith.constant dense<0.000000e+00> : vector<2x8x8xf32>
    %34 = tpu.matmul %29, %31, %cst_19 {dimension_numbers = #tpu.dot_dimension_numbers<[2], [2], [1], [1], [0, 0, 0, 1, 1, 1], [0], [0]>} : vector<2x8x4xbf16>, vector<2x8x4xbf16>, vector<2x8x8xf32> -> vector<2x8x8xf32>
    %35 = vector.broadcast %1 : f32 to vector<2x8x8xf32>
    %36 = arith.mulf %34, %35 : vector<2x8x8xf32>
    %37 = vector.broadcast %10 : vector<2x1x8xf32> to vector<2x8x8xf32>
    %38 = arith.addf %36, %37 : vector<2x8x8xf32>
    %cst_20 = arith.constant dense<0xFF800000> : vector<2x8xf32>
    %39 = vector.multi_reduction <maximumf>, %38, %cst_20 [2] : vector<2x8x8xf32> to vector<2x8xf32>
    %40 = vector.shape_cast %39 : vector<2x8xf32> to vector<2x8x1xf32>
    %41 = vector.broadcast %40 : vector<2x8x1xf32> to vector<2x8x8xf32>
    %42 = arith.subf %38, %41 : vector<2x8x8xf32>
    %43 = math.exp %42 : vector<2x8x8xf32>
    %cst_21 = arith.constant dense<0.000000e+00> : vector<2x8xf32>
    %44 = vector.multi_reduction <add>, %43, %cst_21 [2] : vector<2x8x8xf32> to vector<2x8xf32>
    %45 = vector.shape_cast %44 : vector<2x8xf32> to vector<2x8x1xf32>
    %46 = tpu.reciprocal %45 {approx = true} : vector<2x8x1xf32> -> vector<2x8x1xf32>
    %47 = vector.broadcast %46 : vector<2x8x1xf32> to vector<2x8x8xf32>
    %48 = arith.mulf %43, %47 : vector<2x8x8xf32>
    %49 = arith.truncf %48 : vector<2x8x8xf32> to vector<2x8x8xbf16>
    %cst_22 = arith.constant dense<0.000000e+00> : vector<2x8x4xf32>
    %50 = tpu.matmul %49, %33, %cst_22 {dimension_numbers = #tpu.dot_dimension_numbers<[2], [1], [1], [2], [0, 0, 0, 1, 1, 2], [0], [0]>} : vector<2x8x8xbf16>, vector<2x8x4xbf16>, vector<2x8x4xf32> -> vector<2x8x4xf32>
    %51 = vector.shape_cast %50 : vector<2x8x4xf32> to vector<16x4xf32>
    %52 = arith.truncf %51 : vector<16x4xf32> to vector<16x4xbf16>
    %53 = vector.extract_strided_slice %26 {offsets = [0, 0], sizes = [4, 32], strides = [1, 1]} : vector<32x32xbf16> to vector<4x32xbf16>
    %cst_23 = arith.constant dense<0.000000e+00> : vector<16x32xf32>
    %54 = tpu.matmul %52, %53, %cst_23 {dimension_numbers = #tpu.dot_dimension_numbers<[1], [0], [0], [1], [0, 0, 1, 1], [], []>} : vector<16x4xbf16>, vector<4x32xbf16>, vector<16x32xf32> -> vector<16x32xf32>
    %55 = arith.addf %27, %54 : vector<16x32xf32>
    %56 = vector.extract_strided_slice %20 {offsets = [0, 0, 4], sizes = [2, 8, 4], strides = [1, 1, 1]} : vector<2x8x32xf32> to vector<2x8x4xf32>
    %57 = arith.truncf %56 : vector<2x8x4xf32> to vector<2x8x4xbf16>
    %58 = vector.extract_strided_slice %22 {offsets = [0, 0, 4], sizes = [2, 8, 4], strides = [1, 1, 1]} : vector<2x8x32xf32> to vector<2x8x4xf32>
    %59 = arith.truncf %58 : vector<2x8x4xf32> to vector<2x8x4xbf16>
    %60 = vector.extract_strided_slice %24 {offsets = [0, 0, 4], sizes = [2, 8, 4], strides = [1, 1, 1]} : vector<2x8x32xf32> to vector<2x8x4xf32>
    %61 = arith.truncf %60 : vector<2x8x4xf32> to vector<2x8x4xbf16>
    %cst_24 = arith.constant dense<0.000000e+00> : vector<2x8x8xf32>
    %62 = tpu.matmul %57, %59, %cst_24 {dimension_numbers = #tpu.dot_dimension_numbers<[2], [2], [1], [1], [0, 0, 0, 1, 1, 1], [0], [0]>} : vector<2x8x4xbf16>, vector<2x8x4xbf16>, vector<2x8x8xf32> -> vector<2x8x8xf32>
    %63 = vector.broadcast %1 : f32 to vector<2x8x8xf32>
    %64 = arith.mulf %62, %63 : vector<2x8x8xf32>
    %65 = vector.broadcast %10 : vector<2x1x8xf32> to vector<2x8x8xf32>
    %66 = arith.addf %64, %65 : vector<2x8x8xf32>
    %cst_25 = arith.constant dense<0xFF800000> : vector<2x8xf32>
    %67 = vector.multi_reduction <maximumf>, %66, %cst_25 [2] : vector<2x8x8xf32> to vector<2x8xf32>
    %68 = vector.shape_cast %67 : vector<2x8xf32> to vector<2x8x1xf32>
    %69 = vector.broadcast %68 : vector<2x8x1xf32> to vector<2x8x8xf32>
    %70 = arith.subf %66, %69 : vector<2x8x8xf32>
    %71 = math.exp %70 : vector<2x8x8xf32>
    %cst_26 = arith.constant dense<0.000000e+00> : vector<2x8xf32>
    %72 = vector.multi_reduction <add>, %71, %cst_26 [2] : vector<2x8x8xf32> to vector<2x8xf32>
    %73 = vector.shape_cast %72 : vector<2x8xf32> to vector<2x8x1xf32>
    %74 = tpu.reciprocal %73 {approx = true} : vector<2x8x1xf32> -> vector<2x8x1xf32>
    %75 = vector.broadcast %74 : vector<2x8x1xf32> to vector<2x8x8xf32>
    %76 = arith.mulf %71, %75 : vector<2x8x8xf32>
    %77 = arith.truncf %76 : vector<2x8x8xf32> to vector<2x8x8xbf16>
    %cst_27 = arith.constant dense<0.000000e+00> : vector<2x8x4xf32>
    %78 = tpu.matmul %77, %61, %cst_27 {dimension_numbers = #tpu.dot_dimension_numbers<[2], [1], [1], [2], [0, 0, 0, 1, 1, 2], [0], [0]>} : vector<2x8x8xbf16>, vector<2x8x4xbf16>, vector<2x8x4xf32> -> vector<2x8x4xf32>
    %79 = vector.shape_cast %78 : vector<2x8x4xf32> to vector<16x4xf32>
    %80 = arith.truncf %79 : vector<16x4xf32> to vector<16x4xbf16>
    %81 = vector.extract_strided_slice %26 {offsets = [4, 0], sizes = [4, 32], strides = [1, 1]} : vector<32x32xbf16> to vector<4x32xbf16>
    %cst_28 = arith.constant dense<0.000000e+00> : vector<16x32xf32>
    %82 = tpu.matmul %80, %81, %cst_28 {dimension_numbers = #tpu.dot_dimension_numbers<[1], [0], [0], [1], [0, 0, 1, 1], [], []>} : vector<16x4xbf16>, vector<4x32xbf16>, vector<16x32xf32> -> vector<16x32xf32>
    %83 = arith.addf %55, %82 : vector<16x32xf32>
    %84 = vector.extract_strided_slice %20 {offsets = [0, 0, 8], sizes = [2, 8, 4], strides = [1, 1, 1]} : vector<2x8x32xf32> to vector<2x8x4xf32>
    %85 = arith.truncf %84 : vector<2x8x4xf32> to vector<2x8x4xbf16>
    %86 = vector.extract_strided_slice %22 {offsets = [0, 0, 8], sizes = [2, 8, 4], strides = [1, 1, 1]} : vector<2x8x32xf32> to vector<2x8x4xf32>
    %87 = arith.truncf %86 : vector<2x8x4xf32> to vector<2x8x4xbf16>
    %88 = vector.extract_strided_slice %24 {offsets = [0, 0, 8], sizes = [2, 8, 4], strides = [1, 1, 1]} : vector<2x8x32xf32> to vector<2x8x4xf32>
    %89 = arith.truncf %88 : vector<2x8x4xf32> to vector<2x8x4xbf16>
    %cst_29 = arith.constant dense<0.000000e+00> : vector<2x8x8xf32>
    %90 = tpu.matmul %85, %87, %cst_29 {dimension_numbers = #tpu.dot_dimension_numbers<[2], [2], [1], [1], [0, 0, 0, 1, 1, 1], [0], [0]>} : vector<2x8x4xbf16>, vector<2x8x4xbf16>, vector<2x8x8xf32> -> vector<2x8x8xf32>
    %91 = vector.broadcast %1 : f32 to vector<2x8x8xf32>
    %92 = arith.mulf %90, %91 : vector<2x8x8xf32>
    %93 = vector.broadcast %10 : vector<2x1x8xf32> to vector<2x8x8xf32>
    %94 = arith.addf %92, %93 : vector<2x8x8xf32>
    %cst_30 = arith.constant dense<0xFF800000> : vector<2x8xf32>
    %95 = vector.multi_reduction <maximumf>, %94, %cst_30 [2] : vector<2x8x8xf32> to vector<2x8xf32>
    %96 = vector.shape_cast %95 : vector<2x8xf32> to vector<2x8x1xf32>
    %97 = vector.broadcast %96 : vector<2x8x1xf32> to vector<2x8x8xf32>
    %98 = arith.subf %94, %97 : vector<2x8x8xf32>
    %99 = math.exp %98 : vector<2x8x8xf32>
    %cst_31 = arith.constant dense<0.000000e+00> : vector<2x8xf32>
    %100 = vector.multi_reduction <add>, %99, %cst_31 [2] : vector<2x8x8xf32> to vector<2x8xf32>
    %101 = vector.shape_cast %100 : vector<2x8xf32> to vector<2x8x1xf32>
    %102 = tpu.reciprocal %101 {approx = true} : vector<2x8x1xf32> -> vector<2x8x1xf32>
    %103 = vector.broadcast %102 : vector<2x8x1xf32> to vector<2x8x8xf32>
    %104 = arith.mulf %99, %103 : vector<2x8x8xf32>
    %105 = arith.truncf %104 : vector<2x8x8xf32> to vector<2x8x8xbf16>
    %cst_32 = arith.constant dense<0.000000e+00> : vector<2x8x4xf32>
    %106 = tpu.matmul %105, %89, %cst_32 {dimension_numbers = #tpu.dot_dimension_numbers<[2], [1], [1], [2], [0, 0, 0, 1, 1, 2], [0], [0]>} : vector<2x8x8xbf16>, vector<2x8x4xbf16>, vector<2x8x4xf32> -> vector<2x8x4xf32>
    %107 = vector.shape_cast %106 : vector<2x8x4xf32> to vector<16x4xf32>
    %108 = arith.truncf %107 : vector<16x4xf32> to vector<16x4xbf16>
    %109 = vector.extract_strided_slice %26 {offsets = [8, 0], sizes = [4, 32], strides = [1, 1]} : vector<32x32xbf16> to vector<4x32xbf16>
    %cst_33 = arith.constant dense<0.000000e+00> : vector<16x32xf32>
    %110 = tpu.matmul %108, %109, %cst_33 {dimension_numbers = #tpu.dot_dimension_numbers<[1], [0], [0], [1], [0, 0, 1, 1], [], []>} : vector<16x4xbf16>, vector<4x32xbf16>, vector<16x32xf32> -> vector<16x32xf32>
    %111 = arith.addf %83, %110 : vector<16x32xf32>
    %112 = vector.extract_strided_slice %20 {offsets = [0, 0, 12], sizes = [2, 8, 4], strides = [1, 1, 1]} : vector<2x8x32xf32> to vector<2x8x4xf32>
    %113 = arith.truncf %112 : vector<2x8x4xf32> to vector<2x8x4xbf16>
    %114 = vector.extract_strided_slice %22 {offsets = [0, 0, 12], sizes = [2, 8, 4], strides = [1, 1, 1]} : vector<2x8x32xf32> to vector<2x8x4xf32>
    %115 = arith.truncf %114 : vector<2x8x4xf32> to vector<2x8x4xbf16>
    %116 = vector.extract_strided_slice %24 {offsets = [0, 0, 12], sizes = [2, 8, 4], strides = [1, 1, 1]} : vector<2x8x32xf32> to vector<2x8x4xf32>
    %117 = arith.truncf %116 : vector<2x8x4xf32> to vector<2x8x4xbf16>
    %cst_34 = arith.constant dense<0.000000e+00> : vector<2x8x8xf32>
    %118 = tpu.matmul %113, %115, %cst_34 {dimension_numbers = #tpu.dot_dimension_numbers<[2], [2], [1], [1], [0, 0, 0, 1, 1, 1], [0], [0]>} : vector<2x8x4xbf16>, vector<2x8x4xbf16>, vector<2x8x8xf32> -> vector<2x8x8xf32>
    %119 = vector.broadcast %1 : f32 to vector<2x8x8xf32>
    %120 = arith.mulf %118, %119 : vector<2x8x8xf32>
    %121 = vector.broadcast %10 : vector<2x1x8xf32> to vector<2x8x8xf32>
    %122 = arith.addf %120, %121 : vector<2x8x8xf32>
    %cst_35 = arith.constant dense<0xFF800000> : vector<2x8xf32>
    %123 = vector.multi_reduction <maximumf>, %122, %cst_35 [2] : vector<2x8x8xf32> to vector<2x8xf32>
    %124 = vector.shape_cast %123 : vector<2x8xf32> to vector<2x8x1xf32>
    %125 = vector.broadcast %124 : vector<2x8x1xf32> to vector<2x8x8xf32>
    %126 = arith.subf %122, %125 : vector<2x8x8xf32>
    %127 = math.exp %126 : vector<2x8x8xf32>
    %cst_36 = arith.constant dense<0.000000e+00> : vector<2x8xf32>
    %128 = vector.multi_reduction <add>, %127, %cst_36 [2] : vector<2x8x8xf32> to vector<2x8xf32>
    %129 = vector.shape_cast %128 : vector<2x8xf32> to vector<2x8x1xf32>
    %130 = tpu.reciprocal %129 {approx = true} : vector<2x8x1xf32> -> vector<2x8x1xf32>
    %131 = vector.broadcast %130 : vector<2x8x1xf32> to vector<2x8x8xf32>
    %132 = arith.mulf %127, %131 : vector<2x8x8xf32>
    %133 = arith.truncf %132 : vector<2x8x8xf32> to vector<2x8x8xbf16>
    %cst_37 = arith.constant dense<0.000000e+00> : vector<2x8x4xf32>
    %134 = tpu.matmul %133, %117, %cst_37 {dimension_numbers = #tpu.dot_dimension_numbers<[2], [1], [1], [2], [0, 0, 0, 1, 1, 2], [0], [0]>} : vector<2x8x8xbf16>, vector<2x8x4xbf16>, vector<2x8x4xf32> -> vector<2x8x4xf32>
    %135 = vector.shape_cast %134 : vector<2x8x4xf32> to vector<16x4xf32>
    %136 = arith.truncf %135 : vector<16x4xf32> to vector<16x4xbf16>
    %137 = vector.extract_strided_slice %26 {offsets = [12, 0], sizes = [4, 32], strides = [1, 1]} : vector<32x32xbf16> to vector<4x32xbf16>
    %cst_38 = arith.constant dense<0.000000e+00> : vector<16x32xf32>
    %138 = tpu.matmul %136, %137, %cst_38 {dimension_numbers = #tpu.dot_dimension_numbers<[1], [0], [0], [1], [0, 0, 1, 1], [], []>} : vector<16x4xbf16>, vector<4x32xbf16>, vector<16x32xf32> -> vector<16x32xf32>
    %139 = arith.addf %111, %138 : vector<16x32xf32>
    %140 = vector.extract_strided_slice %20 {offsets = [0, 0, 16], sizes = [2, 8, 4], strides = [1, 1, 1]} : vector<2x8x32xf32> to vector<2x8x4xf32>
    %141 = arith.truncf %140 : vector<2x8x4xf32> to vector<2x8x4xbf16>
    %142 = vector.extract_strided_slice %22 {offsets = [0, 0, 16], sizes = [2, 8, 4], strides = [1, 1, 1]} : vector<2x8x32xf32> to vector<2x8x4xf32>
    %143 = arith.truncf %142 : vector<2x8x4xf32> to vector<2x8x4xbf16>
    %144 = vector.extract_strided_slice %24 {offsets = [0, 0, 16], sizes = [2, 8, 4], strides = [1, 1, 1]} : vector<2x8x32xf32> to vector<2x8x4xf32>
    %145 = arith.truncf %144 : vector<2x8x4xf32> to vector<2x8x4xbf16>
    %cst_39 = arith.constant dense<0.000000e+00> : vector<2x8x8xf32>
    %146 = tpu.matmul %141, %143, %cst_39 {dimension_numbers = #tpu.dot_dimension_numbers<[2], [2], [1], [1], [0, 0, 0, 1, 1, 1], [0], [0]>} : vector<2x8x4xbf16>, vector<2x8x4xbf16>, vector<2x8x8xf32> -> vector<2x8x8xf32>
    %147 = vector.broadcast %1 : f32 to vector<2x8x8xf32>
    %148 = arith.mulf %146, %147 : vector<2x8x8xf32>
    %149 = vector.broadcast %10 : vector<2x1x8xf32> to vector<2x8x8xf32>
    %150 = arith.addf %148, %149 : vector<2x8x8xf32>
    %cst_40 = arith.constant dense<0xFF800000> : vector<2x8xf32>
    %151 = vector.multi_reduction <maximumf>, %150, %cst_40 [2] : vector<2x8x8xf32> to vector<2x8xf32>
    %152 = vector.shape_cast %151 : vector<2x8xf32> to vector<2x8x1xf32>
    %153 = vector.broadcast %152 : vector<2x8x1xf32> to vector<2x8x8xf32>
    %154 = arith.subf %150, %153 : vector<2x8x8xf32>
    %155 = math.exp %154 : vector<2x8x8xf32>
    %cst_41 = arith.constant dense<0.000000e+00> : vector<2x8xf32>
    %156 = vector.multi_reduction <add>, %155, %cst_41 [2] : vector<2x8x8xf32> to vector<2x8xf32>
    %157 = vector.shape_cast %156 : vector<2x8xf32> to vector<2x8x1xf32>
    %158 = tpu.reciprocal %157 {approx = true} : vector<2x8x1xf32> -> vector<2x8x1xf32>
    %159 = vector.broadcast %158 : vector<2x8x1xf32> to vector<2x8x8xf32>
    %160 = arith.mulf %155, %159 : vector<2x8x8xf32>
    %161 = arith.truncf %160 : vector<2x8x8xf32> to vector<2x8x8xbf16>
    %cst_42 = arith.constant dense<0.000000e+00> : vector<2x8x4xf32>
    %162 = tpu.matmul %161, %145, %cst_42 {dimension_numbers = #tpu.dot_dimension_numbers<[2], [1], [1], [2], [0, 0, 0, 1, 1, 2], [0], [0]>} : vector<2x8x8xbf16>, vector<2x8x4xbf16>, vector<2x8x4xf32> -> vector<2x8x4xf32>
    %163 = vector.shape_cast %162 : vector<2x8x4xf32> to vector<16x4xf32>
    %164 = arith.truncf %163 : vector<16x4xf32> to vector<16x4xbf16>
    %165 = vector.extract_strided_slice %26 {offsets = [16, 0], sizes = [4, 32], strides = [1, 1]} : vector<32x32xbf16> to vector<4x32xbf16>
    %cst_43 = arith.constant dense<0.000000e+00> : vector<16x32xf32>
    %166 = tpu.matmul %164, %165, %cst_43 {dimension_numbers = #tpu.dot_dimension_numbers<[1], [0], [0], [1], [0, 0, 1, 1], [], []>} : vector<16x4xbf16>, vector<4x32xbf16>, vector<16x32xf32> -> vector<16x32xf32>
    %167 = arith.addf %139, %166 : vector<16x32xf32>
    %168 = vector.extract_strided_slice %20 {offsets = [0, 0, 20], sizes = [2, 8, 4], strides = [1, 1, 1]} : vector<2x8x32xf32> to vector<2x8x4xf32>
    %169 = arith.truncf %168 : vector<2x8x4xf32> to vector<2x8x4xbf16>
    %170 = vector.extract_strided_slice %22 {offsets = [0, 0, 20], sizes = [2, 8, 4], strides = [1, 1, 1]} : vector<2x8x32xf32> to vector<2x8x4xf32>
    %171 = arith.truncf %170 : vector<2x8x4xf32> to vector<2x8x4xbf16>
    %172 = vector.extract_strided_slice %24 {offsets = [0, 0, 20], sizes = [2, 8, 4], strides = [1, 1, 1]} : vector<2x8x32xf32> to vector<2x8x4xf32>
    %173 = arith.truncf %172 : vector<2x8x4xf32> to vector<2x8x4xbf16>
    %cst_44 = arith.constant dense<0.000000e+00> : vector<2x8x8xf32>
    %174 = tpu.matmul %169, %171, %cst_44 {dimension_numbers = #tpu.dot_dimension_numbers<[2], [2], [1], [1], [0, 0, 0, 1, 1, 1], [0], [0]>} : vector<2x8x4xbf16>, vector<2x8x4xbf16>, vector<2x8x8xf32> -> vector<2x8x8xf32>
    %175 = vector.broadcast %1 : f32 to vector<2x8x8xf32>
    %176 = arith.mulf %174, %175 : vector<2x8x8xf32>
    %177 = vector.broadcast %10 : vector<2x1x8xf32> to vector<2x8x8xf32>
    %178 = arith.addf %176, %177 : vector<2x8x8xf32>
    %cst_45 = arith.constant dense<0xFF800000> : vector<2x8xf32>
    %179 = vector.multi_reduction <maximumf>, %178, %cst_45 [2] : vector<2x8x8xf32> to vector<2x8xf32>
    %180 = vector.shape_cast %179 : vector<2x8xf32> to vector<2x8x1xf32>
    %181 = vector.broadcast %180 : vector<2x8x1xf32> to vector<2x8x8xf32>
    %182 = arith.subf %178, %181 : vector<2x8x8xf32>
    %183 = math.exp %182 : vector<2x8x8xf32>
    %cst_46 = arith.constant dense<0.000000e+00> : vector<2x8xf32>
    %184 = vector.multi_reduction <add>, %183, %cst_46 [2] : vector<2x8x8xf32> to vector<2x8xf32>
    %185 = vector.shape_cast %184 : vector<2x8xf32> to vector<2x8x1xf32>
    %186 = tpu.reciprocal %185 {approx = true} : vector<2x8x1xf32> -> vector<2x8x1xf32>
    %187 = vector.broadcast %186 : vector<2x8x1xf32> to vector<2x8x8xf32>
    %188 = arith.mulf %183, %187 : vector<2x8x8xf32>
    %189 = arith.truncf %188 : vector<2x8x8xf32> to vector<2x8x8xbf16>
    %cst_47 = arith.constant dense<0.000000e+00> : vector<2x8x4xf32>
    %190 = tpu.matmul %189, %173, %cst_47 {dimension_numbers = #tpu.dot_dimension_numbers<[2], [1], [1], [2], [0, 0, 0, 1, 1, 2], [0], [0]>} : vector<2x8x8xbf16>, vector<2x8x4xbf16>, vector<2x8x4xf32> -> vector<2x8x4xf32>
    %191 = vector.shape_cast %190 : vector<2x8x4xf32> to vector<16x4xf32>
    %192 = arith.truncf %191 : vector<16x4xf32> to vector<16x4xbf16>
    %193 = vector.extract_strided_slice %26 {offsets = [20, 0], sizes = [4, 32], strides = [1, 1]} : vector<32x32xbf16> to vector<4x32xbf16>
    %cst_48 = arith.constant dense<0.000000e+00> : vector<16x32xf32>
    %194 = tpu.matmul %192, %193, %cst_48 {dimension_numbers = #tpu.dot_dimension_numbers<[1], [0], [0], [1], [0, 0, 1, 1], [], []>} : vector<16x4xbf16>, vector<4x32xbf16>, vector<16x32xf32> -> vector<16x32xf32>
    %195 = arith.addf %167, %194 : vector<16x32xf32>
    %196 = vector.extract_strided_slice %20 {offsets = [0, 0, 24], sizes = [2, 8, 4], strides = [1, 1, 1]} : vector<2x8x32xf32> to vector<2x8x4xf32>
    %197 = arith.truncf %196 : vector<2x8x4xf32> to vector<2x8x4xbf16>
    %198 = vector.extract_strided_slice %22 {offsets = [0, 0, 24], sizes = [2, 8, 4], strides = [1, 1, 1]} : vector<2x8x32xf32> to vector<2x8x4xf32>
    %199 = arith.truncf %198 : vector<2x8x4xf32> to vector<2x8x4xbf16>
    %200 = vector.extract_strided_slice %24 {offsets = [0, 0, 24], sizes = [2, 8, 4], strides = [1, 1, 1]} : vector<2x8x32xf32> to vector<2x8x4xf32>
    %201 = arith.truncf %200 : vector<2x8x4xf32> to vector<2x8x4xbf16>
    %cst_49 = arith.constant dense<0.000000e+00> : vector<2x8x8xf32>
    %202 = tpu.matmul %197, %199, %cst_49 {dimension_numbers = #tpu.dot_dimension_numbers<[2], [2], [1], [1], [0, 0, 0, 1, 1, 1], [0], [0]>} : vector<2x8x4xbf16>, vector<2x8x4xbf16>, vector<2x8x8xf32> -> vector<2x8x8xf32>
    %203 = vector.broadcast %1 : f32 to vector<2x8x8xf32>
    %204 = arith.mulf %202, %203 : vector<2x8x8xf32>
    %205 = vector.broadcast %10 : vector<2x1x8xf32> to vector<2x8x8xf32>
    %206 = arith.addf %204, %205 : vector<2x8x8xf32>
    %cst_50 = arith.constant dense<0xFF800000> : vector<2x8xf32>
    %207 = vector.multi_reduction <maximumf>, %206, %cst_50 [2] : vector<2x8x8xf32> to vector<2x8xf32>
    %208 = vector.shape_cast %207 : vector<2x8xf32> to vector<2x8x1xf32>
    %209 = vector.broadcast %208 : vector<2x8x1xf32> to vector<2x8x8xf32>
    %210 = arith.subf %206, %209 : vector<2x8x8xf32>
    %211 = math.exp %210 : vector<2x8x8xf32>
    %cst_51 = arith.constant dense<0.000000e+00> : vector<2x8xf32>
    %212 = vector.multi_reduction <add>, %211, %cst_51 [2] : vector<2x8x8xf32> to vector<2x8xf32>
    %213 = vector.shape_cast %212 : vector<2x8xf32> to vector<2x8x1xf32>
    %214 = tpu.reciprocal %213 {approx = true} : vector<2x8x1xf32> -> vector<2x8x1xf32>
    %215 = vector.broadcast %214 : vector<2x8x1xf32> to vector<2x8x8xf32>
    %216 = arith.mulf %211, %215 : vector<2x8x8xf32>
    %217 = arith.truncf %216 : vector<2x8x8xf32> to vector<2x8x8xbf16>
    %cst_52 = arith.constant dense<0.000000e+00> : vector<2x8x4xf32>
    %218 = tpu.matmul %217, %201, %cst_52 {dimension_numbers = #tpu.dot_dimension_numbers<[2], [1], [1], [2], [0, 0, 0, 1, 1, 2], [0], [0]>} : vector<2x8x8xbf16>, vector<2x8x4xbf16>, vector<2x8x4xf32> -> vector<2x8x4xf32>
    %219 = vector.shape_cast %218 : vector<2x8x4xf32> to vector<16x4xf32>
    %220 = arith.truncf %219 : vector<16x4xf32> to vector<16x4xbf16>
    %221 = vector.extract_strided_slice %26 {offsets = [24, 0], sizes = [4, 32], strides = [1, 1]} : vector<32x32xbf16> to vector<4x32xbf16>
    %cst_53 = arith.constant dense<0.000000e+00> : vector<16x32xf32>
    %222 = tpu.matmul %220, %221, %cst_53 {dimension_numbers = #tpu.dot_dimension_numbers<[1], [0], [0], [1], [0, 0, 1, 1], [], []>} : vector<16x4xbf16>, vector<4x32xbf16>, vector<16x32xf32> -> vector<16x32xf32>
    %223 = arith.addf %195, %222 : vector<16x32xf32>
    %224 = vector.extract_strided_slice %20 {offsets = [0, 0, 28], sizes = [2, 8, 4], strides = [1, 1, 1]} : vector<2x8x32xf32> to vector<2x8x4xf32>
    %225 = arith.truncf %224 : vector<2x8x4xf32> to vector<2x8x4xbf16>
    %226 = vector.extract_strided_slice %22 {offsets = [0, 0, 28], sizes = [2, 8, 4], strides = [1, 1, 1]} : vector<2x8x32xf32> to vector<2x8x4xf32>
    %227 = arith.truncf %226 : vector<2x8x4xf32> to vector<2x8x4xbf16>
    %228 = vector.extract_strided_slice %24 {offsets = [0, 0, 28], sizes = [2, 8, 4], strides = [1, 1, 1]} : vector<2x8x32xf32> to vector<2x8x4xf32>
    %229 = arith.truncf %228 : vector<2x8x4xf32> to vector<2x8x4xbf16>
    %cst_54 = arith.constant dense<0.000000e+00> : vector<2x8x8xf32>
    %230 = tpu.matmul %225, %227, %cst_54 {dimension_numbers = #tpu.dot_dimension_numbers<[2], [2], [1], [1], [0, 0, 0, 1, 1, 1], [0], [0]>} : vector<2x8x4xbf16>, vector<2x8x4xbf16>, vector<2x8x8xf32> -> vector<2x8x8xf32>
    %231 = vector.broadcast %1 : f32 to vector<2x8x8xf32>
    %232 = arith.mulf %230, %231 : vector<2x8x8xf32>
    %233 = vector.broadcast %10 : vector<2x1x8xf32> to vector<2x8x8xf32>
    %234 = arith.addf %232, %233 : vector<2x8x8xf32>
    %cst_55 = arith.constant dense<0xFF800000> : vector<2x8xf32>
    %235 = vector.multi_reduction <maximumf>, %234, %cst_55 [2] : vector<2x8x8xf32> to vector<2x8xf32>
    %236 = vector.shape_cast %235 : vector<2x8xf32> to vector<2x8x1xf32>
    %237 = vector.broadcast %236 : vector<2x8x1xf32> to vector<2x8x8xf32>
    %238 = arith.subf %234, %237 : vector<2x8x8xf32>
    %239 = math.exp %238 : vector<2x8x8xf32>
    %cst_56 = arith.constant dense<0.000000e+00> : vector<2x8xf32>
    %240 = vector.multi_reduction <add>, %239, %cst_56 [2] : vector<2x8x8xf32> to vector<2x8xf32>
    %241 = vector.shape_cast %240 : vector<2x8xf32> to vector<2x8x1xf32>
    %242 = tpu.reciprocal %241 {approx = true} : vector<2x8x1xf32> -> vector<2x8x1xf32>
    %243 = vector.broadcast %242 : vector<2x8x1xf32> to vector<2x8x8xf32>
    %244 = arith.mulf %239, %243 : vector<2x8x8xf32>
    %245 = arith.truncf %244 : vector<2x8x8xf32> to vector<2x8x8xbf16>
    %cst_57 = arith.constant dense<0.000000e+00> : vector<2x8x4xf32>
    %246 = tpu.matmul %245, %229, %cst_57 {dimension_numbers = #tpu.dot_dimension_numbers<[2], [1], [1], [2], [0, 0, 0, 1, 1, 2], [0], [0]>} : vector<2x8x8xbf16>, vector<2x8x4xbf16>, vector<2x8x4xf32> -> vector<2x8x4xf32>
    %247 = vector.shape_cast %246 : vector<2x8x4xf32> to vector<16x4xf32>
    %248 = arith.truncf %247 : vector<16x4xf32> to vector<16x4xbf16>
    %249 = vector.extract_strided_slice %26 {offsets = [28, 0], sizes = [4, 32], strides = [1, 1]} : vector<32x32xbf16> to vector<4x32xbf16>
    %cst_58 = arith.constant dense<0.000000e+00> : vector<16x32xf32>
    %250 = tpu.matmul %248, %249, %cst_58 {dimension_numbers = #tpu.dot_dimension_numbers<[1], [0], [0], [1], [0, 0, 1, 1], [], []>} : vector<16x4xbf16>, vector<4x32xbf16>, vector<16x32xf32> -> vector<16x32xf32>
    %251 = arith.addf %223, %250 : vector<16x32xf32>
    %c0_59 = arith.constant 0 : index
    %c0_60 = arith.constant 0 : index
    %c0_61 = arith.constant 0 : index
    %252 = vector.load %arg7[%c0_59, %c0_60, %c0_61] : memref<1x1x32xf32, #tpu.memory_space<vmem>>, vector<1x1x32xf32>
    %253 = vector.shape_cast %252 : vector<1x1x32xf32> to vector<1x32xf32>
    %254 = vector.broadcast %253 : vector<1x32xf32> to vector<16x32xf32>
    %255 = arith.addf %251, %254 : vector<16x32xf32>
    %c0_62 = arith.constant 0 : index
    %c0_63 = arith.constant 0 : index
    %c0_64 = arith.constant 0 : index
    %256 = vector.load %arg8[%c0_62, %c0_63, %c0_64] : memref<1x2x32xf32, #tpu.memory_space<vmem>>, vector<1x2x32xf32>
    %257 = vector.shape_cast %256 : vector<1x2x32xf32> to vector<2x32xf32>
    %258 = arith.addf %5, %255 : vector<16x32xf32>
    %259 = vector.extract_strided_slice %257 {offsets = [0, 0], sizes = [1, 32], strides = [1, 1]} : vector<2x32xf32> to vector<1x32xf32>
    %260 = vector.shape_cast %259 : vector<1x32xf32> to vector<32xf32>
    %261 = vector.extract_strided_slice %257 {offsets = [1, 0], sizes = [1, 32], strides = [1, 1]} : vector<2x32xf32> to vector<1x32xf32>
    %262 = vector.shape_cast %261 : vector<1x32xf32> to vector<32xf32>
    %cst_65 = arith.constant dense<0.000000e+00> : vector<16xf32>
    %263 = vector.multi_reduction <add>, %258, %cst_65 [1] : vector<16x32xf32> to vector<16xf32>
    %264 = vector.shape_cast %263 : vector<16xf32> to vector<16x1xf32>
    %cst_66 = arith.constant 3.200000e+01 : f32
    %265 = vector.broadcast %cst_66 : f32 to vector<16x1xf32>
    %266 = arith.divf %264, %265 : vector<16x1xf32>
    %267 = vector.broadcast %266 : vector<16x1xf32> to vector<16x32xf32>
    %268 = arith.subf %258, %267 : vector<16x32xf32>
    %269 = arith.mulf %268, %268 : vector<16x32xf32>
    %cst_67 = arith.constant dense<0.000000e+00> : vector<16xf32>
    %270 = vector.multi_reduction <add>, %269, %cst_67 [1] : vector<16x32xf32> to vector<16xf32>
    %271 = vector.shape_cast %270 : vector<16xf32> to vector<16x1xf32>
    %cst_68 = arith.constant 3.200000e+01 : f32
    %272 = vector.broadcast %cst_68 : f32 to vector<16x1xf32>
    %273 = arith.divf %271, %272 : vector<16x1xf32>
    %274 = vector.broadcast %266 : vector<16x1xf32> to vector<16x32xf32>
    %275 = arith.subf %258, %274 : vector<16x32xf32>
    %cst_69 = arith.constant 9.99999974E-6 : f32
    %276 = vector.broadcast %cst_69 : f32 to vector<16x1xf32>
    %277 = arith.addf %273, %276 : vector<16x1xf32>
    %278 = math.rsqrt %277 : vector<16x1xf32>
    %279 = vector.broadcast %278 : vector<16x1xf32> to vector<16x32xf32>
    %280 = arith.mulf %275, %279 : vector<16x32xf32>
    %281 = vector.shape_cast %260 : vector<32xf32> to vector<1x32xf32>
    %282 = vector.broadcast %281 : vector<1x32xf32> to vector<16x32xf32>
    %283 = arith.mulf %280, %282 : vector<16x32xf32>
    %284 = vector.shape_cast %262 : vector<32xf32> to vector<1x32xf32>
    %285 = vector.broadcast %284 : vector<1x32xf32> to vector<16x32xf32>
    %286 = arith.addf %283, %285 : vector<16x32xf32>
    %287 = arith.truncf %286 : vector<16x32xf32> to vector<16x32xbf16>
    %c0_70 = arith.constant 0 : index
    %c0_71 = arith.constant 0 : index
    %c0_72 = arith.constant 0 : index
    %288 = vector.load %arg9[%c0_70, %c0_71, %c0_72] : memref<1x32x1024xbf16, #tpu.memory_space<vmem>>, vector<1x32x1024xbf16>
    %289 = vector.shape_cast %288 : vector<1x32x1024xbf16> to vector<32x1024xbf16>
    %cst_73 = arith.constant dense<0.000000e+00> : vector<16x1024xf32>
    %290 = tpu.matmul %287, %289, %cst_73 {dimension_numbers = #tpu.dot_dimension_numbers<[1], [0], [0], [1], [0, 0, 1, 1], [], []>} : vector<16x32xbf16>, vector<32x1024xbf16>, vector<16x1024xf32> -> vector<16x1024xf32>
    %c0_74 = arith.constant 0 : index
    %c0_75 = arith.constant 0 : index
    %c0_76 = arith.constant 0 : index
    %291 = vector.load %arg10[%c0_74, %c0_75, %c0_76] : memref<1x1x1024xf32, #tpu.memory_space<vmem>>, vector<1x1x1024xf32>
    %292 = vector.shape_cast %291 : vector<1x1x1024xf32> to vector<1x1024xf32>
    %293 = vector.broadcast %292 : vector<1x1024xf32> to vector<16x1024xf32>
    %294 = arith.addf %290, %293 : vector<16x1024xf32>
    %cst_77 = arith.constant 5.000000e-01 : f32
    %295 = vector.broadcast %cst_77 : f32 to vector<16x1024xf32>
    %296 = arith.mulf %295, %294 : vector<16x1024xf32>
    %cst_78 = arith.constant 0.707106769 : f32
    %297 = vector.broadcast %cst_78 : f32 to vector<16x1024xf32>
    %298 = arith.mulf %294, %297 : vector<16x1024xf32>
    %299 = math.erf %298 : vector<16x1024xf32>
    %cst_79 = arith.constant 1.000000e+00 : f32
    %300 = vector.broadcast %cst_79 : f32 to vector<16x1024xf32>
    %301 = arith.addf %300, %299 : vector<16x1024xf32>
    %302 = arith.mulf %296, %301 : vector<16x1024xf32>
    %303 = arith.truncf %302 : vector<16x1024xf32> to vector<16x1024xbf16>
    %c0_80 = arith.constant 0 : index
    %c0_81 = arith.constant 0 : index
    %c0_82 = arith.constant 0 : index
    %304 = vector.load %arg11[%c0_80, %c0_81, %c0_82] : memref<1x1024x32xbf16, #tpu.memory_space<vmem>>, vector<1x1024x32xbf16>
    %305 = vector.shape_cast %304 : vector<1x1024x32xbf16> to vector<1024x32xbf16>
    %cst_83 = arith.constant dense<0.000000e+00> : vector<16x32xf32>
    %306 = tpu.matmul %303, %305, %cst_83 {dimension_numbers = #tpu.dot_dimension_numbers<[1], [0], [0], [1], [0, 0, 1, 1], [], []>} : vector<16x1024xbf16>, vector<1024x32xbf16>, vector<16x32xf32> -> vector<16x32xf32>
    %c0_84 = arith.constant 0 : index
    %c0_85 = arith.constant 0 : index
    %c0_86 = arith.constant 0 : index
    %307 = vector.load %arg12[%c0_84, %c0_85, %c0_86] : memref<1x1x32xf32, #tpu.memory_space<vmem>>, vector<1x1x32xf32>
    %308 = vector.shape_cast %307 : vector<1x1x32xf32> to vector<1x32xf32>
    %309 = vector.broadcast %308 : vector<1x32xf32> to vector<16x32xf32>
    %310 = arith.addf %306, %309 : vector<16x32xf32>
    %c0_87 = arith.constant 0 : index
    %c0_88 = arith.constant 0 : index
    %c0_89 = arith.constant 0 : index
    %311 = vector.load %arg13[%c0_87, %c0_88, %c0_89] : memref<1x2x32xf32, #tpu.memory_space<vmem>>, vector<1x2x32xf32>
    %312 = vector.shape_cast %311 : vector<1x2x32xf32> to vector<2x32xf32>
    %313 = arith.addf %286, %310 : vector<16x32xf32>
    %314 = vector.extract_strided_slice %312 {offsets = [0, 0], sizes = [1, 32], strides = [1, 1]} : vector<2x32xf32> to vector<1x32xf32>
    %315 = vector.shape_cast %314 : vector<1x32xf32> to vector<32xf32>
    %316 = vector.extract_strided_slice %312 {offsets = [1, 0], sizes = [1, 32], strides = [1, 1]} : vector<2x32xf32> to vector<1x32xf32>
    %317 = vector.shape_cast %316 : vector<1x32xf32> to vector<32xf32>
    %cst_90 = arith.constant dense<0.000000e+00> : vector<16xf32>
    %318 = vector.multi_reduction <add>, %313, %cst_90 [1] : vector<16x32xf32> to vector<16xf32>
    %319 = vector.shape_cast %318 : vector<16xf32> to vector<16x1xf32>
    %cst_91 = arith.constant 3.200000e+01 : f32
    %320 = vector.broadcast %cst_91 : f32 to vector<16x1xf32>
    %321 = arith.divf %319, %320 : vector<16x1xf32>
    %322 = vector.broadcast %321 : vector<16x1xf32> to vector<16x32xf32>
    %323 = arith.subf %313, %322 : vector<16x32xf32>
    %324 = arith.mulf %323, %323 : vector<16x32xf32>
    %cst_92 = arith.constant dense<0.000000e+00> : vector<16xf32>
    %325 = vector.multi_reduction <add>, %324, %cst_92 [1] : vector<16x32xf32> to vector<16xf32>
    %326 = vector.shape_cast %325 : vector<16xf32> to vector<16x1xf32>
    %cst_93 = arith.constant 3.200000e+01 : f32
    %327 = vector.broadcast %cst_93 : f32 to vector<16x1xf32>
    %328 = arith.divf %326, %327 : vector<16x1xf32>
    %329 = vector.broadcast %321 : vector<16x1xf32> to vector<16x32xf32>
    %330 = arith.subf %313, %329 : vector<16x32xf32>
    %cst_94 = arith.constant 9.99999974E-6 : f32
    %331 = vector.broadcast %cst_94 : f32 to vector<16x1xf32>
    %332 = arith.addf %328, %331 : vector<16x1xf32>
    %333 = math.rsqrt %332 : vector<16x1xf32>
    %334 = vector.broadcast %333 : vector<16x1xf32> to vector<16x32xf32>
    %335 = arith.mulf %330, %334 : vector<16x32xf32>
    %336 = vector.shape_cast %315 : vector<32xf32> to vector<1x32xf32>
    %337 = vector.broadcast %336 : vector<1x32xf32> to vector<16x32xf32>
    %338 = arith.mulf %335, %337 : vector<16x32xf32>
    %339 = vector.shape_cast %317 : vector<32xf32> to vector<1x32xf32>
    %340 = vector.broadcast %339 : vector<1x32xf32> to vector<16x32xf32>
    %341 = arith.addf %338, %340 : vector<16x32xf32>
    %c0_95 = arith.constant 0 : index
    %c0_96 = arith.constant 0 : index
    %342 = vector.load %arg15[%c0_95, %c0_96] : memref<16x32xf32, #tpu.memory_space<vmem>>, vector<16x32xf32>
    tpu.vector_store %arg15[%c0_95, %c0_96], %341 {strides = array<i32>} : memref<16x32xf32, #tpu.memory_space<vmem>>, vector<16x32xf32>,
    %c1_i32 = arith.constant 1 : i32
    %343 = arith.cmpi eq, %arg0, %c1_i32 : i32
    %344 = arith.extui %343 : i1 to i32
    %c0_i32_97 = arith.constant 0 : i32
    %345 = arith.cmpi ne, %344, %c0_i32_97 : i32
    scf.if %345 {
      %346 = vector.shape_cast %341 : vector<16x32xf32> to vector<2x8x32xf32>
      %c0_98 = arith.constant 0 : index
      %c0_99 = arith.constant 0 : index
      %c0_100 = arith.constant 0 : index
      %347 = vector.load %arg14[%c0_98, %c0_99, %c0_100] : memref<2x8x32xf32, #tpu.memory_space<vmem>>, vector<2x8x32xf32>
      tpu.vector_store %arg14[%c0_98, %c0_99, %c0_100], %346 {strides = array<i32>} : memref<2x8x32xf32, #tpu.memory_space<vmem>>, vector<2x8x32xf32>,
    } else {
    }
    return
  }
  func.func @transform_0(%arg0: i32) -> (i32, i32, i32) {
    %c0_i32 = arith.constant 0 : i32
    %c0_i32_0 = arith.constant 0 : i32
    %c0_i32_1 = arith.constant 0 : i32
    %c0_i32_2 = arith.constant 0 : i32
    return %c0_i32, %c0_i32_0, %c0_i32_1 : i32, i32, i32
  }
  func.func @transform_1(%arg0: i32) -> (i32, i32, i32) {
    %c0_i32 = arith.constant 0 : i32
    %c0_i32_0 = arith.constant 0 : i32
    %c0_i32_1 = arith.constant 0 : i32
    %c0_i32_2 = arith.constant 0 : i32
    return %c0_i32, %c0_i32_0, %c0_i32_1 : i32, i32, i32
  }
  func.func @transform_2(%arg0: i32) -> (i32, i32) {
    %c0_i32 = arith.constant 0 : i32
    %c0_i32_0 = arith.constant 0 : i32
    %c0_i32_1 = arith.constant 0 : i32
    return %c0_i32, %c0_i32_0 : i32, i32
  }
  func.func @transform_3(%arg0: i32) -> (i32, i32, i32) {
    %c0_i32 = arith.constant 0 : i32
    %c0_i32_0 = arith.constant 0 : i32
    %c0_i32_1 = arith.constant 0 : i32
    return %arg0, %c0_i32, %c0_i32_0 : i32, i32, i32
  }
  func.func @transform_4(%arg0: i32) -> (i32, i32, i32) {
    %c0_i32 = arith.constant 0 : i32
    %c0_i32_0 = arith.constant 0 : i32
    %c0_i32_1 = arith.constant 0 : i32
    return %arg0, %c0_i32, %c0_i32_0 : i32, i32, i32
  }
  func.func @transform_5(%arg0: i32) -> (i32, i32, i32) {
    %c0_i32 = arith.constant 0 : i32
    %c0_i32_0 = arith.constant 0 : i32
    %c0_i32_1 = arith.constant 0 : i32
    return %arg0, %c0_i32, %c0_i32_0 : i32, i32, i32
  }
  func.func @transform_6(%arg0: i32) -> (i32, i32, i32) {
    %c0_i32 = arith.constant 0 : i32
    %c0_i32_0 = arith.constant 0 : i32
    %c0_i32_1 = arith.constant 0 : i32
    return %arg0, %c0_i32, %c0_i32_0 : i32, i32, i32
  }
  func.func @transform_7(%arg0: i32) -> (i32, i32, i32) {
    %c0_i32 = arith.constant 0 : i32
    %c0_i32_0 = arith.constant 0 : i32
    %c0_i32_1 = arith.constant 0 : i32
    return %arg0, %c0_i32, %c0_i32_0 : i32, i32, i32
  }
  func.func @transform_8(%arg0: i32) -> (i32, i32, i32) {
    %c0_i32 = arith.constant 0 : i32
    %c0_i32_0 = arith.constant 0 : i32
    %c0_i32_1 = arith.constant 0 : i32
    return %arg0, %c0_i32, %c0_i32_0 : i32, i32, i32
  }
  func.func @transform_9(%arg0: i32) -> (i32, i32, i32) {
    %c0_i32 = arith.constant 0 : i32
    %c0_i32_0 = arith.constant 0 : i32
    %c0_i32_1 = arith.constant 0 : i32
    return %arg0, %c0_i32, %c0_i32_0 : i32, i32, i32
  }
  func.func @transform_10(%arg0: i32) -> (i32, i32, i32) {
    %c0_i32 = arith.constant 0 : i32
    %c0_i32_0 = arith.constant 0 : i32
    %c0_i32_1 = arith.constant 0 : i32
    return %arg0, %c0_i32, %c0_i32_0 : i32, i32, i32
  }
  func.func @transform_11(%arg0: i32) -> (i32, i32, i32) {
    %c0_i32 = arith.constant 0 : i32
    %c0_i32_0 = arith.constant 0 : i32
    %c0_i32_1 = arith.constant 0 : i32
    return %arg0, %c0_i32, %c0_i32_0 : i32, i32, i32
  }
  func.func @transform_12(%arg0: i32) -> (i32, i32, i32) {
    %c0_i32 = arith.constant 0 : i32
    %c0_i32_0 = arith.constant 0 : i32
    %c0_i32_1 = arith.constant 0 : i32
    return %arg0, %c0_i32, %c0_i32_0 : i32, i32, i32
  }
  func.func @transform_13(%arg0: i32) -> (i32, i32, i32) {
    %c0_i32 = arith.constant 0 : i32
    %c0_i32_0 = arith.constant 0 : i32
    %c0_i32_1 = arith.constant 0 : i32
    %c0_i32_2 = arith.constant 0 : i32
    return %c0_i32, %c0_i32_0, %c0_i32_1 : i32, i32, i32
  }
}

</mosaic_0001>

<llo_original>
// kernel: tpu_custom_call.1
$region0: #{tpu_custom_call.1}
  #allocation0 [shape = 'u32[]', space=smem, size = 0x4, offset = 0x4, fixed_abs, tag = 'smem constant byte address 0x4 - core index']
  #allocation1 [shape = 'u32[144,128]{1,0:T(1,128)}', space=vmem, size = 0x12000, scoped, tag = 'internal scratch']
  #allocation2 [shape = 'f32[16,32]{1,0:T(8,128)}', space=vmem, size = 0x2000, scoped, tag = 'scratch operand']
  %s0 = inlined_call_operand.vmem [shape: f32[2,8,32], index: 0, kind: input, shape index: {}]
  %s1 = inlined_call_operand.vmem [shape: f32[2,1,8], index: 1, kind: input, shape index: {}]
  %s2 = inlined_call_operand.vmem [shape: f32[2,32], index: 2, kind: input, shape index: {}]
  %s3 = inlined_call_operand.vmem [shape: bf16[2,32,96], index: 3, kind: input, shape index: {}]
  %s4 = inlined_call_operand.vmem [shape: f32[2,1,96], index: 4, kind: input, shape index: {}]
  %s5 = inlined_call_operand.vmem [shape: bf16[2,32,32], index: 5, kind: input, shape index: {}]
  %s6 = inlined_call_operand.vmem [shape: f32[2,1,32], index: 6, kind: input, shape index: {}]
  %s7 = inlined_call_operand.vmem [shape: f32[2,2,32], index: 7, kind: input, shape index: {}]
  %s8 = inlined_call_operand.vmem [shape: bf16[2,32,1024], index: 8, kind: input, shape index: {}]
  %s9 = inlined_call_operand.vmem [shape: f32[2,1,1024], index: 9, kind: input, shape index: {}]
  %s10 = inlined_call_operand.vmem [shape: bf16[2,1024,32], index: 10, kind: input, shape index: {}]
  %s11 = inlined_call_operand.vmem [shape: f32[2,1,32], index: 11, kind: input, shape index: {}]
  %s12 = inlined_call_operand.vmem [shape: f32[2,2,32], index: 12, kind: input, shape index: {}]
  %s13 = inlined_call_operand.hbm [shape: f32[2,8,32], index: 13, kind: output, shape index: {}]
  %s14 = sld [smem:[#allocation0]]
  $region93: #{tpu_custom_call.1} parent=0
    _
  %s16 = ssub.s32 1, %s14
  %s17 = scalar_select 0, %s16, %s14
  $region1: #{tpu_custom_call.1} parent=0
    #allocation3 [shape = 'u8[8192]{0}', space=vmem, size = 0x2000, scoped, tag = 'output window, operand 0, single buffered']
    #allocation4 [shape = 's32[2]{0}', space=sflag, size = 0x8, scoped, tag = 'scoped memory for tpu_custom_call.1']
    %18 = vsyncpa [#allocation4], 0
    loop: start=0, step=1, limit=4
    $region2: #{tpu_custom_call.1} parent=1 // loop_pre_header
      _
    $region3: #{tpu_custom_call.1} parent=1 // loop_header
      %s20 = sphi 0, %s24
      %p21 = scmp.ge.s32.totalorder %s20, 4
      %s28 = sphi 0, %s28
      %s30 = sphi 0, %s28
      %s31 = sphi 0, %s30
      %s45 = sphi 0, %s31
      %s49 = sphi 0, %s49
      %s51 = sphi 0, %s49
      %s52 = sphi 0, %s51
      %s66 = sphi 0, %s52
      %s70 = sphi 0, %s70
      %s72 = sphi 0, %s70
      %s73 = sphi 0, %s72
      %s87 = sphi 0, %s73
      %s93 = sphi 0, %s95
      %s96 = sphi 0, %s93
      %s97 = sphi 0, %s96
      %s113 = sphi 0, %s97
      %s119 = sphi 0, %s121
      %s122 = sphi 0, %s119
      %s123 = sphi 0, %s122
      %s139 = sphi 0, %s123
      %s145 = sphi 0, %s147
      %s148 = sphi 0, %s145
      %s149 = sphi 0, %s148
      %s165 = sphi 0, %s149
      %s171 = sphi 0, %s173
      %s174 = sphi 0, %s171
      %s175 = sphi 0, %s174
      %s191 = sphi 0, %s175
      %s197 = sphi 0, %s199
      %s200 = sphi 0, %s197
      %s201 = sphi 0, %s200
      %s217 = sphi 0, %s201
      %s223 = sphi 0, %s225
      %s226 = sphi 0, %s223
      %s227 = sphi 0, %s226
      %s243 = sphi 0, %s227
      %s249 = sphi 0, %s251
      %s252 = sphi 0, %s249
      %s253 = sphi 0, %s252
      %s269 = sphi 0, %s253
      %s275 = sphi 0, %s277
      %s278 = sphi 0, %s275
      %s279 = sphi 0, %s278
      %s295 = sphi 0, %s279
      %s301 = sphi 0, %s303
      %s304 = sphi 0, %s301
      %s305 = sphi 0, %s304
      %s321 = sphi 0, %s305
      %s327 = sphi 0, %s329
      %s330 = sphi 0, %s327
      %s331 = sphi 0, %s330
      %s347 = sphi 0, %s331
      %s351 = sphi 0, %s351
      %s353 = sphi 0, %s351
      %s354 = sphi 0, %s353
      %s368 = sphi 0, %s354
    $region4: #{tpu_custom_call.1} parent=1 // loop_header_branch
      %23 = sbr.rel (%p21) target = $region8
    $region5: #{tpu_custom_call.1} parent=1 // loop_body
      %s25 = ssub.s32 %s20, 1
      %s26 = ssub.s32 %s20, 2
      %s27 = sadd.s32 %s20, 1
      %s29 = sadd.s32 %s28, 1
      %p32 = scmp.eq.s32.totalorder %s20, 1
      %p33 = scmp.ne.s32.totalorder %s28, %s30
      %p34 = scmp.eq.s32.totalorder %s20, 0
      %p35 = por %p33, %p34
      %p36 = scmp.ne.s32.totalorder %s28, %s30
      %p37 = scmp.eq.s32.totalorder %s25, 1
      %p38 = por %p36, %p37
      %p39 = scmp.ne.s32.totalorder %s30, %s31
      %p40 = scmp.eq.s32.totalorder %s25, 0
      %p41 = por %p39, %p40
      %p42 = scmp.ne.s32.totalorder %s30, %s31
      %p43 = scmp.eq.s32.totalorder %s26, 1
      %p44 = por %p42, %p43
      %p46 = scmp.ne.s32.totalorder %s31, %s45
      %p47 = scmp.eq.s32.totalorder %s26, 0
      %p48 = por %p46, %p47
      %s50 = sadd.s32 %s49, 1
      %p53 = scmp.eq.s32.totalorder %s20, 1
      %p54 = scmp.ne.s32.totalorder %s49, %s51
      %p55 = scmp.eq.s32.totalorder %s20, 0
      %p56 = por %p54, %p55
      %p57 = scmp.ne.s32.totalorder %s49, %s51
      %p58 = scmp.eq.s32.totalorder %s25, 1
      %p59 = por %p57, %p58
      %p60 = scmp.ne.s32.totalorder %s51, %s52
      %p61 = scmp.eq.s32.totalorder %s25, 0
      %p62 = por %p60, %p61
      %p63 = scmp.ne.s32.totalorder %s51, %s52
      %p64 = scmp.eq.s32.totalorder %s26, 1
      %p65 = por %p63, %p64
      %p67 = scmp.ne.s32.totalorder %s52, %s66
      %p68 = scmp.eq.s32.totalorder %s26, 0
      %p69 = por %p67, %p68
      %s71 = sadd.s32 %s70, 1
      %p74 = scmp.eq.s32.totalorder %s20, 1
      %p75 = scmp.ne.s32.totalorder %s70, %s72
      %p76 = scmp.eq.s32.totalorder %s20, 0
      %p77 = por %p75, %p76
      %p78 = scmp.ne.s32.totalorder %s70, %s72
      %p79 = scmp.eq.s32.totalorder %s25, 1
      %p80 = por %p78, %p79
      %p81 = scmp.ne.s32.totalorder %s72, %s73
      %p82 = scmp.eq.s32.totalorder %s25, 0
      %p83 = por %p81, %p82
      %p84 = scmp.ne.s32.totalorder %s72, %s73
      %p85 = scmp.eq.s32.totalorder %s26, 1
      %p86 = por %p84, %p85
      %p88 = scmp.ne.s32.totalorder %s73, %s87
      %p89 = scmp.eq.s32.totalorder %s26, 0
      %p90 = por %p88, %p89
      %s91 = ssub.s32 %s20, %s27
      %p92 = scmp.eq.s32.totalorder %s91, 0
      %s94 = sadd.s32 %s93, 1
      %s95 = scalar_select %p92, %s93, %s94
      %p98 = pneg %p92
      %p99 = scmp.eq.s32.totalorder %s20, 1
      %p100 = por %p98, %p99
      %p101 = scmp.ne.s32.totalorder %s93, %s96
      %p102 = scmp.eq.s32.totalorder %s20, 0
      %p103 = por %p101, %p102
      %p104 = scmp.ne.s32.totalorder %s93, %s96
      %p105 = scmp.eq.s32.totalorder %s25, 1
      %p106 = por %p104, %p105
      %p107 = scmp.ne.s32.totalorder %s96, %s97
      %p108 = scmp.eq.s32.totalorder %s25, 0
      %p109 = por %p107, %p108
      %p110 = scmp.ne.s32.totalorder %s96, %s97
      %p111 = scmp.eq.s32.totalorder %s26, 1
      %p112 = por %p110, %p111
      %p114 = scmp.ne.s32.totalorder %s97, %s113
      %p115 = scmp.eq.s32.totalorder %s26, 0
      %p116 = por %p114, %p115
      %s117 = ssub.s32 %s20, %s27
      %p118 = scmp.eq.s32.totalorder %s117, 0
      %s120 = sadd.s32 %s119, 1
      %s121 = scalar_select %p118, %s119, %s120
      %p124 = pneg %p118
      %p125 = scmp.eq.s32.totalorder %s20, 1
      %p126 = por %p124, %p125
      %p127 = scmp.ne.s32.totalorder %s119, %s122
      %p128 = scmp.eq.s32.totalorder %s20, 0
      %p129 = por %p127, %p128
      %p130 = scmp.ne.s32.totalorder %s119, %s122
      %p131 = scmp.eq.s32.totalorder %s25, 1
      %p132 = por %p130, %p131
      %p133 = scmp.ne.s32.totalorder %s122, %s123
      %p134 = scmp.eq.s32.totalorder %s25, 0
      %p135 = por %p133, %p134
      %p136 = scmp.ne.s32.totalorder %s122, %s123
      %p137 = scmp.eq.s32.totalorder %s26, 1
      %p138 = por %p136, %p137
      %p140 = scmp.ne.s32.totalorder %s123, %s139
      %p141 = scmp.eq.s32.totalorder %s26, 0
      %p142 = por %p140, %p141
      %s143 = ssub.s32 %s20, %s27
      %p144 = scmp.eq.s32.totalorder %s143, 0
      %s146 = sadd.s32 %s145, 1
      %s147 = scalar_select %p144, %s145, %s146
      %p150 = pneg %p144
      %p151 = scmp.eq.s32.totalorder %s20, 1
      %p152 = por %p150, %p151
      %p153 = scmp.ne.s32.totalorder %s145, %s148
      %p154 = scmp.eq.s32.totalorder %s20, 0
      %p155 = por %p153, %p154
      %p156 = scmp.ne.s32.totalorder %s145, %s148
      %p157 = scmp.eq.s32.totalorder %s25, 1
      %p158 = por %p156, %p157
      %p159 = scmp.ne.s32.totalorder %s148, %s149
      %p160 = scmp.eq.s32.totalorder %s25, 0
      %p161 = por %p159, %p160
      %p162 = scmp.ne.s32.totalorder %s148, %s149
      %p163 = scmp.eq.s32.totalorder %s26, 1
      %p164 = por %p162, %p163
      %p166 = scmp.ne.s32.totalorder %s149, %s165
      %p167 = scmp.eq.s32.totalorder %s26, 0
      %p168 = por %p166, %p167
      %s169 = ssub.s32 %s20, %s27
      %p170 = scmp.eq.s32.totalorder %s169, 0
      %s172 = sadd.s32 %s171, 1
      %s173 = scalar_select %p170, %s171, %s172
      %p176 = pneg %p170
      %p177 = scmp.eq.s32.totalorder %s20, 1
      %p178 = por %p176, %p177
      %p179 = scmp.ne.s32.totalorder %s171, %s174
      %p180 = scmp.eq.s32.totalorder %s20, 0
      %p181 = por %p179, %p180
      %p182 = scmp.ne.s32.totalorder %s171, %s174
      %p183 = scmp.eq.s32.totalorder %s25, 1
      %p184 = por %p182, %p183
      %p185 = scmp.ne.s32.totalorder %s174, %s175
      %p186 = scmp.eq.s32.totalorder %s25, 0
      %p187 = por %p185, %p186
      %p188 = scmp.ne.s32.totalorder %s174, %s175
      %p189 = scmp.eq.s32.totalorder %s26, 1
      %p190 = por %p188, %p189
      %p192 = scmp.ne.s32.totalorder %s175, %s191
      %p193 = scmp.eq.s32.totalorder %s26, 0
      %p194 = por %p192, %p193
      %s195 = ssub.s32 %s20, %s27
      %p196 = scmp.eq.s32.totalorder %s195, 0
      %s198 = sadd.s32 %s197, 1
      %s199 = scalar_select %p196, %s197, %s198
      %p202 = pneg %p196
      %p203 = scmp.eq.s32.totalorder %s20, 1
      %p204 = por %p202, %p203
      %p205 = scmp.ne.s32.totalorder %s197, %s200
      %p206 = scmp.eq.s32.totalorder %s20, 0
      %p207 = por %p205, %p206
      %p208 = scmp.ne.s32.totalorder %s197, %s200
      %p209 = scmp.eq.s32.totalorder %s25, 1
      %p210 = por %p208, %p209
      %p211 = scmp.ne.s32.totalorder %s200, %s201
      %p212 = scmp.eq.s32.totalorder %s25, 0
      %p213 = por %p211, %p212
      %p214 = scmp.ne.s32.totalorder %s200, %s201
      %p215 = scmp.eq.s32.totalorder %s26, 1
      %p216 = por %p214, %p215
      %p218 = scmp.ne.s32.totalorder %s201, %s217
      %p219 = scmp.eq.s32.totalorder %s26, 0
      %p220 = por %p218, %p219
      %s221 = ssub.s32 %s20, %s27
      %p222 = scmp.eq.s32.totalorder %s221, 0
      %s224 = sadd.s32 %s223, 1
      %s225 = scalar_select %p222, %s223, %s224
      %p228 = pneg %p222
      %p229 = scmp.eq.s32.totalorder %s20, 1
      %p230 = por %p228, %p229
      %p231 = scmp.ne.s32.totalorder %s223, %s226
      %p232 = scmp.eq.s32.totalorder %s20, 0
      %p233 = por %p231, %p232
      %p234 = scmp.ne.s32.totalorder %s223, %s226
      %p235 = scmp.eq.s32.totalorder %s25, 1
      %p236 = por %p234, %p235
      %p237 = scmp.ne.s32.totalorder %s226, %s227
      %p238 = scmp.eq.s32.totalorder %s25, 0
      %p239 = por %p237, %p238
      %p240 = scmp.ne.s32.totalorder %s226, %s227
      %p241 = scmp.eq.s32.totalorder %s26, 1
      %p242 = por %p240, %p241
      %p244 = scmp.ne.s32.totalorder %s227, %s243
      %p245 = scmp.eq.s32.totalorder %s26, 0
      %p246 = por %p244, %p245
      %s247 = ssub.s32 %s20, %s27
      %p248 = scmp.eq.s32.totalorder %s247, 0
      %s250 = sadd.s32 %s249, 1
      %s251 = scalar_select %p248, %s249, %s250
      %p254 = pneg %p248
      %p255 = scmp.eq.s32.totalorder %s20, 1
      %p256 = por %p254, %p255
      %p257 = scmp.ne.s32.totalorder %s249, %s252
      %p258 = scmp.eq.s32.totalorder %s20, 0
      %p259 = por %p257, %p258
      %p260 = scmp.ne.s32.totalorder %s249, %s252
      %p261 = scmp.eq.s32.totalorder %s25, 1
      %p262 = por %p260, %p261
      %p263 = scmp.ne.s32.totalorder %s252, %s253
      %p264 = scmp.eq.s32.totalorder %s25, 0
      %p265 = por %p263, %p264
      %p266 = scmp.ne.s32.totalorder %s252, %s253
      %p267 = scmp.eq.s32.totalorder %s26, 1
      %p268 = por %p266, %p267
      %p270 = scmp.ne.s32.totalorder %s253, %s269
      %p271 = scmp.eq.s32.totalorder %s26, 0
      %p272 = por %p270, %p271
      %s273 = ssub.s32 %s20, %s27
      %p274 = scmp.eq.s32.totalorder %s273, 0
      %s276 = sadd.s32 %s275, 1
      %s277 = scalar_select %p274, %s275, %s276
      %p280 = pneg %p274
      %p281 = scmp.eq.s32.totalorder %s20, 1
      %p282 = por %p280, %p281
      %p283 = scmp.ne.s32.totalorder %s275, %s278
      %p284 = scmp.eq.s32.totalorder %s20, 0
      %p285 = por %p283, %p284
      %p286 = scmp.ne.s32.totalorder %s275, %s278
      %p287 = scmp.eq.s32.totalorder %s25, 1
      %p288 = por %p286, %p287
      %p289 = scmp.ne.s32.totalorder %s278, %s279
      %p290 = scmp.eq.s32.totalorder %s25, 0
      %p291 = por %p289, %p290
      %p292 = scmp.ne.s32.totalorder %s278, %s279
      %p293 = scmp.eq.s32.totalorder %s26, 1
      %p294 = por %p292, %p293
      %p296 = scmp.ne.s32.totalorder %s279, %s295
      %p297 = scmp.eq.s32.totalorder %s26, 0
      %p298 = por %p296, %p297
      %s299 = ssub.s32 %s20, %s27
      %p300 = scmp.eq.s32.totalorder %s299, 0
      %s302 = sadd.s32 %s301, 1
      %s303 = scalar_select %p300, %s301, %s302
      %p306 = pneg %p300
      %p307 = scmp.eq.s32.totalorder %s20, 1
      %p308 = por %p306, %p307
      %p309 = scmp.ne.s32.totalorder %s301, %s304
      %p310 = scmp.eq.s32.totalorder %s20, 0
      %p311 = por %p309, %p310
      %p312 = scmp.ne.s32.totalorder %s301, %s304
      %p313 = scmp.eq.s32.totalorder %s25, 1
      %p314 = por %p312, %p313
      %p315 = scmp.ne.s32.totalorder %s304, %s305
      %p316 = scmp.eq.s32.totalorder %s25, 0
      %p317 = por %p315, %p316
      %p318 = scmp.ne.s32.totalorder %s304, %s305
      %p319 = scmp.eq.s32.totalorder %s26, 1
      %p320 = por %p318, %p319
      %p322 = scmp.ne.s32.totalorder %s305, %s321
      %p323 = scmp.eq.s32.totalorder %s26, 0
      %p324 = por %p322, %p323
      %s325 = ssub.s32 %s20, %s27
      %p326 = scmp.eq.s32.totalorder %s325, 0
      %s328 = sadd.s32 %s327, 1
      %s329 = scalar_select %p326, %s327, %s328
      %p332 = pneg %p326
      %p333 = scmp.eq.s32.totalorder %s20, 1
      %p334 = por %p332, %p333
      %p335 = scmp.ne.s32.totalorder %s327, %s330
      %p336 = scmp.eq.s32.totalorder %s20, 0
      %p337 = por %p335, %p336
      %p338 = scmp.ne.s32.totalorder %s327, %s330
      %p339 = scmp.eq.s32.totalorder %s25, 1
      %p340 = por %p338, %p339
      %p341 = scmp.ne.s32.totalorder %s330, %s331
      %p342 = scmp.eq.s32.totalorder %s25, 0
      %p343 = por %p341, %p342
      %p344 = scmp.ne.s32.totalorder %s330, %s331
      %p345 = scmp.eq.s32.totalorder %s26, 1
      %p346 = por %p344, %p345
      %p348 = scmp.ne.s32.totalorder %s331, %s347
      %p349 = scmp.eq.s32.totalorder %s26, 0
      %p350 = por %p348, %p349
      %s352 = sadd.s32 %s351, 1
      %p355 = scmp.eq.s32.totalorder %s20, 1
      %p356 = scmp.ne.s32.totalorder %s351, %s353
      %p357 = scmp.eq.s32.totalorder %s20, 0
      %p358 = por %p356, %p357
      %p359 = scmp.ne.s32.totalorder %s351, %s353
      %p360 = scmp.eq.s32.totalorder %s25, 1
      %p361 = por %p359, %p360
      %p362 = scmp.ne.s32.totalorder %s353, %s354
      %p363 = scmp.eq.s32.totalorder %s25, 0
      %p364 = por %p362, %p363
      %p365 = scmp.ne.s32.totalorder %s353, %s354
      %p366 = scmp.eq.s32.totalorder %s26, 1
      %p367 = por %p365, %p366
      %p369 = scmp.ne.s32.totalorder %s354, %s368
      %p370 = scmp.eq.s32.totalorder %s26, 0
      %p371 = por %p369, %p370
      %p372 = scmp.le.s32.totalorder 1, %s20
      %p373 = scmp.lt.s32.totalorder %s20, 3
      %p374 = pnand %p372, %p373
      %p375 = pneg %p374
      // Predicated region
      $region9: #{tpu_custom_call.1} parent=5 // pred_check
        _
      $region10: #{tpu_custom_call.1} parent=5 // pred_check_branch
        %377 = sbr.rel (%p374) target = $region12
      $region11: #{tpu_custom_call.1} parent=5 // pred_region
        %s378 = ssub.s32 %s20, 1
        // Predicated region
        $region13: #{tpu_custom_call.1} parent=11 // pred_check
          %p379 = pneg %p41
        $region14: #{tpu_custom_call.1} parent=11 // pred_check_branch
          %381 = sbr.rel (%p379) target = $region16
        $region15: #{tpu_custom_call.1} parent=11 // pred_region
          _
        $region16: #{tpu_custom_call.1} parent=11 // pred_fallthru
          _
        // Predicated region
        $region17: #{tpu_custom_call.1} parent=11 // pred_check
          %p382 = pneg %p62
        $region18: #{tpu_custom_call.1} parent=11 // pred_check_branch
          %384 = sbr.rel (%p382) target = $region20
        $region19: #{tpu_custom_call.1} parent=11 // pred_region
          _
        $region20: #{tpu_custom_call.1} parent=11 // pred_fallthru
          _
        // Predicated region
        $region21: #{tpu_custom_call.1} parent=11 // pred_check
          %p385 = pneg %p83
        $region22: #{tpu_custom_call.1} parent=11 // pred_check_branch
          %387 = sbr.rel (%p385) target = $region24
        $region23: #{tpu_custom_call.1} parent=11 // pred_region
          _
        $region24: #{tpu_custom_call.1} parent=11 // pred_fallthru
          _
      $region12: #{tpu_custom_call.1} parent=5 // pred_fallthru
        _
      %p388 = scmp.lt.s32.totalorder %s20, 2
      // Predicated region
      $region25: #{tpu_custom_call.1} parent=5 // pred_check
        %p389 = pneg %p388
      $region26: #{tpu_custom_call.1} parent=5 // pred_check_branch
        %391 = sbr.rel (%p389) target = $region28
      $region27: #{tpu_custom_call.1} parent=5 // pred_region
        // Predicated region
        $region29: #{tpu_custom_call.1} parent=27 // pred_check
          %p392 = pneg %p103
        $region30: #{tpu_custom_call.1} parent=27 // pred_check_branch
          %394 = sbr.rel (%p392) target = $region32
        $region31: #{tpu_custom_call.1} parent=27 // pred_region
          %p395 = scmp.lt.s32.totalorder %s20, 1
          %s396 = scalar_select %p395, %s20, 1
          %s397 = smul.addr %s396, 4
          %s398 = smul.addr %s397, 4
          %s399 = scalar_lea.vmem %s3, %s398
        $region32: #{tpu_custom_call.1} parent=27 // pred_fallthru
          _
        // Predicated region
        $region33: #{tpu_custom_call.1} parent=27 // pred_check
          %p400 = pneg %p129
        $region34: #{tpu_custom_call.1} parent=27 // pred_check_branch
          %402 = sbr.rel (%p400) target = $region36
        $region35: #{tpu_custom_call.1} parent=27 // pred_region
          %p403 = scmp.lt.s32.totalorder %s20, 1
          %s404 = scalar_select %p403, %s20, 1
          %s405 = scalar_lea.vmem %s4, %s404
        $region36: #{tpu_custom_call.1} parent=27 // pred_fallthru
          _
        // Predicated region
        $region37: #{tpu_custom_call.1} parent=27 // pred_check
          %p406 = pneg %p155
        $region38: #{tpu_custom_call.1} parent=27 // pred_check_branch
          %408 = sbr.rel (%p406) target = $region40
        $region39: #{tpu_custom_call.1} parent=27 // pred_region
          %p409 = scmp.lt.s32.totalorder %s20, 1
          %s410 = scalar_select %p409, %s20, 1
          %s411 = smul.addr %s410, 4
          %s412 = smul.addr %s411, 4
          %s413 = scalar_lea.vmem %s5, %s412
        $region40: #{tpu_custom_call.1} parent=27 // pred_fallthru
          _
        // Predicated region
        $region41: #{tpu_custom_call.1} parent=27 // pred_check
          %p414 = pneg %p181
        $region42: #{tpu_custom_call.1} parent=27 // pred_check_branch
          %416 = sbr.rel (%p414) target = $region44
        $region43: #{tpu_custom_call.1} parent=27 // pred_region
          %p417 = scmp.lt.s32.totalorder %s20, 1
          %s418 = scalar_select %p417, %s20, 1
          %s419 = scalar_lea.vmem %s6, %s418
        $region44: #{tpu_custom_call.1} parent=27 // pred_fallthru
          _
        // Predicated region
        $region45: #{tpu_custom_call.1} parent=27 // pred_check
          %p420 = pneg %p207
        $region46: #{tpu_custom_call.1} parent=27 // pred_check_branch
          %422 = sbr.rel (%p420) target = $region48
        $region47: #{tpu_custom_call.1} parent=27 // pred_region
          %p423 = scmp.lt.s32.totalorder %s20, 1
          %s424 = scalar_select %p423, %s20, 1
          %s425 = smul.addr %s424, 2
          %s426 = scalar_lea.vmem %s7, %s425
        $region48: #{tpu_custom_call.1} parent=27 // pred_fallthru
          _
        // Predicated region
        $region49: #{tpu_custom_call.1} parent=27 // pred_check
          %p427 = pneg %p233
        $region50: #{tpu_custom_call.1} parent=27 // pred_check_branch
          %429 = sbr.rel (%p427) target = $region52
        $region51: #{tpu_custom_call.1} parent=27 // pred_region
          %p430 = scmp.lt.s32.totalorder %s20, 1
          %s431 = scalar_select %p430, %s20, 1
          %s432 = smul.addr %s431, 32
          %s433 = smul.addr %s432, 4
          %s434 = scalar_lea.vmem %s8, %s433
        $region52: #{tpu_custom_call.1} parent=27 // pred_fallthru
          _
        // Predicated region
        $region53: #{tpu_custom_call.1} parent=27 // pred_check
          %p435 = pneg %p259
        $region54: #{tpu_custom_call.1} parent=27 // pred_check_branch
          %437 = sbr.rel (%p435) target = $region56
        $region55: #{tpu_custom_call.1} parent=27 // pred_region
          %p438 = scmp.lt.s32.totalorder %s20, 1
          %s439 = scalar_select %p438, %s20, 1
          %s440 = smul.addr %s439, 8
          %s441 = scalar_lea.vmem %s9, %s440
        $region56: #{tpu_custom_call.1} parent=27 // pred_fallthru
          _
        // Predicated region
        $region57: #{tpu_custom_call.1} parent=27 // pred_check
          %p442 = pneg %p285
        $region58: #{tpu_custom_call.1} parent=27 // pred_check_branch
          %444 = sbr.rel (%p442) target = $region60
        $region59: #{tpu_custom_call.1} parent=27 // pred_region
          %p445 = scmp.lt.s32.totalorder %s20, 1
          %s446 = scalar_select %p445, %s20, 1
          %s447 = smul.addr %s446, 128
          %s448 = smul.addr %s447, 4
          %s449 = scalar_lea.vmem %s10, %s448
        $region60: #{tpu_custom_call.1} parent=27 // pred_fallthru
          _
        // Predicated region
        $region61: #{tpu_custom_call.1} parent=27 // pred_check
          %p450 = pneg %p311
        $region62: #{tpu_custom_call.1} parent=27 // pred_check_branch
          %452 = sbr.rel (%p450) target = $region64
        $region63: #{tpu_custom_call.1} parent=27 // pred_region
          %p453 = scmp.lt.s32.totalorder %s20, 1
          %s454 = scalar_select %p453, %s20, 1
          %s455 = scalar_lea.vmem %s11, %s454
        $region64: #{tpu_custom_call.1} parent=27 // pred_fallthru
          _
        // Predicated region
        $region65: #{tpu_custom_call.1} parent=27 // pred_check
          %p456 = pneg %p337
        $region66: #{tpu_custom_call.1} parent=27 // pred_check_branch
          %458 = sbr.rel (%p456) target = $region68
        $region67: #{tpu_custom_call.1} parent=27 // pred_region
          %p459 = scmp.lt.s32.totalorder %s20, 1
          %s460 = scalar_select %p459, %s20, 1
          %s461 = smul.addr %s460, 2
          %s462 = scalar_lea.vmem %s12, %s461
        $region68: #{tpu_custom_call.1} parent=27 // pred_fallthru
          _
      $region28: #{tpu_custom_call.1} parent=5 // pred_fallthru
        _
      %p463 = scmp.le.s32.totalorder 1, %s20
      %p464 = scmp.lt.s32.totalorder %s20, 3
      %p465 = pnand %p463, %p464
      %p466 = pneg %p465
      // Predicated region
      $region69: #{tpu_custom_call.1} parent=5 // pred_check
        _
      $region70: #{tpu_custom_call.1} parent=5 // pred_check_branch
        %468 = sbr.rel (%p465) target = $region72
      $region71: #{tpu_custom_call.1} parent=5 // pred_region
        %s469 = ssub.s32 %s20, 1
        %p470 = pneg %p41
        %p471 = pneg %p38
        %p472 = pneg %p62
        %p473 = pneg %p59
        %p474 = pneg %p83
        %p475 = pneg %p80
        %p476 = scmp.lt.s32.totalorder %s25, 1
        %s477 = scalar_select %p476, %s25, 1
        %s478 = smul.addr %s477, 4
        %s479 = smul.addr %s478, 4
        %s480 = scalar_lea.vmem %s3, %s479
        %p481 = pneg %p109
        %p482 = pneg %p106
        %p483 = scmp.lt.s32.totalorder %s25, 1
        %s484 = scalar_select %p483, %s25, 1
        %s485 = scalar_lea.vmem %s4, %s484
        %p486 = pneg %p135
        %p487 = pneg %p132
        %p488 = scmp.lt.s32.totalorder %s25, 1
        %s489 = scalar_select %p488, %s25, 1
        %s490 = smul.addr %s489, 4
        %s491 = smul.addr %s490, 4
        %s492 = scalar_lea.vmem %s5, %s491
        %p493 = pneg %p161
        %p494 = pneg %p158
        %p495 = scmp.lt.s32.totalorder %s25, 1
        %s496 = scalar_select %p495, %s25, 1
        %s497 = scalar_lea.vmem %s6, %s496
        %p498 = pneg %p187
        %p499 = pneg %p184
        %p500 = scmp.lt.s32.totalorder %s25, 1
        %s501 = scalar_select %p500, %s25, 1
        %s502 = smul.addr %s501, 2
        %s503 = scalar_lea.vmem %s7, %s502
        %p504 = pneg %p213
        %p505 = pneg %p210
        %p506 = scmp.lt.s32.totalorder %s25, 1
        %s507 = scalar_select %p506, %s25, 1
        %s508 = smul.addr %s507, 32
        %s509 = smul.addr %s508, 4
        %s510 = scalar_lea.vmem %s8, %s509
        %p511 = pneg %p239
        %p512 = pneg %p236
        %p513 = scmp.lt.s32.totalorder %s25, 1
        %s514 = scalar_select %p513, %s25, 1
        %s515 = smul.addr %s514, 8
        %s516 = scalar_lea.vmem %s9, %s515
        %p517 = pneg %p265
        %p518 = pneg %p262
        %p519 = scmp.lt.s32.totalorder %s25, 1
        %s520 = scalar_select %p519, %s25, 1
        %s521 = smul.addr %s520, 128
        %s522 = smul.addr %s521, 4
        %s523 = scalar_lea.vmem %s10, %s522
        %p524 = pneg %p291
        %p525 = pneg %p288
        %p526 = scmp.lt.s32.totalorder %s25, 1
        %s527 = scalar_select %p526, %s25, 1
        %s528 = scalar_lea.vmem %s11, %s527
        %p529 = pneg %p317
        %p530 = pneg %p314
        %p531 = scmp.lt.s32.totalorder %s25, 1
        %s532 = scalar_select %p531, %s25, 1
        %s533 = smul.addr %s532, 2
        %s534 = scalar_lea.vmem %s12, %s533
        %p535 = pneg %p343
        %p536 = pneg %p340
        %p537 = pneg %p364
        %p538 = pneg %p361
        %p539 = scmp.lt.s32.totalorder %s25, 1
        %s540 = scalar_select %p539, %s25, 1
        %s541 = smul.addr %s540, 4
        %s542 = smul.addr %s541, 4
        %s543 = scalar_lea.vmem %s3, %s542
        %p544 = scmp.lt.s32.totalorder %s25, 1
        %s545 = scalar_select %p544, %s25, 1
        %s546 = scalar_lea.vmem %s4, %s545
        %p547 = scmp.lt.s32.totalorder %s25, 1
        %s548 = scalar_select %p547, %s25, 1
        %s549 = smul.addr %s548, 4
        %s550 = smul.addr %s549, 4
        %s551 = scalar_lea.vmem %s5, %s550
        %p552 = scmp.lt.s32.totalorder %s25, 1
        %s553 = scalar_select %p552, %s25, 1
        %s554 = scalar_lea.vmem %s6, %s553
        %p555 = scmp.lt.s32.totalorder %s25, 1
        %s556 = scalar_select %p555, %s25, 1
        %s557 = smul.addr %s556, 2
        %s558 = scalar_lea.vmem %s7, %s557
        %p559 = scmp.lt.s32.totalorder %s25, 1
        %s560 = scalar_select %p559, %s25, 1
        %s561 = smul.addr %s560, 32
        %s562 = smul.addr %s561, 4
        %s563 = scalar_lea.vmem %s8, %s562
        %p564 = scmp.lt.s32.totalorder %s25, 1
        %s565 = scalar_select %p564, %s25, 1
        %s566 = smul.addr %s565, 8
        %s567 = scalar_lea.vmem %s9, %s566
        %p568 = scmp.lt.s32.totalorder %s25, 1
        %s569 = scalar_select %p568, %s25, 1
        %s570 = smul.addr %s569, 128
        %s571 = smul.addr %s570, 4
        %s572 = scalar_lea.vmem %s10, %s571
        %p573 = scmp.lt.s32.totalorder %s25, 1
        %s574 = scalar_select %p573, %s25, 1
        %s575 = scalar_lea.vmem %s11, %s574
        %p576 = scmp.lt.s32.totalorder %s25, 1
        %s577 = scalar_select %p576, %s25, 1
        %s578 = smul.addr %s577, 2
        %s579 = scalar_lea.vmem %s12, %s578
        %p581 = scmp.eq.s32.totalorder %s25, 0
        // Predicated region
        $region73: #{tpu_custom_call.1} parent=71 // pred_check
          %p582 = pneg %p581
        $region74: #{tpu_custom_call.1} parent=71 // pred_check_branch
          %584 = sbr.rel (%p582) target = $region76
        $region75: #{tpu_custom_call.1} parent=71 // pred_region
          %v585 = vld [vmem:[%s2] sm:$0x3]
          %v586 = vld [vmem:[%s0] sm:$0xff]
          %v587 = vld [vmem:[%s0 + $0x8] sm:$0xff]
          %vm588 = vcmask 261120
          %v589 = vsel %vm588, %v586, 0.0
          %590 = vadd.xlane.f32.xlu0 %v589
          %v591 = vpop.xlane.xlu0 %590
          %v592 = vsel %vm588, %v587, 0.0
          %593 = vadd.xlane.f32.xlu0 %v592
          %v594 = vpop.xlane.xlu0 %593
          %v595 = vrcp.pop 32.0
          %v596 = vmul.f32 %v591, %v595
          %v597 = vmul.f32 %v594, %v595
          %v598 = vsub.f32 %v586, %v596
          %v599 = vsub.f32 %v587, %v597
          %v600 = vmul.f32 %v598, %v598
          %v601 = vmul.f32 %v599, %v599
          %v602 = vsel %vm588, %v600, 0.0
          %603 = vadd.xlane.f32.xlu0 %v602
          %v604 = vpop.xlane.xlu0 %603
          %v605 = vsel %vm588, %v601, 0.0
          %606 = vadd.xlane.f32.xlu0 %v605
          %v607 = vpop.xlane.xlu0 %606
          %v608 = vmul.f32 %v604, %v595
          %v609 = vmul.f32 %v607, %v595
          %v610 = vadd.f32 %v608, 1e-05
          %v611 = vadd.f32 %v609, 1e-05
          %v612 = vrsqrt.pop %v610
          %v613 = vrsqrt.pop %v611
          %v614 = vmul.f32 %v598, %v612
          %v615 = vmul.f32 %v599, %v613
          %v616 = vlaneseq
          %v617 = vshrl.u32 %v616, 7
          %v618 = vsub.s32 0, %v617
          %v619 = vrot.slane %v585, %v618
          %v620 = vmul.f32 %v614, %v619
          %v621 = vmul.f32 %v615, %v619
          %v622 = vlaneseq
          %v623 = vshrl.u32 %v622, 7
          %v624 = vsub.s32 1, %v623
          %v625 = vrot.slane %v585, %v624
          %v626 = vadd.f32 %v620, %v625
          %v627 = vadd.f32 %v621, %v625
          %628 = vst.msk [vmem:[#allocation2] sm:$0xff] %vm588, %v626
          %629 = vst.msk [vmem:[#allocation2 + $0x8] sm:$0xff] %vm588, %v627
        $region76: #{tpu_custom_call.1} parent=71 // pred_fallthru
          _
        %v630 = vld [vmem:[#allocation2] sm:$0xff]
        %v631 = vld [vmem:[#allocation2 + $0x8] sm:$0xff]
        %v632 = vld [vmem:[%s1] sm:$0x1]
        %v633 = vld [vmem:[%s1 + $0x1] sm:$0x1]
        %v634 = vsub.f32 1.0, %v632
        %v635 = vsub.f32 1.0, %v633
        %v636 = vmul.f32 %v634, -10000.0
        %v637 = vmul.f32 %v635, -10000.0
        %v638 = vpack.c.bf16 %v631, %v630
        %v639 = vld [vmem:[%s543] sm:$0xf]
        %v640 = vld [vmem:[%s543 + $0x4] sm:$0xf]
        %v641 = vld [vmem:[%s543 + $0x8] sm:$0xf]
        %v642 = vld [vmem:[%s543 + $0xc] sm:$0xf]
        %v643 = vld [vmem:[%s546] sm:$0x1]
        %v645 = vlaneseq
        %v646 = vshrl.u32 %v645, 7
        %v647 = vsub.s32 0, %v646
        %v648 = vrot.slane %v643, %v647
        %v654 = vunpack.c.l.b16 %v639
        %v655 = vunpack.c.l.b16 %v640
        %v656 = vunpack.c.l.b16 %v641
        %v657 = vunpack.c.l.b16 %v642
        %v658 = vpack.c.b16 %v655, %v654
        %v659 = vpack.c.b16 %v657, %v656
        %vm662 = vcmask 261120
        %v664 = vsel %vm662, %v638, 0
        %666 = vmatprep.subr.bf16.mxu0 0
        %667 = vmatpush1.bf16.msra.mxu0 0
        %668 = vmatprep.subr.bf16.mxu0 0
        %669 = vmatpush1.bf16.msra.mxu0 0
        %670 = vmatprep.subr.bf16.mxu0 0
        %671 = vmatpush1.bf16.msra.mxu0 0
        %672 = vmatprep.subr.bf16.mxu0 0
        %673 = vmatpush1.bf16.msra.mxu0 0
        %674 = vmatprep.subr.bf16.mxu0 0
        %675 = vmatpush1.bf16.msra.mxu0 0
        %676 = vmatprep.subr.bf16.mxu0 0
        %677 = vmatpush1.bf16.msra.mxu0 0
        %678 = vmatprep.subr.bf16.mxu0 0
        %679 = vmatpush1.bf16.msra.mxu0 %v659
        %680 = vmatprep.subr.bf16.mxu0 0
        %681 = vmatpush1.bf16.msra.mxu0 %v658
        %682 = vmatprep.subr.bf16.mxu0 0
        %683 = vmatpush2.bf16.msra.mxu0 0
        %684 = vmatprep.subr.bf16.mxu0 0
        %685 = vmatpush2.bf16.msra.mxu0 0
        %686 = vmatprep.subr.bf16.mxu0 0
        %687 = vmatpush2.bf16.msra.mxu0 0
        %688 = vmatprep.subr.bf16.mxu0 0
        %689 = vmatpush2.bf16.msra.mxu0 0
        %690 = vmatprep.subr.bf16.mxu0 0
        %691 = vmatpush2.bf16.msra.mxu0 0
        %692 = vmatprep.subr.bf16.mxu0 0
        %693 = vmatpush2.bf16.msra.mxu0 0
        %694 = vmatprep.subr.bf16.mxu0 0
        %695 = vmatpush2.bf16.msra.mxu0 0
        %696 = vmatprep.subr.bf16.mxu0 0
        %697 = vmatpush2.bf16.msra.mxu0 0
        %698 = vmatprep.mubr.bf16.mxu0 0
        %699 = vmatmul.mubr.bf16.gmra.mxu0 %v664
        %v700 = vpop.f32.mrf.mxu0
        %v701 = vadd.f32 %v648, %v700
        %v702 = vpop.f32.mrf.mxu0
        %v703 = vpop.f32.mrf.mxu0
        %v704 = vadd.f32 %v648, %v703
        %v705 = vpop.f32.mrf.mxu0
        %706 = vdwg.mxu0
        %v707 = vld [vmem:[%s551] sm:$0xf]
        %v708 = vld [vmem:[%s551 + $0x4] sm:$0xf]
        %v709 = vld [vmem:[%s551 + $0x8] sm:$0xf]
        %v710 = vld [vmem:[%s551 + $0xc] sm:$0xf]
        %v711 = vpack.c.bf16 %v701, %v701
        %v712 = vpack.c.bf16 %v704, %v704
        %714 = vrot.lane.b32.xlu0 %v711, 96
        %v715 = vpop.permute.xlu0 %714
        %vm716 = vcmask 31744
        %v718 = vsel %vm716, %v711, 0
        %v721 = vsel %vm716, %v715, 0
        %723 = vmatprep.subr.bf16.mxu0 0
        %724 = vmatpush1.bf16.xpose.msra.mxu0 0
        %725 = vmatprep.subr.bf16.mxu0 0
        %726 = vmatpush1.bf16.xpose.msra.mxu0 0
        %727 = vmatprep.subr.bf16.mxu0 0
        %728 = vmatpush1.bf16.xpose.msra.mxu0 0
        %729 = vmatprep.subr.bf16.mxu0 0
        %730 = vmatpush1.bf16.xpose.msra.mxu0 0
        %731 = vmatprep.subr.bf16.mxu0 0
        %732 = vmatpush1.bf16.xpose.msra.mxu0 0
        %733 = vmatprep.subr.bf16.mxu0 0
        %734 = vmatpush1.bf16.xpose.msra.mxu0 0
        %735 = vmatprep.subr.bf16.mxu0 0
        %736 = vmatpush1.bf16.xpose.msra.mxu0 0
        %737 = vmatprep.subr.bf16.mxu0 0
        %738 = vmatpush1.bf16.xpose.msra.mxu0 %v721
        %739 = vmatprep.subr.bf16.mxu0 0
        %740 = vmatpush2.bf16.xpose.msra.mxu0 0
        %741 = vmatprep.subr.bf16.mxu0 0
        %742 = vmatpush2.bf16.xpose.msra.mxu0 0
        %743 = vmatprep.subr.bf16.mxu0 0
        %744 = vmatpush2.bf16.xpose.msra.mxu0 0
        %745 = vmatprep.subr.bf16.mxu0 0
        %746 = vmatpush2.bf16.xpose.msra.mxu0 0
        %747 = vmatprep.subr.bf16.mxu0 0
        %748 = vmatpush2.bf16.xpose.msra.mxu0 0
        %749 = vmatprep.subr.bf16.mxu0 0
        %750 = vmatpush2.bf16.xpose.msra.mxu0 0
        %751 = vmatprep.subr.bf16.mxu0 0
        %752 = vmatpush2.bf16.xpose.msra.mxu0 0
        %753 = vmatprep.subr.bf16.mxu0 0
        %754 = vmatpush2.bf16.xpose.msra.mxu0 0
        %755 = vmatprep.mubr.bf16.mxu0 0
        %756 = vmatmul.mubr.bf16.gmra.mxu0 %v718
        %v757 = vpop.f32.mrf.mxu0
        %v758 = vadd.f32 0.0, %v757
        %v759 = vpop.f32.mrf.mxu0
        %v760 = vpop.f32.mrf.mxu0
        %v761 = vpop.f32.mrf.mxu0
        %762 = vdwg.mxu0
        %764 = vrot.lane.b32.xlu0 %v712, 96
        %v765 = vpop.permute.xlu0 %764
        %v767 = vsel %vm716, %v712, 0
        %v770 = vsel %vm716, %v765, 0
        %772 = vmatprep.subr.bf16.mxu0 0
        %773 = vmatpush1.bf16.xpose.msra.mxu0 0
        %774 = vmatprep.subr.bf16.mxu0 0
        %775 = vmatpush1.bf16.xpose.msra.mxu0 0
        %776 = vmatprep.subr.bf16.mxu0 0
        %777 = vmatpush1.bf16.xpose.msra.mxu0 0
        %778 = vmatprep.subr.bf16.mxu0 0
        %779 = vmatpush1.bf16.xpose.msra.mxu0 0
        %780 = vmatprep.subr.bf16.mxu0 0
        %781 = vmatpush1.bf16.xpose.msra.mxu0 0
        %782 = vmatprep.subr.bf16.mxu0 0
        %783 = vmatpush1.bf16.xpose.msra.mxu0 0
        %784 = vmatprep.subr.bf16.mxu0 0
        %785 = vmatpush1.bf16.xpose.msra.mxu0 0
        %786 = vmatprep.subr.bf16.mxu0 0
        %787 = vmatpush1.bf16.xpose.msra.mxu0 %v770
        %788 = vmatprep.subr.bf16.mxu0 0
        %789 = vmatpush2.bf16.xpose.msra.mxu0 0
        %790 = vmatprep.subr.bf16.mxu0 0
        %791 = vmatpush2.bf16.xpose.msra.mxu0 0
        %792 = vmatprep.subr.bf16.mxu0 0
        %793 = vmatpush2.bf16.xpose.msra.mxu0 0
        %794 = vmatprep.subr.bf16.mxu0 0
        %795 = vmatpush2.bf16.xpose.msra.mxu0 0
        %796 = vmatprep.subr.bf16.mxu0 0
        %797 = vmatpush2.bf16.xpose.msra.mxu0 0
        %798 = vmatprep.subr.bf16.mxu0 0
        %799 = vmatpush2.bf16.xpose.msra.mxu0 0
        %800 = vmatprep.subr.bf16.mxu0 0
        %801 = vmatpush2.bf16.xpose.msra.mxu0 0
        %802 = vmatprep.subr.bf16.mxu0 0
        %803 = vmatpush2.bf16.xpose.msra.mxu0 0
        %804 = vmatprep.mubr.bf16.mxu0 0
        %805 = vmatmul.mubr.bf16.gmra.mxu0 %v767
        %v806 = vpop.f32.mrf.mxu0
        %v807 = vadd.f32 0.0, %v806
        %v808 = vpop.f32.mrf.mxu0
        %v809 = vpop.f32.mrf.mxu0
        %v810 = vpop.f32.mrf.mxu0
        %811 = vdwg.mxu0
        %v812 = vmul.f32 %v758, 0.5
        %v813 = vmul.f32 %v807, 0.5
        %v816 = vlaneseq
        %v817 = vshrl.u32 %v816, 7
        %v818 = vsub.s32 0, %v817
        %v819 = vrot.slane %v636, %v818
        %v820 = vlaneseq
        %v821 = vshrl.u32 %v820, 7
        %v822 = vsub.s32 0, %v821
        %v823 = vrot.slane %v637, %v822
        %v826 = vadd.f32 %v812, %v819
        %v827 = vadd.f32 %v813, %v823
        %vm828 = vcmask 64512
        %v829 = vsel %vm828, %v826, -inf
        %830 = vmax.xlane.f32.xlu0 %v829
        %v831 = vpop.xlane.xlu0 %830
        %v832 = vsel %vm828, %v827, -inf
        %833 = vmax.xlane.f32.xlu0 %v832
        %v834 = vpop.xlane.xlu0 %833
        %v835 = vsub.f32 %v826, %v831
        %v836 = vsub.f32 %v827, %v834
        %v837 = vmul.f32 %v835, 1.442695
        %v838 = vpow.pop %v837
        %v839 = vmul.f32 %v836, 1.442695
        %v840 = vpow.pop %v839
        %v841 = vsel %vm828, %v838, 0.0
        %842 = vadd.xlane.f32.xlu0 %v841
        %v843 = vpop.xlane.xlu0 %842
        %v844 = vsel %vm828, %v840, 0.0
        %845 = vadd.xlane.f32.xlu0 %v844
        %v846 = vpop.xlane.xlu0 %845
        %v847 = vrcp.pop %v843
        %v848 = vrcp.pop %v846
        %v849 = vmul.f32 %v838, %v847
        %v850 = vmul.f32 %v840, %v848
        %v851 = vpack.c.bf16 %v849, %v849
        %v852 = vpack.c.bf16 %v850, %v850
        %853 = vrot.lane.b32.xlu0 %v711, 64
        %v854 = vpop.permute.xlu0 %853
        %v856 = vsel %vm828, %v851, 0
        %vm858 = vcmask 1043456
        %v860 = vsel %vm858, %v854, 0
        %862 = vmatprep.subr.bf16.mxu0 0
        %863 = vmatpush1.bf16.msra.mxu0 0
        %864 = vmatprep.subr.bf16.mxu0 0
        %865 = vmatpush1.bf16.msra.mxu0 0
        %866 = vmatprep.subr.bf16.mxu0 0
        %867 = vmatpush1.bf16.msra.mxu0 0
        %868 = vmatprep.subr.bf16.mxu0 0
        %869 = vmatpush1.bf16.msra.mxu0 0
        %870 = vmatprep.subr.bf16.mxu0 0
        %871 = vmatpush1.bf16.msra.mxu0 0
        %872 = vmatprep.subr.bf16.mxu0 0
        %873 = vmatpush1.bf16.msra.mxu0 0
        %874 = vmatprep.subr.bf16.mxu0 0
        %875 = vmatpush1.bf16.msra.mxu0 0
        %876 = vmatprep.subr.bf16.mxu0 0
        %877 = vmatpush1.bf16.msra.mxu0 %v860
        %878 = vmatprep.subr.bf16.mxu0 0
        %879 = vmatpush2.bf16.msra.mxu0 0
        %880 = vmatprep.subr.bf16.mxu0 0
        %881 = vmatpush2.bf16.msra.mxu0 0
        %882 = vmatprep.subr.bf16.mxu0 0
        %883 = vmatpush2.bf16.msra.mxu0 0
        %884 = vmatprep.subr.bf16.mxu0 0
        %885 = vmatpush2.bf16.msra.mxu0 0
        %886 = vmatprep.subr.bf16.mxu0 0
        %887 = vmatpush2.bf16.msra.mxu0 0
        %888 = vmatprep.subr.bf16.mxu0 0
        %889 = vmatpush2.bf16.msra.mxu0 0
        %890 = vmatprep.subr.bf16.mxu0 0
        %891 = vmatpush2.bf16.msra.mxu0 0
        %892 = vmatprep.subr.bf16.mxu0 0
        %893 = vmatpush2.bf16.msra.mxu0 0
        %894 = vmatprep.mubr.bf16.mxu0 0
        %895 = vmatmul.mubr.bf16.gmra.mxu0 %v856
        %v896 = vpop.f32.mrf.mxu0
        %v897 = vadd.f32 0.0, %v896
        %v898 = vpop.f32.mrf.mxu0
        %v899 = vpop.f32.mrf.mxu0
        %v900 = vpop.f32.mrf.mxu0
        %901 = vdwg.mxu0
        %902 = vrot.lane.b32.xlu0 %v712, 64
        %v903 = vpop.permute.xlu0 %902
        %v905 = vsel %vm828, %v852, 0
        %v908 = vsel %vm858, %v903, 0
        %910 = vmatprep.subr.bf16.mxu0 0
        %911 = vmatpush1.bf16.msra.mxu0 0
        %912 = vmatprep.subr.bf16.mxu0 0
        %913 = vmatpush1.bf16.msra.mxu0 0
        %914 = vmatprep.subr.bf16.mxu0 0
        %915 = vmatpush1.bf16.msra.mxu0 0
        %916 = vmatprep.subr.bf16.mxu0 0
        %917 = vmatpush1.bf16.msra.mxu0 0
        %918 = vmatprep.subr.bf16.mxu0 0
        %919 = vmatpush1.bf16.msra.mxu0 0
        %920 = vmatprep.subr.bf16.mxu0 0
        %921 = vmatpush1.bf16.msra.mxu0 0
        %922 = vmatprep.subr.bf16.mxu0 0
        %923 = vmatpush1.bf16.msra.mxu0 0
        %924 = vmatprep.subr.bf16.mxu0 0
        %925 = vmatpush1.bf16.msra.mxu0 %v908
        %926 = vmatprep.subr.bf16.mxu0 0
        %927 = vmatpush2.bf16.msra.mxu0 0
        %928 = vmatprep.subr.bf16.mxu0 0
        %929 = vmatpush2.bf16.msra.mxu0 0
        %930 = vmatprep.subr.bf16.mxu0 0
        %931 = vmatpush2.bf16.msra.mxu0 0
        %932 = vmatprep.subr.bf16.mxu0 0
        %933 = vmatpush2.bf16.msra.mxu0 0
        %934 = vmatprep.subr.bf16.mxu0 0
        %935 = vmatpush2.bf16.msra.mxu0 0
        %936 = vmatprep.subr.bf16.mxu0 0
        %937 = vmatpush2.bf16.msra.mxu0 0
        %938 = vmatprep.subr.bf16.mxu0 0
        %939 = vmatpush2.bf16.msra.mxu0 0
        %940 = vmatprep.subr.bf16.mxu0 0
        %941 = vmatpush2.bf16.msra.mxu0 0
        %942 = vmatprep.mubr.bf16.mxu0 0
        %943 = vmatmul.mubr.bf16.gmra.mxu0 %v905
        %v944 = vpop.f32.mrf.mxu0
        %v945 = vadd.f32 0.0, %v944
        %v946 = vpop.f32.mrf.mxu0
        %v947 = vpop.f32.mrf.mxu0
        %v948 = vpop.f32.mrf.mxu0
        %949 = vdwg.mxu0
        %v950 = vpack.c.bf16 %v945, %v897
        %951 = vrot.lane.b32.xlu0 %v711, 124
        %v952 = vpop.permute.xlu0 %951
        %953 = vrot.lane.b32.xlu0 %v711, 92
        %v954 = vpop.permute.xlu0 %953
        %v956 = vsel %vm716, %v952, 0
        %v959 = vsel %vm716, %v954, 0
        %961 = vmatprep.subr.bf16.mxu0 0
        %962 = vmatpush1.bf16.xpose.msra.mxu0 0
        %963 = vmatprep.subr.bf16.mxu0 0
        %964 = vmatpush1.bf16.xpose.msra.mxu0 0
        %965 = vmatprep.subr.bf16.mxu0 0
        %966 = vmatpush1.bf16.xpose.msra.mxu0 0
        %967 = vmatprep.subr.bf16.mxu0 0
        %968 = vmatpush1.bf16.xpose.msra.mxu0 0
        %969 = vmatprep.subr.bf16.mxu0 0
        %970 = vmatpush1.bf16.xpose.msra.mxu0 0
        %971 = vmatprep.subr.bf16.mxu0 0
        %972 = vmatpush1.bf16.xpose.msra.mxu0 0
        %973 = vmatprep.subr.bf16.mxu0 0
        %974 = vmatpush1.bf16.xpose.msra.mxu0 0
        %975 = vmatprep.subr.bf16.mxu0 0
        %976 = vmatpush1.bf16.xpose.msra.mxu0 %v959
        %977 = vmatprep.subr.bf16.mxu0 0
        %978 = vmatpush2.bf16.xpose.msra.mxu0 0
        %979 = vmatprep.subr.bf16.mxu0 0
        %980 = vmatpush2.bf16.xpose.msra.mxu0 0
        %981 = vmatprep.subr.bf16.mxu0 0
        %982 = vmatpush2.bf16.xpose.msra.mxu0 0
        %983 = vmatprep.subr.bf16.mxu0 0
        %984 = vmatpush2.bf16.xpose.msra.mxu0 0
        %985 = vmatprep.subr.bf16.mxu0 0
        %986 = vmatpush2.bf16.xpose.msra.mxu0 0
        %987 = vmatprep.subr.bf16.mxu0 0
        %988 = vmatpush2.bf16.xpose.msra.mxu0 0
        %989 = vmatprep.subr.bf16.mxu0 0
        %990 = vmatpush2.bf16.xpose.msra.mxu0 0
        %991 = vmatprep.subr.bf16.mxu0 0
        %992 = vmatpush2.bf16.xpose.msra.mxu0 0
        %993 = vmatprep.mubr.bf16.mxu0 0
        %994 = vmatmul.mubr.bf16.gmra.mxu0 %v956
        %v995 = vpop.f32.mrf.mxu0
        %v996 = vadd.f32 0.0, %v995
        %v997 = vpop.f32.mrf.mxu0
        %v998 = vpop.f32.mrf.mxu0
        %v999 = vpop.f32.mrf.mxu0
        %1000 = vdwg.mxu0
        %1001 = vrot.lane.b32.xlu0 %v712, 124
        %v1002 = vpop.permute.xlu0 %1001
        %1003 = vrot.lane.b32.xlu0 %v712, 92
        %v1004 = vpop.permute.xlu0 %1003
        %v1006 = vsel %vm716, %v1002, 0
        %v1009 = vsel %vm716, %v1004, 0
        %1011 = vmatprep.subr.bf16.mxu0 0
        %1012 = vmatpush1.bf16.xpose.msra.mxu0 0
        %1013 = vmatprep.subr.bf16.mxu0 0
        %1014 = vmatpush1.bf16.xpose.msra.mxu0 0
        %1015 = vmatprep.subr.bf16.mxu0 0
        %1016 = vmatpush1.bf16.xpose.msra.mxu0 0
        %1017 = vmatprep.subr.bf16.mxu0 0
        %1018 = vmatpush1.bf16.xpose.msra.mxu0 0
        %1019 = vmatprep.subr.bf16.mxu0 0
        %1020 = vmatpush1.bf16.xpose.msra.mxu0 0
        %1021 = vmatprep.subr.bf16.mxu0 0
        %1022 = vmatpush1.bf16.xpose.msra.mxu0 0
        %1023 = vmatprep.subr.bf16.mxu0 0
        %1024 = vmatpush1.bf16.xpose.msra.mxu0 0
        %1025 = vmatprep.subr.bf16.mxu0 0
        %1026 = vmatpush1.bf16.xpose.msra.mxu0 %v1009
        %1027 = vmatprep.subr.bf16.mxu0 0
        %1028 = vmatpush2.bf16.xpose.msra.mxu0 0
        %1029 = vmatprep.subr.bf16.mxu0 0
        %1030 = vmatpush2.bf16.xpose.msra.mxu0 0
        %1031 = vmatprep.subr.bf16.mxu0 0
        %1032 = vmatpush2.bf16.xpose.msra.mxu0 0
        %1033 = vmatprep.subr.bf16.mxu0 0
        %1034 = vmatpush2.bf16.xpose.msra.mxu0 0
        %1035 = vmatprep.subr.bf16.mxu0 0
        %1036 = vmatpush2.bf16.xpose.msra.mxu0 0
        %1037 = vmatprep.subr.bf16.mxu0 0
        %1038 = vmatpush2.bf16.xpose.msra.mxu0 0
        %1039 = vmatprep.subr.bf16.mxu0 0
        %1040 = vmatpush2.bf16.xpose.msra.mxu0 0
        %1041 = vmatprep.subr.bf16.mxu0 0
        %1042 = vmatpush2.bf16.xpose.msra.mxu0 0
        %1043 = vmatprep.mubr.bf16.mxu0 0
        %1044 = vmatmul.mubr.bf16.gmra.mxu0 %v1006
        %v1045 = vpop.f32.mrf.mxu0
        %v1046 = vadd.f32 0.0, %v1045
        %v1047 = vpop.f32.mrf.mxu0
        %v1048 = vpop.f32.mrf.mxu0
        %v1049 = vpop.f32.mrf.mxu0
        %1050 = vdwg.mxu0
        %v1051 = vmul.f32 %v996, 0.5
        %v1052 = vmul.f32 %v1046, 0.5
        %v1053 = vadd.f32 %v1051, %v819
        %v1054 = vadd.f32 %v1052, %v823
        %v1055 = vsel %vm828, %v1053, -inf
        %1056 = vmax.xlane.f32.xlu0 %v1055
        %v1057 = vpop.xlane.xlu0 %1056
        %v1058 = vsel %vm828, %v1054, -inf
        %1059 = vmax.xlane.f32.xlu0 %v1058
        %v1060 = vpop.xlane.xlu0 %1059
        %v1061 = vsub.f32 %v1053, %v1057
        %v1062 = vsub.f32 %v1054, %v1060
        %v1063 = vmul.f32 %v1061, 1.442695
        %v1064 = vpow.pop %v1063
        %v1065 = vmul.f32 %v1062, 1.442695
        %v1066 = vpow.pop %v1065
        %v1067 = vsel %vm828, %v1064, 0.0
        %1068 = vadd.xlane.f32.xlu0 %v1067
        %v1069 = vpop.xlane.xlu0 %1068
        %v1070 = vsel %vm828, %v1066, 0.0
        %1071 = vadd.xlane.f32.xlu0 %v1070
        %v1072 = vpop.xlane.xlu0 %1071
        %v1073 = vrcp.pop %v1069
        %v1074 = vrcp.pop %v1072
        %v1075 = vmul.f32 %v1064, %v1073
        %v1076 = vmul.f32 %v1066, %v1074
        %v1077 = vpack.c.bf16 %v1075, %v1075
        %v1078 = vpack.c.bf16 %v1076, %v1076
        %1079 = vrot.lane.b32.xlu0 %v711, 60
        %v1080 = vpop.permute.xlu0 %1079
        %v1082 = vsel %vm828, %v1077, 0
        %v1085 = vsel %vm858, %v1080, 0
        %1087 = vmatprep.subr.bf16.mxu0 0
        %1088 = vmatpush1.bf16.msra.mxu0 0
        %1089 = vmatprep.subr.bf16.mxu0 0
        %1090 = vmatpush1.bf16.msra.mxu0 0
        %1091 = vmatprep.subr.bf16.mxu0 0
        %1092 = vmatpush1.bf16.msra.mxu0 0
        %1093 = vmatprep.subr.bf16.mxu0 0
        %1094 = vmatpush1.bf16.msra.mxu0 0
        %1095 = vmatprep.subr.bf16.mxu0 0
        %1096 = vmatpush1.bf16.msra.mxu0 0
        %1097 = vmatprep.subr.bf16.mxu0 0
        %1098 = vmatpush1.bf16.msra.mxu0 0
        %1099 = vmatprep.subr.bf16.mxu0 0
        %1100 = vmatpush1.bf16.msra.mxu0 0
        %1101 = vmatprep.subr.bf16.mxu0 0
        %1102 = vmatpush1.bf16.msra.mxu0 %v1085
        %1103 = vmatprep.subr.bf16.mxu0 0
        %1104 = vmatpush2.bf16.msra.mxu0 0
        %1105 = vmatprep.subr.bf16.mxu0 0
        %1106 = vmatpush2.bf16.msra.mxu0 0
        %1107 = vmatprep.subr.bf16.mxu0 0
        %1108 = vmatpush2.bf16.msra.mxu0 0
        %1109 = vmatprep.subr.bf16.mxu0 0
        %1110 = vmatpush2.bf16.msra.mxu0 0
        %1111 = vmatprep.subr.bf16.mxu0 0
        %1112 = vmatpush2.bf16.msra.mxu0 0
        %1113 = vmatprep.subr.bf16.mxu0 0
        %1114 = vmatpush2.bf16.msra.mxu0 0
        %1115 = vmatprep.subr.bf16.mxu0 0
        %1116 = vmatpush2.bf16.msra.mxu0 0
        %1117 = vmatprep.subr.bf16.mxu0 0
        %1118 = vmatpush2.bf16.msra.mxu0 0
        %1119 = vmatprep.mubr.bf16.mxu0 0
        %1120 = vmatmul.mubr.bf16.gmra.mxu0 %v1082
        %v1121 = vpop.f32.mrf.mxu0
        %v1122 = vadd.f32 0.0, %v1121
        %v1123 = vpop.f32.mrf.mxu0
        %v1124 = vpop.f32.mrf.mxu0
        %v1125 = vpop.f32.mrf.mxu0
        %1126 = vdwg.mxu0
        %1127 = vrot.lane.b32.xlu0 %v712, 60
        %v1128 = vpop.permute.xlu0 %1127
        %v1130 = vsel %vm828, %v1078, 0
        %v1133 = vsel %vm858, %v1128, 0
        %1135 = vmatprep.subr.bf16.mxu0 0
        %1136 = vmatpush1.bf16.msra.mxu0 0
        %1137 = vmatprep.subr.bf16.mxu0 0
        %1138 = vmatpush1.bf16.msra.mxu0 0
        %1139 = vmatprep.subr.bf16.mxu0 0
        %1140 = vmatpush1.bf16.msra.mxu0 0
        %1141 = vmatprep.subr.bf16.mxu0 0
        %1142 = vmatpush1.bf16.msra.mxu0 0
        %1143 = vmatprep.subr.bf16.mxu0 0
        %1144 = vmatpush1.bf16.msra.mxu0 0
        %1145 = vmatprep.subr.bf16.mxu0 0
        %1146 = vmatpush1.bf16.msra.mxu0 0
        %1147 = vmatprep.subr.bf16.mxu0 0
        %1148 = vmatpush1.bf16.msra.mxu0 0
        %1149 = vmatprep.subr.bf16.mxu0 0
        %1150 = vmatpush1.bf16.msra.mxu0 %v1133
        %1151 = vmatprep.subr.bf16.mxu0 0
        %1152 = vmatpush2.bf16.msra.mxu0 0
        %1153 = vmatprep.subr.bf16.mxu0 0
        %1154 = vmatpush2.bf16.msra.mxu0 0
        %1155 = vmatprep.subr.bf16.mxu0 0
        %1156 = vmatpush2.bf16.msra.mxu0 0
        %1157 = vmatprep.subr.bf16.mxu0 0
        %1158 = vmatpush2.bf16.msra.mxu0 0
        %1159 = vmatprep.subr.bf16.mxu0 0
        %1160 = vmatpush2.bf16.msra.mxu0 0
        %1161 = vmatprep.subr.bf16.mxu0 0
        %1162 = vmatpush2.bf16.msra.mxu0 0
        %1163 = vmatprep.subr.bf16.mxu0 0
        %1164 = vmatpush2.bf16.msra.mxu0 0
        %1165 = vmatprep.subr.bf16.mxu0 0
        %1166 = vmatpush2.bf16.msra.mxu0 0
        %1167 = vmatprep.mubr.bf16.mxu0 0
        %1168 = vmatmul.mubr.bf16.gmra.mxu0 %v1130
        %v1169 = vpop.f32.mrf.mxu0
        %v1170 = vadd.f32 0.0, %v1169
        %v1171 = vpop.f32.mrf.mxu0
        %v1172 = vpop.f32.mrf.mxu0
        %v1173 = vpop.f32.mrf.mxu0
        %1174 = vdwg.mxu0
        %v1175 = vpack.c.bf16 %v1170, %v1122
        %v1177 = vunpack.c.l.b16 %v707
        %v1178 = vpack.c.b16 %v1177, %v1177
        %v1179 = vrot.slane %v1178, 2
        %v1181 = vsel %vm716, %v1175, 0
        %vm1183 = vcmask 1041408
        %v1185 = vsel %vm1183, %v1179, 0
        %1187 = vmatprep.subr.bf16.mxu0 0
        %1188 = vmatpush1.bf16.msra.mxu0 0
        %1189 = vmatprep.subr.bf16.mxu0 0
        %1190 = vmatpush1.bf16.msra.mxu0 0
        %1191 = vmatprep.subr.bf16.mxu0 0
        %1192 = vmatpush1.bf16.msra.mxu0 0
        %1193 = vmatprep.subr.bf16.mxu0 0
        %1194 = vmatpush1.bf16.msra.mxu0 0
        %1195 = vmatprep.subr.bf16.mxu0 0
        %1196 = vmatpush1.bf16.msra.mxu0 0
        %1197 = vmatprep.subr.bf16.mxu0 0
        %1198 = vmatpush1.bf16.msra.mxu0 0
        %1199 = vmatprep.subr.bf16.mxu0 0
        %1200 = vmatpush1.bf16.msra.mxu0 0
        %1201 = vmatprep.subr.bf16.mxu0 0
        %1202 = vmatpush1.bf16.msra.mxu0 %v1185
        %1203 = vmatprep.subr.bf16.mxu0 0
        %1204 = vmatpush2.bf16.msra.mxu0 0
        %1205 = vmatprep.subr.bf16.mxu0 0
        %1206 = vmatpush2.bf16.msra.mxu0 0
        %1207 = vmatprep.subr.bf16.mxu0 0
        %1208 = vmatpush2.bf16.msra.mxu0 0
        %1209 = vmatprep.subr.bf16.mxu0 0
        %1210 = vmatpush2.bf16.msra.mxu0 0
        %1211 = vmatprep.subr.bf16.mxu0 0
        %1212 = vmatpush2.bf16.msra.mxu0 0
        %1213 = vmatprep.subr.bf16.mxu0 0
        %1214 = vmatpush2.bf16.msra.mxu0 0
        %1215 = vmatprep.subr.bf16.mxu0 0
        %1216 = vmatpush2.bf16.msra.mxu0 0
        %1217 = vmatprep.subr.bf16.mxu0 0
        %1218 = vmatpush2.bf16.msra.mxu0 0
        %1219 = vmatprep.mubr.bf16.mxu0 0
        %1220 = vmatmul.mubr.bf16.gmra.mxu0 %v1181
        %v1221 = vpop.f32.mrf.mxu0
        %v1222 = vadd.f32 0.0, %v1221
        %v1223 = vpop.f32.mrf.mxu0
        %v1224 = vpop.f32.mrf.mxu0
        %v1225 = vadd.f32 0.0, %v1224
        %v1226 = vpop.f32.mrf.mxu0
        %1227 = vdwg.mxu0
        %v1229 = vsel %vm716, %v950, 0
        %v1232 = vsel %vm1183, %v707, 0
        %1234 = vmatprep.subr.bf16.mxu0 0
        %1235 = vmatpush1.bf16.msra.mxu0 0
        %1236 = vmatprep.subr.bf16.mxu0 0
        %1237 = vmatpush1.bf16.msra.mxu0 0
        %1238 = vmatprep.subr.bf16.mxu0 0
        %1239 = vmatpush1.bf16.msra.mxu0 0
        %1240 = vmatprep.subr.bf16.mxu0 0
        %1241 = vmatpush1.bf16.msra.mxu0 0
        %1242 = vmatprep.subr.bf16.mxu0 0
        %1243 = vmatpush1.bf16.msra.mxu0 0
        %1244 = vmatprep.subr.bf16.mxu0 0
        %1245 = vmatpush1.bf16.msra.mxu0 0
        %1246 = vmatprep.subr.bf16.mxu0 0
        %1247 = vmatpush1.bf16.msra.mxu0 0
        %1248 = vmatprep.subr.bf16.mxu0 0
        %1249 = vmatpush1.bf16.msra.mxu0 %v1232
        %1250 = vmatprep.subr.bf16.mxu0 0
        %1251 = vmatpush2.bf16.msra.mxu0 0
        %1252 = vmatprep.subr.bf16.mxu0 0
        %1253 = vmatpush2.bf16.msra.mxu0 0
        %1254 = vmatprep.subr.bf16.mxu0 0
        %1255 = vmatpush2.bf16.msra.mxu0 0
        %1256 = vmatprep.subr.bf16.mxu0 0
        %1257 = vmatpush2.bf16.msra.mxu0 0
        %1258 = vmatprep.subr.bf16.mxu0 0
        %1259 = vmatpush2.bf16.msra.mxu0 0
        %1260 = vmatprep.subr.bf16.mxu0 0
        %1261 = vmatpush2.bf16.msra.mxu0 0
        %1262 = vmatprep.subr.bf16.mxu0 0
        %1263 = vmatpush2.bf16.msra.mxu0 0
        %1264 = vmatprep.subr.bf16.mxu0 0
        %1265 = vmatpush2.bf16.msra.mxu0 0
        %1266 = vmatprep.mubr.bf16.mxu0 0
        %1267 = vmatmul.mubr.bf16.gmra.mxu0 %v1229
        %v1268 = vpop.f32.mrf.mxu0
        %v1269 = vadd.f32 %v1222, %v1268
        %v1270 = vpop.f32.mrf.mxu0
        %v1271 = vpop.f32.mrf.mxu0
        %v1272 = vadd.f32 %v1225, %v1271
        %v1273 = vpop.f32.mrf.mxu0
        %1274 = vdwg.mxu0
        %1275 = vrot.lane.b32.xlu0 %v711, 120
        %v1276 = vpop.permute.xlu0 %1275
        %1277 = vrot.lane.b32.xlu0 %v711, 88
        %v1278 = vpop.permute.xlu0 %1277
        %v1280 = vsel %vm716, %v1276, 0
        %v1283 = vsel %vm716, %v1278, 0
        %1285 = vmatprep.subr.bf16.mxu0 0
        %1286 = vmatpush1.bf16.xpose.msra.mxu0 0
        %1287 = vmatprep.subr.bf16.mxu0 0
        %1288 = vmatpush1.bf16.xpose.msra.mxu0 0
        %1289 = vmatprep.subr.bf16.mxu0 0
        %1290 = vmatpush1.bf16.xpose.msra.mxu0 0
        %1291 = vmatprep.subr.bf16.mxu0 0
        %1292 = vmatpush1.bf16.xpose.msra.mxu0 0
        %1293 = vmatprep.subr.bf16.mxu0 0
        %1294 = vmatpush1.bf16.xpose.msra.mxu0 0
        %1295 = vmatprep.subr.bf16.mxu0 0
        %1296 = vmatpush1.bf16.xpose.msra.mxu0 0
        %1297 = vmatprep.subr.bf16.mxu0 0
        %1298 = vmatpush1.bf16.xpose.msra.mxu0 0
        %1299 = vmatprep.subr.bf16.mxu0 0
        %1300 = vmatpush1.bf16.xpose.msra.mxu0 %v1283
        %1301 = vmatprep.subr.bf16.mxu0 0
        %1302 = vmatpush2.bf16.xpose.msra.mxu0 0
        %1303 = vmatprep.subr.bf16.mxu0 0
        %1304 = vmatpush2.bf16.xpose.msra.mxu0 0
        %1305 = vmatprep.subr.bf16.mxu0 0
        %1306 = vmatpush2.bf16.xpose.msra.mxu0 0
        %1307 = vmatprep.subr.bf16.mxu0 0
        %1308 = vmatpush2.bf16.xpose.msra.mxu0 0
        %1309 = vmatprep.subr.bf16.mxu0 0
        %1310 = vmatpush2.bf16.xpose.msra.mxu0 0
        %1311 = vmatprep.subr.bf16.mxu0 0
        %1312 = vmatpush2.bf16.xpose.msra.mxu0 0
        %1313 = vmatprep.subr.bf16.mxu0 0
        %1314 = vmatpush2.bf16.xpose.msra.mxu0 0
        %1315 = vmatprep.subr.bf16.mxu0 0
        %1316 = vmatpush2.bf16.xpose.msra.mxu0 0
        %1317 = vmatprep.mubr.bf16.mxu0 0
        %1318 = vmatmul.mubr.bf16.gmra.mxu0 %v1280
        %v1319 = vpop.f32.mrf.mxu0
        %v1320 = vadd.f32 0.0, %v1319
        %v1321 = vpop.f32.mrf.mxu0
        %v1322 = vpop.f32.mrf.mxu0
        %v1323 = vpop.f32.mrf.mxu0
        %1324 = vdwg.mxu0
        %1325 = vrot.lane.b32.xlu0 %v712, 120
        %v1326 = vpop.permute.xlu0 %1325
        %1327 = vrot.lane.b32.xlu0 %v712, 88
        %v1328 = vpop.permute.xlu0 %1327
        %v1330 = vsel %vm716, %v1326, 0
        %v1333 = vsel %vm716, %v1328, 0
        %1335 = vmatprep.subr.bf16.mxu0 0
        %1336 = vmatpush1.bf16.xpose.msra.mxu0 0
        %1337 = vmatprep.subr.bf16.mxu0 0
        %1338 = vmatpush1.bf16.xpose.msra.mxu0 0
        %1339 = vmatprep.subr.bf16.mxu0 0
        %1340 = vmatpush1.bf16.xpose.msra.mxu0 0
        %1341 = vmatprep.subr.bf16.mxu0 0
        %1342 = vmatpush1.bf16.xpose.msra.mxu0 0
        %1343 = vmatprep.subr.bf16.mxu0 0
        %1344 = vmatpush1.bf16.xpose.msra.mxu0 0
        %1345 = vmatprep.subr.bf16.mxu0 0
        %1346 = vmatpush1.bf16.xpose.msra.mxu0 0
        %1347 = vmatprep.subr.bf16.mxu0 0
        %1348 = vmatpush1.bf16.xpose.msra.mxu0 0
        %1349 = vmatprep.subr.bf16.mxu0 0
        %1350 = vmatpush1.bf16.xpose.msra.mxu0 %v1333
        %1351 = vmatprep.subr.bf16.mxu0 0
        %1352 = vmatpush2.bf16.xpose.msra.mxu0 0
        %1353 = vmatprep.subr.bf16.mxu0 0
        %1354 = vmatpush2.bf16.xpose.msra.mxu0 0
        %1355 = vmatprep.subr.bf16.mxu0 0
        %1356 = vmatpush2.bf16.xpose.msra.mxu0 0
        %1357 = vmatprep.subr.bf16.mxu0 0
        %1358 = vmatpush2.bf16.xpose.msra.mxu0 0
        %1359 = vmatprep.subr.bf16.mxu0 0
        %1360 = vmatpush2.bf16.xpose.msra.mxu0 0
        %1361 = vmatprep.subr.bf16.mxu0 0
        %1362 = vmatpush2.bf16.xpose.msra.mxu0 0
        %1363 = vmatprep.subr.bf16.mxu0 0
        %1364 = vmatpush2.bf16.xpose.msra.mxu0 0
        %1365 = vmatprep.subr.bf16.mxu0 0
        %1366 = vmatpush2.bf16.xpose.msra.mxu0 0
        %1367 = vmatprep.mubr.bf16.mxu0 0
        %1368 = vmatmul.mubr.bf16.gmra.mxu0 %v1330
        %v1369 = vpop.f32.mrf.mxu0
        %v1370 = vadd.f32 0.0, %v1369
        %v1371 = vpop.f32.mrf.mxu0
        %v1372 = vpop.f32.mrf.mxu0
        %v1373 = vpop.f32.mrf.mxu0
        %1374 = vdwg.mxu0
        %v1375 = vmul.f32 %v1320, 0.5
        %v1376 = vmul.f32 %v1370, 0.5
        %v1377 = vadd.f32 %v1375, %v819
        %v1378 = vadd.f32 %v1376, %v823
        %v1379 = vsel %vm828, %v1377, -inf
        %1380 = vmax.xlane.f32.xlu0 %v1379
        %v1381 = vpop.xlane.xlu0 %1380
        %v1382 = vsel %vm828, %v1378, -inf
        %1383 = vmax.xlane.f32.xlu0 %v1382
        %v1384 = vpop.xlane.xlu0 %1383
        %v1385 = vsub.f32 %v1377, %v1381
        %v1386 = vsub.f32 %v1378, %v1384
        %v1387 = vmul.f32 %v1385, 1.442695
        %v1388 = vpow.pop %v1387
        %v1389 = vmul.f32 %v1386, 1.442695
        %v1390 = vpow.pop %v1389
        %v1391 = vsel %vm828, %v1388, 0.0
        %1392 = vadd.xlane.f32.xlu0 %v1391
        %v1393 = vpop.xlane.xlu0 %1392
        %v1394 = vsel %vm828, %v1390, 0.0
        %1395 = vadd.xlane.f32.xlu0 %v1394
        %v1396 = vpop.xlane.xlu0 %1395
        %v1397 = vrcp.pop %v1393
        %v1398 = vrcp.pop %v1396
        %v1399 = vmul.f32 %v1388, %v1397
        %v1400 = vmul.f32 %v1390, %v1398
        %v1401 = vpack.c.bf16 %v1399, %v1399
        %v1402 = vpack.c.bf16 %v1400, %v1400
        %1403 = vrot.lane.b32.xlu0 %v711, 56
        %v1404 = vpop.permute.xlu0 %1403
        %v1406 = vsel %vm828, %v1401, 0
        %v1409 = vsel %vm858, %v1404, 0
        %1411 = vmatprep.subr.bf16.mxu0 0
        %1412 = vmatpush1.bf16.msra.mxu0 0
        %1413 = vmatprep.subr.bf16.mxu0 0
        %1414 = vmatpush1.bf16.msra.mxu0 0
        %1415 = vmatprep.subr.bf16.mxu0 0
        %1416 = vmatpush1.bf16.msra.mxu0 0
        %1417 = vmatprep.subr.bf16.mxu0 0
        %1418 = vmatpush1.bf16.msra.mxu0 0
        %1419 = vmatprep.subr.bf16.mxu0 0
        %1420 = vmatpush1.bf16.msra.mxu0 0
        %1421 = vmatprep.subr.bf16.mxu0 0
        %1422 = vmatpush1.bf16.msra.mxu0 0
        %1423 = vmatprep.subr.bf16.mxu0 0
        %1424 = vmatpush1.bf16.msra.mxu0 0
        %1425 = vmatprep.subr.bf16.mxu0 0
        %1426 = vmatpush1.bf16.msra.mxu0 %v1409
        %1427 = vmatprep.subr.bf16.mxu0 0
        %1428 = vmatpush2.bf16.msra.mxu0 0
        %1429 = vmatprep.subr.bf16.mxu0 0
        %1430 = vmatpush2.bf16.msra.mxu0 0
        %1431 = vmatprep.subr.bf16.mxu0 0
        %1432 = vmatpush2.bf16.msra.mxu0 0
        %1433 = vmatprep.subr.bf16.mxu0 0
        %1434 = vmatpush2.bf16.msra.mxu0 0
        %1435 = vmatprep.subr.bf16.mxu0 0
        %1436 = vmatpush2.bf16.msra.mxu0 0
        %1437 = vmatprep.subr.bf16.mxu0 0
        %1438 = vmatpush2.bf16.msra.mxu0 0
        %1439 = vmatprep.subr.bf16.mxu0 0
        %1440 = vmatpush2.bf16.msra.mxu0 0
        %1441 = vmatprep.subr.bf16.mxu0 0
        %1442 = vmatpush2.bf16.msra.mxu0 0
        %1443 = vmatprep.mubr.bf16.mxu0 0
        %1444 = vmatmul.mubr.bf16.gmra.mxu0 %v1406
        %v1445 = vpop.f32.mrf.mxu0
        %v1446 = vadd.f32 0.0, %v1445
        %v1447 = vpop.f32.mrf.mxu0
        %v1448 = vpop.f32.mrf.mxu0
        %v1449 = vpop.f32.mrf.mxu0
        %1450 = vdwg.mxu0
        %1451 = vrot.lane.b32.xlu0 %v712, 56
        %v1452 = vpop.permute.xlu0 %1451
        %v1454 = vsel %vm828, %v1402, 0
        %v1457 = vsel %vm858, %v1452, 0
        %1459 = vmatprep.subr.bf16.mxu0 0
        %1460 = vmatpush1.bf16.msra.mxu0 0
        %1461 = vmatprep.subr.bf16.mxu0 0
        %1462 = vmatpush1.bf16.msra.mxu0 0
        %1463 = vmatprep.subr.bf16.mxu0 0
        %1464 = vmatpush1.bf16.msra.mxu0 0
        %1465 = vmatprep.subr.bf16.mxu0 0
        %1466 = vmatpush1.bf16.msra.mxu0 0
        %1467 = vmatprep.subr.bf16.mxu0 0
        %1468 = vmatpush1.bf16.msra.mxu0 0
        %1469 = vmatprep.subr.bf16.mxu0 0
        %1470 = vmatpush1.bf16.msra.mxu0 0
        %1471 = vmatprep.subr.bf16.mxu0 0
        %1472 = vmatpush1.bf16.msra.mxu0 0
        %1473 = vmatprep.subr.bf16.mxu0 0
        %1474 = vmatpush1.bf16.msra.mxu0 %v1457
        %1475 = vmatprep.subr.bf16.mxu0 0
        %1476 = vmatpush2.bf16.msra.mxu0 0
        %1477 = vmatprep.subr.bf16.mxu0 0
        %1478 = vmatpush2.bf16.msra.mxu0 0
        %1479 = vmatprep.subr.bf16.mxu0 0
        %1480 = vmatpush2.bf16.msra.mxu0 0
        %1481 = vmatprep.subr.bf16.mxu0 0
        %1482 = vmatpush2.bf16.msra.mxu0 0
        %1483 = vmatprep.subr.bf16.mxu0 0
        %1484 = vmatpush2.bf16.msra.mxu0 0
        %1485 = vmatprep.subr.bf16.mxu0 0
        %1486 = vmatpush2.bf16.msra.mxu0 0
        %1487 = vmatprep.subr.bf16.mxu0 0
        %1488 = vmatpush2.bf16.msra.mxu0 0
        %1489 = vmatprep.subr.bf16.mxu0 0
        %1490 = vmatpush2.bf16.msra.mxu0 0
        %1491 = vmatprep.mubr.bf16.mxu0 0
        %1492 = vmatmul.mubr.bf16.gmra.mxu0 %v1454
        %v1493 = vpop.f32.mrf.mxu0
        %v1494 = vadd.f32 0.0, %v1493
        %v1495 = vpop.f32.mrf.mxu0
        %v1496 = vpop.f32.mrf.mxu0
        %v1497 = vpop.f32.mrf.mxu0
        %1498 = vdwg.mxu0
        %v1499 = vpack.c.bf16 %v1494, %v1446
        %v1501 = vsel %vm716, %v1499, 0
        %v1504 = vsel %vm1183, %v708, 0
        %1506 = vmatprep.subr.bf16.mxu0 0
        %1507 = vmatpush1.bf16.msra.mxu0 0
        %1508 = vmatprep.subr.bf16.mxu0 0
        %1509 = vmatpush1.bf16.msra.mxu0 0
        %1510 = vmatprep.subr.bf16.mxu0 0
        %1511 = vmatpush1.bf16.msra.mxu0 0
        %1512 = vmatprep.subr.bf16.mxu0 0
        %1513 = vmatpush1.bf16.msra.mxu0 0
        %1514 = vmatprep.subr.bf16.mxu0 0
        %1515 = vmatpush1.bf16.msra.mxu0 0
        %1516 = vmatprep.subr.bf16.mxu0 0
        %1517 = vmatpush1.bf16.msra.mxu0 0
        %1518 = vmatprep.subr.bf16.mxu0 0
        %1519 = vmatpush1.bf16.msra.mxu0 0
        %1520 = vmatprep.subr.bf16.mxu0 0
        %1521 = vmatpush1.bf16.msra.mxu0 %v1504
        %1522 = vmatprep.subr.bf16.mxu0 0
        %1523 = vmatpush2.bf16.msra.mxu0 0
        %1524 = vmatprep.subr.bf16.mxu0 0
        %1525 = vmatpush2.bf16.msra.mxu0 0
        %1526 = vmatprep.subr.bf16.mxu0 0
        %1527 = vmatpush2.bf16.msra.mxu0 0
        %1528 = vmatprep.subr.bf16.mxu0 0
        %1529 = vmatpush2.bf16.msra.mxu0 0
        %1530 = vmatprep.subr.bf16.mxu0 0
        %1531 = vmatpush2.bf16.msra.mxu0 0
        %1532 = vmatprep.subr.bf16.mxu0 0
        %1533 = vmatpush2.bf16.msra.mxu0 0
        %1534 = vmatprep.subr.bf16.mxu0 0
        %1535 = vmatpush2.bf16.msra.mxu0 0
        %1536 = vmatprep.subr.bf16.mxu0 0
        %1537 = vmatpush2.bf16.msra.mxu0 0
        %1538 = vmatprep.mubr.bf16.mxu0 0
        %1539 = vmatmul.mubr.bf16.gmra.mxu0 %v1501
        %v1540 = vpop.f32.mrf.mxu0
        %v1541 = vadd.f32 0.0, %v1540
        %v1542 = vpop.f32.mrf.mxu0
        %v1543 = vpop.f32.mrf.mxu0
        %v1544 = vadd.f32 0.0, %v1543
        %v1545 = vpop.f32.mrf.mxu0
        %1546 = vdwg.mxu0
        %v1547 = vadd.f32 %v1269, %v1541
        %v1548 = vadd.f32 %v1272, %v1544
        %1549 = vrot.lane.b32.xlu0 %v711, 116
        %v1550 = vpop.permute.xlu0 %1549
        %1551 = vrot.lane.b32.xlu0 %v711, 84
        %v1552 = vpop.permute.xlu0 %1551
        %v1554 = vsel %vm716, %v1550, 0
        %v1557 = vsel %vm716, %v1552, 0
        %1559 = vmatprep.subr.bf16.mxu0 0
        %1560 = vmatpush1.bf16.xpose.msra.mxu0 0
        %1561 = vmatprep.subr.bf16.mxu0 0
        %1562 = vmatpush1.bf16.xpose.msra.mxu0 0
        %1563 = vmatprep.subr.bf16.mxu0 0
        %1564 = vmatpush1.bf16.xpose.msra.mxu0 0
        %1565 = vmatprep.subr.bf16.mxu0 0
        %1566 = vmatpush1.bf16.xpose.msra.mxu0 0
        %1567 = vmatprep.subr.bf16.mxu0 0
        %1568 = vmatpush1.bf16.xpose.msra.mxu0 0
        %1569 = vmatprep.subr.bf16.mxu0 0
        %1570 = vmatpush1.bf16.xpose.msra.mxu0 0
        %1571 = vmatprep.subr.bf16.mxu0 0
        %1572 = vmatpush1.bf16.xpose.msra.mxu0 0
        %1573 = vmatprep.subr.bf16.mxu0 0
        %1574 = vmatpush1.bf16.xpose.msra.mxu0 %v1557
        %1575 = vmatprep.subr.bf16.mxu0 0
        %1576 = vmatpush2.bf16.xpose.msra.mxu0 0
        %1577 = vmatprep.subr.bf16.mxu0 0
        %1578 = vmatpush2.bf16.xpose.msra.mxu0 0
        %1579 = vmatprep.subr.bf16.mxu0 0
        %1580 = vmatpush2.bf16.xpose.msra.mxu0 0
        %1581 = vmatprep.subr.bf16.mxu0 0
        %1582 = vmatpush2.bf16.xpose.msra.mxu0 0
        %1583 = vmatprep.subr.bf16.mxu0 0
        %1584 = vmatpush2.bf16.xpose.msra.mxu0 0
        %1585 = vmatprep.subr.bf16.mxu0 0
        %1586 = vmatpush2.bf16.xpose.msra.mxu0 0
        %1587 = vmatprep.subr.bf16.mxu0 0
        %1588 = vmatpush2.bf16.xpose.msra.mxu0 0
        %1589 = vmatprep.subr.bf16.mxu0 0
        %1590 = vmatpush2.bf16.xpose.msra.mxu0 0
        %1591 = vmatprep.mubr.bf16.mxu0 0
        %1592 = vmatmul.mubr.bf16.gmra.mxu0 %v1554
        %v1593 = vpop.f32.mrf.mxu0
        %v1594 = vadd.f32 0.0, %v1593
        %v1595 = vpop.f32.mrf.mxu0
        %v1596 = vpop.f32.mrf.mxu0
        %v1597 = vpop.f32.mrf.mxu0
        %1598 = vdwg.mxu0
        %1599 = vrot.lane.b32.xlu0 %v712, 116
        %v1600 = vpop.permute.xlu0 %1599
        %1601 = vrot.lane.b32.xlu0 %v712, 84
        %v1602 = vpop.permute.xlu0 %1601
        %v1604 = vsel %vm716, %v1600, 0
        %v1607 = vsel %vm716, %v1602, 0
        %1609 = vmatprep.subr.bf16.mxu0 0
        %1610 = vmatpush1.bf16.xpose.msra.mxu0 0
        %1611 = vmatprep.subr.bf16.mxu0 0
        %1612 = vmatpush1.bf16.xpose.msra.mxu0 0
        %1613 = vmatprep.subr.bf16.mxu0 0
        %1614 = vmatpush1.bf16.xpose.msra.mxu0 0
        %1615 = vmatprep.subr.bf16.mxu0 0
        %1616 = vmatpush1.bf16.xpose.msra.mxu0 0
        %1617 = vmatprep.subr.bf16.mxu0 0
        %1618 = vmatpush1.bf16.xpose.msra.mxu0 0
        %1619 = vmatprep.subr.bf16.mxu0 0
        %1620 = vmatpush1.bf16.xpose.msra.mxu0 0
        %1621 = vmatprep.subr.bf16.mxu0 0
        %1622 = vmatpush1.bf16.xpose.msra.mxu0 0
        %1623 = vmatprep.subr.bf16.mxu0 0
        %1624 = vmatpush1.bf16.xpose.msra.mxu0 %v1607
        %1625 = vmatprep.subr.bf16.mxu0 0
        %1626 = vmatpush2.bf16.xpose.msra.mxu0 0
        %1627 = vmatprep.subr.bf16.mxu0 0
        %1628 = vmatpush2.bf16.xpose.msra.mxu0 0
        %1629 = vmatprep.subr.bf16.mxu0 0
        %1630 = vmatpush2.bf16.xpose.msra.mxu0 0
        %1631 = vmatprep.subr.bf16.mxu0 0
        %1632 = vmatpush2.bf16.xpose.msra.mxu0 0
        %1633 = vmatprep.subr.bf16.mxu0 0
        %1634 = vmatpush2.bf16.xpose.msra.mxu0 0
        %1635 = vmatprep.subr.bf16.mxu0 0
        %1636 = vmatpush2.bf16.xpose.msra.mxu0 0
        %1637 = vmatprep.subr.bf16.mxu0 0
        %1638 = vmatpush2.bf16.xpose.msra.mxu0 0
        %1639 = vmatprep.subr.bf16.mxu0 0
        %1640 = vmatpush2.bf16.xpose.msra.mxu0 0
        %1641 = vmatprep.mubr.bf16.mxu0 0
        %1642 = vmatmul.mubr.bf16.gmra.mxu0 %v1604
        %v1643 = vpop.f32.mrf.mxu0
        %v1644 = vadd.f32 0.0, %v1643
        %v1645 = vpop.f32.mrf.mxu0
        %v1646 = vpop.f32.mrf.mxu0
        %v1647 = vpop.f32.mrf.mxu0
        %1648 = vdwg.mxu0
        %v1649 = vmul.f32 %v1594, 0.5
        %v1650 = vmul.f32 %v1644, 0.5
        %v1651 = vadd.f32 %v1649, %v819
        %v1652 = vadd.f32 %v1650, %v823
        %v1653 = vsel %vm828, %v1651, -inf
        %1654 = vmax.xlane.f32.xlu0 %v1653
        %v1655 = vpop.xlane.xlu0 %1654
        %v1656 = vsel %vm828, %v1652, -inf
        %1657 = vmax.xlane.f32.xlu0 %v1656
        %v1658 = vpop.xlane.xlu0 %1657
        %v1659 = vsub.f32 %v1651, %v1655
        %v1660 = vsub.f32 %v1652, %v1658
        %v1661 = vmul.f32 %v1659, 1.442695
        %v1662 = vpow.pop %v1661
        %v1663 = vmul.f32 %v1660, 1.442695
        %v1664 = vpow.pop %v1663
        %v1665 = vsel %vm828, %v1662, 0.0
        %1666 = vadd.xlane.f32.xlu0 %v1665
        %v1667 = vpop.xlane.xlu0 %1666
        %v1668 = vsel %vm828, %v1664, 0.0
        %1669 = vadd.xlane.f32.xlu0 %v1668
        %v1670 = vpop.xlane.xlu0 %1669
        %v1671 = vrcp.pop %v1667
        %v1672 = vrcp.pop %v1670
        %v1673 = vmul.f32 %v1662, %v1671
        %v1674 = vmul.f32 %v1664, %v1672
        %v1675 = vpack.c.bf16 %v1673, %v1673
        %v1676 = vpack.c.bf16 %v1674, %v1674
        %1677 = vrot.lane.b32.xlu0 %v711, 52
        %v1678 = vpop.permute.xlu0 %1677
        %v1680 = vsel %vm828, %v1675, 0
        %v1683 = vsel %vm858, %v1678, 0
        %1685 = vmatprep.subr.bf16.mxu0 0
        %1686 = vmatpush1.bf16.msra.mxu0 0
        %1687 = vmatprep.subr.bf16.mxu0 0
        %1688 = vmatpush1.bf16.msra.mxu0 0
        %1689 = vmatprep.subr.bf16.mxu0 0
        %1690 = vmatpush1.bf16.msra.mxu0 0
        %1691 = vmatprep.subr.bf16.mxu0 0
        %1692 = vmatpush1.bf16.msra.mxu0 0
        %1693 = vmatprep.subr.bf16.mxu0 0
        %1694 = vmatpush1.bf16.msra.mxu0 0
        %1695 = vmatprep.subr.bf16.mxu0 0
        %1696 = vmatpush1.bf16.msra.mxu0 0
        %1697 = vmatprep.subr.bf16.mxu0 0
        %1698 = vmatpush1.bf16.msra.mxu0 0
        %1699 = vmatprep.subr.bf16.mxu0 0
        %1700 = vmatpush1.bf16.msra.mxu0 %v1683
        %1701 = vmatprep.subr.bf16.mxu0 0
        %1702 = vmatpush2.bf16.msra.mxu0 0
        %1703 = vmatprep.subr.bf16.mxu0 0
        %1704 = vmatpush2.bf16.msra.mxu0 0
        %1705 = vmatprep.subr.bf16.mxu0 0
        %1706 = vmatpush2.bf16.msra.mxu0 0
        %1707 = vmatprep.subr.bf16.mxu0 0
        %1708 = vmatpush2.bf16.msra.mxu0 0
        %1709 = vmatprep.subr.bf16.mxu0 0
        %1710 = vmatpush2.bf16.msra.mxu0 0
        %1711 = vmatprep.subr.bf16.mxu0 0
        %1712 = vmatpush2.bf16.msra.mxu0 0
        %1713 = vmatprep.subr.bf16.mxu0 0
        %1714 = vmatpush2.bf16.msra.mxu0 0
        %1715 = vmatprep.subr.bf16.mxu0 0
        %1716 = vmatpush2.bf16.msra.mxu0 0
        %1717 = vmatprep.mubr.bf16.mxu0 0
        %1718 = vmatmul.mubr.bf16.gmra.mxu0 %v1680
        %v1719 = vpop.f32.mrf.mxu0
        %v1720 = vadd.f32 0.0, %v1719
        %v1721 = vpop.f32.mrf.mxu0
        %v1722 = vpop.f32.mrf.mxu0
        %v1723 = vpop.f32.mrf.mxu0
        %1724 = vdwg.mxu0
        %1725 = vrot.lane.b32.xlu0 %v712, 52
        %v1726 = vpop.permute.xlu0 %1725
        %v1728 = vsel %vm828, %v1676, 0
        %v1731 = vsel %vm858, %v1726, 0
        %1733 = vmatprep.subr.bf16.mxu0 0
        %1734 = vmatpush1.bf16.msra.mxu0 0
        %1735 = vmatprep.subr.bf16.mxu0 0
        %1736 = vmatpush1.bf16.msra.mxu0 0
        %1737 = vmatprep.subr.bf16.mxu0 0
        %1738 = vmatpush1.bf16.msra.mxu0 0
        %1739 = vmatprep.subr.bf16.mxu0 0
        %1740 = vmatpush1.bf16.msra.mxu0 0
        %1741 = vmatprep.subr.bf16.mxu0 0
        %1742 = vmatpush1.bf16.msra.mxu0 0
        %1743 = vmatprep.subr.bf16.mxu0 0
        %1744 = vmatpush1.bf16.msra.mxu0 0
        %1745 = vmatprep.subr.bf16.mxu0 0
        %1746 = vmatpush1.bf16.msra.mxu0 0
        %1747 = vmatprep.subr.bf16.mxu0 0
        %1748 = vmatpush1.bf16.msra.mxu0 %v1731
        %1749 = vmatprep.subr.bf16.mxu0 0
        %1750 = vmatpush2.bf16.msra.mxu0 0
        %1751 = vmatprep.subr.bf16.mxu0 0
        %1752 = vmatpush2.bf16.msra.mxu0 0
        %1753 = vmatprep.subr.bf16.mxu0 0
        %1754 = vmatpush2.bf16.msra.mxu0 0
        %1755 = vmatprep.subr.bf16.mxu0 0
        %1756 = vmatpush2.bf16.msra.mxu0 0
        %1757 = vmatprep.subr.bf16.mxu0 0
        %1758 = vmatpush2.bf16.msra.mxu0 0
        %1759 = vmatprep.subr.bf16.mxu0 0
        %1760 = vmatpush2.bf16.msra.mxu0 0
        %1761 = vmatprep.subr.bf16.mxu0 0
        %1762 = vmatpush2.bf16.msra.mxu0 0
        %1763 = vmatprep.subr.bf16.mxu0 0
        %1764 = vmatpush2.bf16.msra.mxu0 0
        %1765 = vmatprep.mubr.bf16.mxu0 0
        %1766 = vmatmul.mubr.bf16.gmra.mxu0 %v1728
        %v1767 = vpop.f32.mrf.mxu0
        %v1768 = vadd.f32 0.0, %v1767
        %v1769 = vpop.f32.mrf.mxu0
        %v1770 = vpop.f32.mrf.mxu0
        %v1771 = vpop.f32.mrf.mxu0
        %1772 = vdwg.mxu0
        %v1773 = vpack.c.bf16 %v1768, %v1720
        %v1775 = vunpack.c.l.b16 %v708
        %v1776 = vpack.c.b16 %v1775, %v1775
        %v1777 = vrot.slane %v1776, 2
        %v1779 = vsel %vm716, %v1773, 0
        %v1782 = vsel %vm1183, %v1777, 0
        %1784 = vmatprep.subr.bf16.mxu0 0
        %1785 = vmatpush1.bf16.msra.mxu0 0
        %1786 = vmatprep.subr.bf16.mxu0 0
        %1787 = vmatpush1.bf16.msra.mxu0 0
        %1788 = vmatprep.subr.bf16.mxu0 0
        %1789 = vmatpush1.bf16.msra.mxu0 0
        %1790 = vmatprep.subr.bf16.mxu0 0
        %1791 = vmatpush1.bf16.msra.mxu0 0
        %1792 = vmatprep.subr.bf16.mxu0 0
        %1793 = vmatpush1.bf16.msra.mxu0 0
        %1794 = vmatprep.subr.bf16.mxu0 0
        %1795 = vmatpush1.bf16.msra.mxu0 0
        %1796 = vmatprep.subr.bf16.mxu0 0
        %1797 = vmatpush1.bf16.msra.mxu0 0
        %1798 = vmatprep.subr.bf16.mxu0 0
        %1799 = vmatpush1.bf16.msra.mxu0 %v1782
        %1800 = vmatprep.subr.bf16.mxu0 0
        %1801 = vmatpush2.bf16.msra.mxu0 0
        %1802 = vmatprep.subr.bf16.mxu0 0
        %1803 = vmatpush2.bf16.msra.mxu0 0
        %1804 = vmatprep.subr.bf16.mxu0 0
        %1805 = vmatpush2.bf16.msra.mxu0 0
        %1806 = vmatprep.subr.bf16.mxu0 0
        %1807 = vmatpush2.bf16.msra.mxu0 0
        %1808 = vmatprep.subr.bf16.mxu0 0
        %1809 = vmatpush2.bf16.msra.mxu0 0
        %1810 = vmatprep.subr.bf16.mxu0 0
        %1811 = vmatpush2.bf16.msra.mxu0 0
        %1812 = vmatprep.subr.bf16.mxu0 0
        %1813 = vmatpush2.bf16.msra.mxu0 0
        %1814 = vmatprep.subr.bf16.mxu0 0
        %1815 = vmatpush2.bf16.msra.mxu0 0
        %1816 = vmatprep.mubr.bf16.mxu0 0
        %1817 = vmatmul.mubr.bf16.gmra.mxu0 %v1779
        %v1818 = vpop.f32.mrf.mxu0
        %v1819 = vadd.f32 0.0, %v1818
        %v1820 = vpop.f32.mrf.mxu0
        %v1821 = vpop.f32.mrf.mxu0
        %v1822 = vadd.f32 0.0, %v1821
        %v1823 = vpop.f32.mrf.mxu0
        %1824 = vdwg.mxu0
        %v1825 = vadd.f32 %v1547, %v1819
        %v1826 = vadd.f32 %v1548, %v1822
        %1827 = vrot.lane.b32.xlu0 %v711, 112
        %v1828 = vpop.permute.xlu0 %1827
        %1829 = vrot.lane.b32.xlu0 %v711, 80
        %v1830 = vpop.permute.xlu0 %1829
        %v1832 = vsel %vm716, %v1828, 0
        %v1835 = vsel %vm716, %v1830, 0
        %1837 = vmatprep.subr.bf16.mxu0 0
        %1838 = vmatpush1.bf16.xpose.msra.mxu0 0
        %1839 = vmatprep.subr.bf16.mxu0 0
        %1840 = vmatpush1.bf16.xpose.msra.mxu0 0
        %1841 = vmatprep.subr.bf16.mxu0 0
        %1842 = vmatpush1.bf16.xpose.msra.mxu0 0
        %1843 = vmatprep.subr.bf16.mxu0 0
        %1844 = vmatpush1.bf16.xpose.msra.mxu0 0
        %1845 = vmatprep.subr.bf16.mxu0 0
        %1846 = vmatpush1.bf16.xpose.msra.mxu0 0
        %1847 = vmatprep.subr.bf16.mxu0 0
        %1848 = vmatpush1.bf16.xpose.msra.mxu0 0
        %1849 = vmatprep.subr.bf16.mxu0 0
        %1850 = vmatpush1.bf16.xpose.msra.mxu0 0
        %1851 = vmatprep.subr.bf16.mxu0 0
        %1852 = vmatpush1.bf16.xpose.msra.mxu0 %v1835
        %1853 = vmatprep.subr.bf16.mxu0 0
        %1854 = vmatpush2.bf16.xpose.msra.mxu0 0
        %1855 = vmatprep.subr.bf16.mxu0 0
        %1856 = vmatpush2.bf16.xpose.msra.mxu0 0
        %1857 = vmatprep.subr.bf16.mxu0 0
        %1858 = vmatpush2.bf16.xpose.msra.mxu0 0
        %1859 = vmatprep.subr.bf16.mxu0 0
        %1860 = vmatpush2.bf16.xpose.msra.mxu0 0
        %1861 = vmatprep.subr.bf16.mxu0 0
        %1862 = vmatpush2.bf16.xpose.msra.mxu0 0
        %1863 = vmatprep.subr.bf16.mxu0 0
        %1864 = vmatpush2.bf16.xpose.msra.mxu0 0
        %1865 = vmatprep.subr.bf16.mxu0 0
        %1866 = vmatpush2.bf16.xpose.msra.mxu0 0
        %1867 = vmatprep.subr.bf16.mxu0 0
        %1868 = vmatpush2.bf16.xpose.msra.mxu0 0
        %1869 = vmatprep.mubr.bf16.mxu0 0
        %1870 = vmatmul.mubr.bf16.gmra.mxu0 %v1832
        %v1871 = vpop.f32.mrf.mxu0
        %v1872 = vadd.f32 0.0, %v1871
        %v1873 = vpop.f32.mrf.mxu0
        %v1874 = vpop.f32.mrf.mxu0
        %v1875 = vpop.f32.mrf.mxu0
        %1876 = vdwg.mxu0
        %1877 = vrot.lane.b32.xlu0 %v712, 112
        %v1878 = vpop.permute.xlu0 %1877
        %1879 = vrot.lane.b32.xlu0 %v712, 80
        %v1880 = vpop.permute.xlu0 %1879
        %v1882 = vsel %vm716, %v1878, 0
        %v1885 = vsel %vm716, %v1880, 0
        %1887 = vmatprep.subr.bf16.mxu0 0
        %1888 = vmatpush1.bf16.xpose.msra.mxu0 0
        %1889 = vmatprep.subr.bf16.mxu0 0
        %1890 = vmatpush1.bf16.xpose.msra.mxu0 0
        %1891 = vmatprep.subr.bf16.mxu0 0
        %1892 = vmatpush1.bf16.xpose.msra.mxu0 0
        %1893 = vmatprep.subr.bf16.mxu0 0
        %1894 = vmatpush1.bf16.xpose.msra.mxu0 0
        %1895 = vmatprep.subr.bf16.mxu0 0
        %1896 = vmatpush1.bf16.xpose.msra.mxu0 0
        %1897 = vmatprep.subr.bf16.mxu0 0
        %1898 = vmatpush1.bf16.xpose.msra.mxu0 0
        %1899 = vmatprep.subr.bf16.mxu0 0
        %1900 = vmatpush1.bf16.xpose.msra.mxu0 0
        %1901 = vmatprep.subr.bf16.mxu0 0
        %1902 = vmatpush1.bf16.xpose.msra.mxu0 %v1885
        %1903 = vmatprep.subr.bf16.mxu0 0
        %1904 = vmatpush2.bf16.xpose.msra.mxu0 0
        %1905 = vmatprep.subr.bf16.mxu0 0
        %1906 = vmatpush2.bf16.xpose.msra.mxu0 0
        %1907 = vmatprep.subr.bf16.mxu0 0
        %1908 = vmatpush2.bf16.xpose.msra.mxu0 0
        %1909 = vmatprep.subr.bf16.mxu0 0
        %1910 = vmatpush2.bf16.xpose.msra.mxu0 0
        %1911 = vmatprep.subr.bf16.mxu0 0
        %1912 = vmatpush2.bf16.xpose.msra.mxu0 0
        %1913 = vmatprep.subr.bf16.mxu0 0
        %1914 = vmatpush2.bf16.xpose.msra.mxu0 0
        %1915 = vmatprep.subr.bf16.mxu0 0
        %1916 = vmatpush2.bf16.xpose.msra.mxu0 0
        %1917 = vmatprep.subr.bf16.mxu0 0
        %1918 = vmatpush2.bf16.xpose.msra.mxu0 0
        %1919 = vmatprep.mubr.bf16.mxu0 0
        %1920 = vmatmul.mubr.bf16.gmra.mxu0 %v1882
        %v1921 = vpop.f32.mrf.mxu0
        %v1922 = vadd.f32 0.0, %v1921
        %v1923 = vpop.f32.mrf.mxu0
        %v1924 = vpop.f32.mrf.mxu0
        %v1925 = vpop.f32.mrf.mxu0
        %1926 = vdwg.mxu0
        %v1927 = vmul.f32 %v1872, 0.5
        %v1928 = vmul.f32 %v1922, 0.5
        %v1929 = vadd.f32 %v1927, %v819
        %v1930 = vadd.f32 %v1928, %v823
        %v1931 = vsel %vm828, %v1929, -inf
        %1932 = vmax.xlane.f32.xlu0 %v1931
        %v1933 = vpop.xlane.xlu0 %1932
        %v1934 = vsel %vm828, %v1930, -inf
        %1935 = vmax.xlane.f32.xlu0 %v1934
        %v1936 = vpop.xlane.xlu0 %1935
        %v1937 = vsub.f32 %v1929, %v1933
        %v1938 = vsub.f32 %v1930, %v1936
        %v1939 = vmul.f32 %v1937, 1.442695
        %v1940 = vpow.pop %v1939
        %v1941 = vmul.f32 %v1938, 1.442695
        %v1942 = vpow.pop %v1941
        %v1943 = vsel %vm828, %v1940, 0.0
        %1944 = vadd.xlane.f32.xlu0 %v1943
        %v1945 = vpop.xlane.xlu0 %1944
        %v1946 = vsel %vm828, %v1942, 0.0
        %1947 = vadd.xlane.f32.xlu0 %v1946
        %v1948 = vpop.xlane.xlu0 %1947
        %v1949 = vrcp.pop %v1945
        %v1950 = vrcp.pop %v1948
        %v1951 = vmul.f32 %v1940, %v1949
        %v1952 = vmul.f32 %v1942, %v1950
        %v1953 = vpack.c.bf16 %v1951, %v1951
        %v1954 = vpack.c.bf16 %v1952, %v1952
        %1955 = vrot.lane.b32.xlu0 %v711, 48
        %v1956 = vpop.permute.xlu0 %1955
        %v1958 = vsel %vm828, %v1953, 0
        %v1961 = vsel %vm858, %v1956, 0
        %1963 = vmatprep.subr.bf16.mxu0 0
        %1964 = vmatpush1.bf16.msra.mxu0 0
        %1965 = vmatprep.subr.bf16.mxu0 0
        %1966 = vmatpush1.bf16.msra.mxu0 0
        %1967 = vmatprep.subr.bf16.mxu0 0
        %1968 = vmatpush1.bf16.msra.mxu0 0
        %1969 = vmatprep.subr.bf16.mxu0 0
        %1970 = vmatpush1.bf16.msra.mxu0 0
        %1971 = vmatprep.subr.bf16.mxu0 0
        %1972 = vmatpush1.bf16.msra.mxu0 0
        %1973 = vmatprep.subr.bf16.mxu0 0
        %1974 = vmatpush1.bf16.msra.mxu0 0
        %1975 = vmatprep.subr.bf16.mxu0 0
        %1976 = vmatpush1.bf16.msra.mxu0 0
        %1977 = vmatprep.subr.bf16.mxu0 0
        %1978 = vmatpush1.bf16.msra.mxu0 %v1961
        %1979 = vmatprep.subr.bf16.mxu0 0
        %1980 = vmatpush2.bf16.msra.mxu0 0
        %1981 = vmatprep.subr.bf16.mxu0 0
        %1982 = vmatpush2.bf16.msra.mxu0 0
        %1983 = vmatprep.subr.bf16.mxu0 0
        %1984 = vmatpush2.bf16.msra.mxu0 0
        %1985 = vmatprep.subr.bf16.mxu0 0
        %1986 = vmatpush2.bf16.msra.mxu0 0
        %1987 = vmatprep.subr.bf16.mxu0 0
        %1988 = vmatpush2.bf16.msra.mxu0 0
        %1989 = vmatprep.subr.bf16.mxu0 0
        %1990 = vmatpush2.bf16.msra.mxu0 0
        %1991 = vmatprep.subr.bf16.mxu0 0
        %1992 = vmatpush2.bf16.msra.mxu0 0
        %1993 = vmatprep.subr.bf16.mxu0 0
        %1994 = vmatpush2.bf16.msra.mxu0 0
        %1995 = vmatprep.mubr.bf16.mxu0 0
        %1996 = vmatmul.mubr.bf16.gmra.mxu0 %v1958
        %v1997 = vpop.f32.mrf.mxu0
        %v1998 = vadd.f32 0.0, %v1997
        %v1999 = vpop.f32.mrf.mxu0
        %v2000 = vpop.f32.mrf.mxu0
        %v2001 = vpop.f32.mrf.mxu0
        %2002 = vdwg.mxu0
        %2003 = vrot.lane.b32.xlu0 %v712, 48
        %v2004 = vpop.permute.xlu0 %2003
        %v2006 = vsel %vm828, %v1954, 0
        %v2009 = vsel %vm858, %v2004, 0
        %2011 = vmatprep.subr.bf16.mxu0 0
        %2012 = vmatpush1.bf16.msra.mxu0 0
        %2013 = vmatprep.subr.bf16.mxu0 0
        %2014 = vmatpush1.bf16.msra.mxu0 0
        %2015 = vmatprep.subr.bf16.mxu0 0
        %2016 = vmatpush1.bf16.msra.mxu0 0
        %2017 = vmatprep.subr.bf16.mxu0 0
        %2018 = vmatpush1.bf16.msra.mxu0 0
        %2019 = vmatprep.subr.bf16.mxu0 0
        %2020 = vmatpush1.bf16.msra.mxu0 0
        %2021 = vmatprep.subr.bf16.mxu0 0
        %2022 = vmatpush1.bf16.msra.mxu0 0
        %2023 = vmatprep.subr.bf16.mxu0 0
        %2024 = vmatpush1.bf16.msra.mxu0 0
        %2025 = vmatprep.subr.bf16.mxu0 0
        %2026 = vmatpush1.bf16.msra.mxu0 %v2009
        %2027 = vmatprep.subr.bf16.mxu0 0
        %2028 = vmatpush2.bf16.msra.mxu0 0
        %2029 = vmatprep.subr.bf16.mxu0 0
        %2030 = vmatpush2.bf16.msra.mxu0 0
        %2031 = vmatprep.subr.bf16.mxu0 0
        %2032 = vmatpush2.bf16.msra.mxu0 0
        %2033 = vmatprep.subr.bf16.mxu0 0
        %2034 = vmatpush2.bf16.msra.mxu0 0
        %2035 = vmatprep.subr.bf16.mxu0 0
        %2036 = vmatpush2.bf16.msra.mxu0 0
        %2037 = vmatprep.subr.bf16.mxu0 0
        %2038 = vmatpush2.bf16.msra.mxu0 0
        %2039 = vmatprep.subr.bf16.mxu0 0
        %2040 = vmatpush2.bf16.msra.mxu0 0
        %2041 = vmatprep.subr.bf16.mxu0 0
        %2042 = vmatpush2.bf16.msra.mxu0 0
        %2043 = vmatprep.mubr.bf16.mxu0 0
        %2044 = vmatmul.mubr.bf16.gmra.mxu0 %v2006
        %v2045 = vpop.f32.mrf.mxu0
        %v2046 = vadd.f32 0.0, %v2045
        %v2047 = vpop.f32.mrf.mxu0
        %v2048 = vpop.f32.mrf.mxu0
        %v2049 = vpop.f32.mrf.mxu0
        %2050 = vdwg.mxu0
        %v2051 = vpack.c.bf16 %v2046, %v1998
        %v2053 = vsel %vm716, %v2051, 0
        %v2056 = vsel %vm1183, %v709, 0
        %2058 = vmatprep.subr.bf16.mxu0 0
        %2059 = vmatpush1.bf16.msra.mxu0 0
        %2060 = vmatprep.subr.bf16.mxu0 0
        %2061 = vmatpush1.bf16.msra.mxu0 0
        %2062 = vmatprep.subr.bf16.mxu0 0
        %2063 = vmatpush1.bf16.msra.mxu0 0
        %2064 = vmatprep.subr.bf16.mxu0 0
        %2065 = vmatpush1.bf16.msra.mxu0 0
        %2066 = vmatprep.subr.bf16.mxu0 0
        %2067 = vmatpush1.bf16.msra.mxu0 0
        %2068 = vmatprep.subr.bf16.mxu0 0
        %2069 = vmatpush1.bf16.msra.mxu0 0
        %2070 = vmatprep.subr.bf16.mxu0 0
        %2071 = vmatpush1.bf16.msra.mxu0 0
        %2072 = vmatprep.subr.bf16.mxu0 0
        %2073 = vmatpush1.bf16.msra.mxu0 %v2056
        %2074 = vmatprep.subr.bf16.mxu0 0
        %2075 = vmatpush2.bf16.msra.mxu0 0
        %2076 = vmatprep.subr.bf16.mxu0 0
        %2077 = vmatpush2.bf16.msra.mxu0 0
        %2078 = vmatprep.subr.bf16.mxu0 0
        %2079 = vmatpush2.bf16.msra.mxu0 0
        %2080 = vmatprep.subr.bf16.mxu0 0
        %2081 = vmatpush2.bf16.msra.mxu0 0
        %2082 = vmatprep.subr.bf16.mxu0 0
        %2083 = vmatpush2.bf16.msra.mxu0 0
        %2084 = vmatprep.subr.bf16.mxu0 0
        %2085 = vmatpush2.bf16.msra.mxu0 0
        %2086 = vmatprep.subr.bf16.mxu0 0
        %2087 = vmatpush2.bf16.msra.mxu0 0
        %2088 = vmatprep.subr.bf16.mxu0 0
        %2089 = vmatpush2.bf16.msra.mxu0 0
        %2090 = vmatprep.mubr.bf16.mxu0 0
        %2091 = vmatmul.mubr.bf16.gmra.mxu0 %v2053
        %v2092 = vpop.f32.mrf.mxu0
        %v2093 = vadd.f32 0.0, %v2092
        %v2094 = vpop.f32.mrf.mxu0
        %v2095 = vpop.f32.mrf.mxu0
        %v2096 = vadd.f32 0.0, %v2095
        %v2097 = vpop.f32.mrf.mxu0
        %2098 = vdwg.mxu0
        %v2099 = vadd.f32 %v1825, %v2093
        %v2100 = vadd.f32 %v1826, %v2096
        %2101 = vrot.lane.b32.xlu0 %v711, 108
        %v2102 = vpop.permute.xlu0 %2101
        %2103 = vrot.lane.b32.xlu0 %v711, 76
        %v2104 = vpop.permute.xlu0 %2103
        %v2106 = vsel %vm716, %v2102, 0
        %v2109 = vsel %vm716, %v2104, 0
        %2111 = vmatprep.subr.bf16.mxu0 0
        %2112 = vmatpush1.bf16.xpose.msra.mxu0 0
        %2113 = vmatprep.subr.bf16.mxu0 0
        %2114 = vmatpush1.bf16.xpose.msra.mxu0 0
        %2115 = vmatprep.subr.bf16.mxu0 0
        %2116 = vmatpush1.bf16.xpose.msra.mxu0 0
        %2117 = vmatprep.subr.bf16.mxu0 0
        %2118 = vmatpush1.bf16.xpose.msra.mxu0 0
        %2119 = vmatprep.subr.bf16.mxu0 0
        %2120 = vmatpush1.bf16.xpose.msra.mxu0 0
        %2121 = vmatprep.subr.bf16.mxu0 0
        %2122 = vmatpush1.bf16.xpose.msra.mxu0 0
        %2123 = vmatprep.subr.bf16.mxu0 0
        %2124 = vmatpush1.bf16.xpose.msra.mxu0 0
        %2125 = vmatprep.subr.bf16.mxu0 0
        %2126 = vmatpush1.bf16.xpose.msra.mxu0 %v2109
        %2127 = vmatprep.subr.bf16.mxu0 0
        %2128 = vmatpush2.bf16.xpose.msra.mxu0 0
        %2129 = vmatprep.subr.bf16.mxu0 0
        %2130 = vmatpush2.bf16.xpose.msra.mxu0 0
        %2131 = vmatprep.subr.bf16.mxu0 0
        %2132 = vmatpush2.bf16.xpose.msra.mxu0 0
        %2133 = vmatprep.subr.bf16.mxu0 0
        %2134 = vmatpush2.bf16.xpose.msra.mxu0 0
        %2135 = vmatprep.subr.bf16.mxu0 0
        %2136 = vmatpush2.bf16.xpose.msra.mxu0 0
        %2137 = vmatprep.subr.bf16.mxu0 0
        %2138 = vmatpush2.bf16.xpose.msra.mxu0 0
        %2139 = vmatprep.subr.bf16.mxu0 0
        %2140 = vmatpush2.bf16.xpose.msra.mxu0 0
        %2141 = vmatprep.subr.bf16.mxu0 0
        %2142 = vmatpush2.bf16.xpose.msra.mxu0 0
        %2143 = vmatprep.mubr.bf16.mxu0 0
        %2144 = vmatmul.mubr.bf16.gmra.mxu0 %v2106
        %v2145 = vpop.f32.mrf.mxu0
        %v2146 = vadd.f32 0.0, %v2145
        %v2147 = vpop.f32.mrf.mxu0
        %v2148 = vpop.f32.mrf.mxu0
        %v2149 = vpop.f32.mrf.mxu0
        %2150 = vdwg.mxu0
        %2151 = vrot.lane.b32.xlu0 %v712, 108
        %v2152 = vpop.permute.xlu0 %2151
        %2153 = vrot.lane.b32.xlu0 %v712, 76
        %v2154 = vpop.permute.xlu0 %2153
        %v2156 = vsel %vm716, %v2152, 0
        %v2159 = vsel %vm716, %v2154, 0
        %2161 = vmatprep.subr.bf16.mxu0 0
        %2162 = vmatpush1.bf16.xpose.msra.mxu0 0
        %2163 = vmatprep.subr.bf16.mxu0 0
        %2164 = vmatpush1.bf16.xpose.msra.mxu0 0
        %2165 = vmatprep.subr.bf16.mxu0 0
        %2166 = vmatpush1.bf16.xpose.msra.mxu0 0
        %2167 = vmatprep.subr.bf16.mxu0 0
        %2168 = vmatpush1.bf16.xpose.msra.mxu0 0
        %2169 = vmatprep.subr.bf16.mxu0 0
        %2170 = vmatpush1.bf16.xpose.msra.mxu0 0
        %2171 = vmatprep.subr.bf16.mxu0 0
        %2172 = vmatpush1.bf16.xpose.msra.mxu0 0
        %2173 = vmatprep.subr.bf16.mxu0 0
        %2174 = vmatpush1.bf16.xpose.msra.mxu0 0
        %2175 = vmatprep.subr.bf16.mxu0 0
        %2176 = vmatpush1.bf16.xpose.msra.mxu0 %v2159
        %2177 = vmatprep.subr.bf16.mxu0 0
        %2178 = vmatpush2.bf16.xpose.msra.mxu0 0
        %2179 = vmatprep.subr.bf16.mxu0 0
        %2180 = vmatpush2.bf16.xpose.msra.mxu0 0
        %2181 = vmatprep.subr.bf16.mxu0 0
        %2182 = vmatpush2.bf16.xpose.msra.mxu0 0
        %2183 = vmatprep.subr.bf16.mxu0 0
        %2184 = vmatpush2.bf16.xpose.msra.mxu0 0
        %2185 = vmatprep.subr.bf16.mxu0 0
        %2186 = vmatpush2.bf16.xpose.msra.mxu0 0
        %2187 = vmatprep.subr.bf16.mxu0 0
        %2188 = vmatpush2.bf16.xpose.msra.mxu0 0
        %2189 = vmatprep.subr.bf16.mxu0 0
        %2190 = vmatpush2.bf16.xpose.msra.mxu0 0
        %2191 = vmatprep.subr.bf16.mxu0 0
        %2192 = vmatpush2.bf16.xpose.msra.mxu0 0
        %2193 = vmatprep.mubr.bf16.mxu0 0
        %2194 = vmatmul.mubr.bf16.gmra.mxu0 %v2156
        %v2195 = vpop.f32.mrf.mxu0
        %v2196 = vadd.f32 0.0, %v2195
        %v2197 = vpop.f32.mrf.mxu0
        %v2198 = vpop.f32.mrf.mxu0
        %v2199 = vpop.f32.mrf.mxu0
        %2200 = vdwg.mxu0
        %v2201 = vmul.f32 %v2146, 0.5
        %v2202 = vmul.f32 %v2196, 0.5
        %v2203 = vadd.f32 %v2201, %v819
        %v2204 = vadd.f32 %v2202, %v823
        %v2205 = vsel %vm828, %v2203, -inf
        %2206 = vmax.xlane.f32.xlu0 %v2205
        %v2207 = vpop.xlane.xlu0 %2206
        %v2208 = vsel %vm828, %v2204, -inf
        %2209 = vmax.xlane.f32.xlu0 %v2208
        %v2210 = vpop.xlane.xlu0 %2209
        %v2211 = vsub.f32 %v2203, %v2207
        %v2212 = vsub.f32 %v2204, %v2210
        %v2213 = vmul.f32 %v2211, 1.442695
        %v2214 = vpow.pop %v2213
        %v2215 = vmul.f32 %v2212, 1.442695
        %v2216 = vpow.pop %v2215
        %v2217 = vsel %vm828, %v2214, 0.0
        %2218 = vadd.xlane.f32.xlu0 %v2217
        %v2219 = vpop.xlane.xlu0 %2218
        %v2220 = vsel %vm828, %v2216, 0.0
        %2221 = vadd.xlane.f32.xlu0 %v2220
        %v2222 = vpop.xlane.xlu0 %2221
        %v2223 = vrcp.pop %v2219
        %v2224 = vrcp.pop %v2222
        %v2225 = vmul.f32 %v2214, %v2223
        %v2226 = vmul.f32 %v2216, %v2224
        %v2227 = vpack.c.bf16 %v2225, %v2225
        %v2228 = vpack.c.bf16 %v2226, %v2226
        %2229 = vrot.lane.b32.xlu0 %v711, 44
        %v2230 = vpop.permute.xlu0 %2229
        %v2232 = vsel %vm828, %v2227, 0
        %v2235 = vsel %vm858, %v2230, 0
        %2237 = vmatprep.subr.bf16.mxu0 0
        %2238 = vmatpush1.bf16.msra.mxu0 0
        %2239 = vmatprep.subr.bf16.mxu0 0
        %2240 = vmatpush1.bf16.msra.mxu0 0
        %2241 = vmatprep.subr.bf16.mxu0 0
        %2242 = vmatpush1.bf16.msra.mxu0 0
        %2243 = vmatprep.subr.bf16.mxu0 0
        %2244 = vmatpush1.bf16.msra.mxu0 0
        %2245 = vmatprep.subr.bf16.mxu0 0
        %2246 = vmatpush1.bf16.msra.mxu0 0
        %2247 = vmatprep.subr.bf16.mxu0 0
        %2248 = vmatpush1.bf16.msra.mxu0 0
        %2249 = vmatprep.subr.bf16.mxu0 0
        %2250 = vmatpush1.bf16.msra.mxu0 0
        %2251 = vmatprep.subr.bf16.mxu0 0
        %2252 = vmatpush1.bf16.msra.mxu0 %v2235
        %2253 = vmatprep.subr.bf16.mxu0 0
        %2254 = vmatpush2.bf16.msra.mxu0 0
        %2255 = vmatprep.subr.bf16.mxu0 0
        %2256 = vmatpush2.bf16.msra.mxu0 0
        %2257 = vmatprep.subr.bf16.mxu0 0
        %2258 = vmatpush2.bf16.msra.mxu0 0
        %2259 = vmatprep.subr.bf16.mxu0 0
        %2260 = vmatpush2.bf16.msra.mxu0 0
        %2261 = vmatprep.subr.bf16.mxu0 0
        %2262 = vmatpush2.bf16.msra.mxu0 0
        %2263 = vmatprep.subr.bf16.mxu0 0
        %2264 = vmatpush2.bf16.msra.mxu0 0
        %2265 = vmatprep.subr.bf16.mxu0 0
        %2266 = vmatpush2.bf16.msra.mxu0 0
        %2267 = vmatprep.subr.bf16.mxu0 0
        %2268 = vmatpush2.bf16.msra.mxu0 0
        %2269 = vmatprep.mubr.bf16.mxu0 0
        %2270 = vmatmul.mubr.bf16.gmra.mxu0 %v2232
        %v2271 = vpop.f32.mrf.mxu0
        %v2272 = vadd.f32 0.0, %v2271
        %v2273 = vpop.f32.mrf.mxu0
        %v2274 = vpop.f32.mrf.mxu0
        %v2275 = vpop.f32.mrf.mxu0
        %2276 = vdwg.mxu0
        %2277 = vrot.lane.b32.xlu0 %v712, 44
        %v2278 = vpop.permute.xlu0 %2277
        %v2280 = vsel %vm828, %v2228, 0
        %v2283 = vsel %vm858, %v2278, 0
        %2285 = vmatprep.subr.bf16.mxu0 0
        %2286 = vmatpush1.bf16.msra.mxu0 0
        %2287 = vmatprep.subr.bf16.mxu0 0
        %2288 = vmatpush1.bf16.msra.mxu0 0
        %2289 = vmatprep.subr.bf16.mxu0 0
        %2290 = vmatpush1.bf16.msra.mxu0 0
        %2291 = vmatprep.subr.bf16.mxu0 0
        %2292 = vmatpush1.bf16.msra.mxu0 0
        %2293 = vmatprep.subr.bf16.mxu0 0
        %2294 = vmatpush1.bf16.msra.mxu0 0
        %2295 = vmatprep.subr.bf16.mxu0 0
        %2296 = vmatpush1.bf16.msra.mxu0 0
        %2297 = vmatprep.subr.bf16.mxu0 0
        %2298 = vmatpush1.bf16.msra.mxu0 0
        %2299 = vmatprep.subr.bf16.mxu0 0
        %2300 = vmatpush1.bf16.msra.mxu0 %v2283
        %2301 = vmatprep.subr.bf16.mxu0 0
        %2302 = vmatpush2.bf16.msra.mxu0 0
        %2303 = vmatprep.subr.bf16.mxu0 0
        %2304 = vmatpush2.bf16.msra.mxu0 0
        %2305 = vmatprep.subr.bf16.mxu0 0
        %2306 = vmatpush2.bf16.msra.mxu0 0
        %2307 = vmatprep.subr.bf16.mxu0 0
        %2308 = vmatpush2.bf16.msra.mxu0 0
        %2309 = vmatprep.subr.bf16.mxu0 0
        %2310 = vmatpush2.bf16.msra.mxu0 0
        %2311 = vmatprep.subr.bf16.mxu0 0
        %2312 = vmatpush2.bf16.msra.mxu0 0
        %2313 = vmatprep.subr.bf16.mxu0 0
        %2314 = vmatpush2.bf16.msra.mxu0 0
        %2315 = vmatprep.subr.bf16.mxu0 0
        %2316 = vmatpush2.bf16.msra.mxu0 0
        %2317 = vmatprep.mubr.bf16.mxu0 0
        %2318 = vmatmul.mubr.bf16.gmra.mxu0 %v2280
        %v2319 = vpop.f32.mrf.mxu0
        %v2320 = vadd.f32 0.0, %v2319
        %v2321 = vpop.f32.mrf.mxu0
        %v2322 = vpop.f32.mrf.mxu0
        %v2323 = vpop.f32.mrf.mxu0
        %2324 = vdwg.mxu0
        %v2325 = vpack.c.bf16 %v2320, %v2272
        %v2327 = vunpack.c.l.b16 %v709
        %v2328 = vpack.c.b16 %v2327, %v2327
        %v2329 = vrot.slane %v2328, 2
        %v2331 = vsel %vm716, %v2325, 0
        %v2334 = vsel %vm1183, %v2329, 0
        %2336 = vmatprep.subr.bf16.mxu0 0
        %2337 = vmatpush1.bf16.msra.mxu0 0
        %2338 = vmatprep.subr.bf16.mxu0 0
        %2339 = vmatpush1.bf16.msra.mxu0 0
        %2340 = vmatprep.subr.bf16.mxu0 0
        %2341 = vmatpush1.bf16.msra.mxu0 0
        %2342 = vmatprep.subr.bf16.mxu0 0
        %2343 = vmatpush1.bf16.msra.mxu0 0
        %2344 = vmatprep.subr.bf16.mxu0 0
        %2345 = vmatpush1.bf16.msra.mxu0 0
        %2346 = vmatprep.subr.bf16.mxu0 0
        %2347 = vmatpush1.bf16.msra.mxu0 0
        %2348 = vmatprep.subr.bf16.mxu0 0
        %2349 = vmatpush1.bf16.msra.mxu0 0
        %2350 = vmatprep.subr.bf16.mxu0 0
        %2351 = vmatpush1.bf16.msra.mxu0 %v2334
        %2352 = vmatprep.subr.bf16.mxu0 0
        %2353 = vmatpush2.bf16.msra.mxu0 0
        %2354 = vmatprep.subr.bf16.mxu0 0
        %2355 = vmatpush2.bf16.msra.mxu0 0
        %2356 = vmatprep.subr.bf16.mxu0 0
        %2357 = vmatpush2.bf16.msra.mxu0 0
        %2358 = vmatprep.subr.bf16.mxu0 0
        %2359 = vmatpush2.bf16.msra.mxu0 0
        %2360 = vmatprep.subr.bf16.mxu0 0
        %2361 = vmatpush2.bf16.msra.mxu0 0
        %2362 = vmatprep.subr.bf16.mxu0 0
        %2363 = vmatpush2.bf16.msra.mxu0 0
        %2364 = vmatprep.subr.bf16.mxu0 0
        %2365 = vmatpush2.bf16.msra.mxu0 0
        %2366 = vmatprep.subr.bf16.mxu0 0
        %2367 = vmatpush2.bf16.msra.mxu0 0
        %2368 = vmatprep.mubr.bf16.mxu0 0
        %2369 = vmatmul.mubr.bf16.gmra.mxu0 %v2331
        %v2370 = vpop.f32.mrf.mxu0
        %v2371 = vadd.f32 0.0, %v2370
        %v2372 = vpop.f32.mrf.mxu0
        %v2373 = vpop.f32.mrf.mxu0
        %v2374 = vadd.f32 0.0, %v2373
        %v2375 = vpop.f32.mrf.mxu0
        %2376 = vdwg.mxu0
        %v2377 = vadd.f32 %v2099, %v2371
        %v2378 = vadd.f32 %v2100, %v2374
        %2379 = vrot.lane.b32.xlu0 %v711, 104
        %v2380 = vpop.permute.xlu0 %2379
        %2381 = vrot.lane.b32.xlu0 %v711, 72
        %v2382 = vpop.permute.xlu0 %2381
        %v2384 = vsel %vm716, %v2380, 0
        %v2387 = vsel %vm716, %v2382, 0
        %2389 = vmatprep.subr.bf16.mxu0 0
        %2390 = vmatpush1.bf16.xpose.msra.mxu0 0
        %2391 = vmatprep.subr.bf16.mxu0 0
        %2392 = vmatpush1.bf16.xpose.msra.mxu0 0
        %2393 = vmatprep.subr.bf16.mxu0 0
        %2394 = vmatpush1.bf16.xpose.msra.mxu0 0
        %2395 = vmatprep.subr.bf16.mxu0 0
        %2396 = vmatpush1.bf16.xpose.msra.mxu0 0
        %2397 = vmatprep.subr.bf16.mxu0 0
        %2398 = vmatpush1.bf16.xpose.msra.mxu0 0
        %2399 = vmatprep.subr.bf16.mxu0 0
        %2400 = vmatpush1.bf16.xpose.msra.mxu0 0
        %2401 = vmatprep.subr.bf16.mxu0 0
        %2402 = vmatpush1.bf16.xpose.msra.mxu0 0
        %2403 = vmatprep.subr.bf16.mxu0 0
        %2404 = vmatpush1.bf16.xpose.msra.mxu0 %v2387
        %2405 = vmatprep.subr.bf16.mxu0 0
        %2406 = vmatpush2.bf16.xpose.msra.mxu0 0
        %2407 = vmatprep.subr.bf16.mxu0 0
        %2408 = vmatpush2.bf16.xpose.msra.mxu0 0
        %2409 = vmatprep.subr.bf16.mxu0 0
        %2410 = vmatpush2.bf16.xpose.msra.mxu0 0
        %2411 = vmatprep.subr.bf16.mxu0 0
        %2412 = vmatpush2.bf16.xpose.msra.mxu0 0
        %2413 = vmatprep.subr.bf16.mxu0 0
        %2414 = vmatpush2.bf16.xpose.msra.mxu0 0
        %2415 = vmatprep.subr.bf16.mxu0 0
        %2416 = vmatpush2.bf16.xpose.msra.mxu0 0
        %2417 = vmatprep.subr.bf16.mxu0 0
        %2418 = vmatpush2.bf16.xpose.msra.mxu0 0
        %2419 = vmatprep.subr.bf16.mxu0 0
        %2420 = vmatpush2.bf16.xpose.msra.mxu0 0
        %2421 = vmatprep.mubr.bf16.mxu0 0
        %2422 = vmatmul.mubr.bf16.gmra.mxu0 %v2384
        %v2423 = vpop.f32.mrf.mxu0
        %v2424 = vadd.f32 0.0, %v2423
        %v2425 = vpop.f32.mrf.mxu0
        %v2426 = vpop.f32.mrf.mxu0
        %v2427 = vpop.f32.mrf.mxu0
        %2428 = vdwg.mxu0
        %2429 = vrot.lane.b32.xlu0 %v712, 104
        %v2430 = vpop.permute.xlu0 %2429
        %2431 = vrot.lane.b32.xlu0 %v712, 72
        %v2432 = vpop.permute.xlu0 %2431
        %v2434 = vsel %vm716, %v2430, 0
        %v2437 = vsel %vm716, %v2432, 0
        %2439 = vmatprep.subr.bf16.mxu0 0
        %2440 = vmatpush1.bf16.xpose.msra.mxu0 0
        %2441 = vmatprep.subr.bf16.mxu0 0
        %2442 = vmatpush1.bf16.xpose.msra.mxu0 0
        %2443 = vmatprep.subr.bf16.mxu0 0
        %2444 = vmatpush1.bf16.xpose.msra.mxu0 0
        %2445 = vmatprep.subr.bf16.mxu0 0
        %2446 = vmatpush1.bf16.xpose.msra.mxu0 0
        %2447 = vmatprep.subr.bf16.mxu0 0
        %2448 = vmatpush1.bf16.xpose.msra.mxu0 0
        %2449 = vmatprep.subr.bf16.mxu0 0
        %2450 = vmatpush1.bf16.xpose.msra.mxu0 0
        %2451 = vmatprep.subr.bf16.mxu0 0
        %2452 = vmatpush1.bf16.xpose.msra.mxu0 0
        %2453 = vmatprep.subr.bf16.mxu0 0
        %2454 = vmatpush1.bf16.xpose.msra.mxu0 %v2437
        %2455 = vmatprep.subr.bf16.mxu0 0
        %2456 = vmatpush2.bf16.xpose.msra.mxu0 0
        %2457 = vmatprep.subr.bf16.mxu0 0
        %2458 = vmatpush2.bf16.xpose.msra.mxu0 0
        %2459 = vmatprep.subr.bf16.mxu0 0
        %2460 = vmatpush2.bf16.xpose.msra.mxu0 0
        %2461 = vmatprep.subr.bf16.mxu0 0
        %2462 = vmatpush2.bf16.xpose.msra.mxu0 0
        %2463 = vmatprep.subr.bf16.mxu0 0
        %2464 = vmatpush2.bf16.xpose.msra.mxu0 0
        %2465 = vmatprep.subr.bf16.mxu0 0
        %2466 = vmatpush2.bf16.xpose.msra.mxu0 0
        %2467 = vmatprep.subr.bf16.mxu0 0
        %2468 = vmatpush2.bf16.xpose.msra.mxu0 0
        %2469 = vmatprep.subr.bf16.mxu0 0
        %2470 = vmatpush2.bf16.xpose.msra.mxu0 0
        %2471 = vmatprep.mubr.bf16.mxu0 0
        %2472 = vmatmul.mubr.bf16.gmra.mxu0 %v2434
        %v2473 = vpop.f32.mrf.mxu0
        %v2474 = vadd.f32 0.0, %v2473
        %v2475 = vpop.f32.mrf.mxu0
        %v2476 = vpop.f32.mrf.mxu0
        %v2477 = vpop.f32.mrf.mxu0
        %2478 = vdwg.mxu0
        %v2479 = vmul.f32 %v2424, 0.5
        %v2480 = vmul.f32 %v2474, 0.5
        %v2481 = vadd.f32 %v2479, %v819
        %v2482 = vadd.f32 %v2480, %v823
        %v2483 = vsel %vm828, %v2481, -inf
        %2484 = vmax.xlane.f32.xlu0 %v2483
        %v2485 = vpop.xlane.xlu0 %2484
        %v2486 = vsel %vm828, %v2482, -inf
        %2487 = vmax.xlane.f32.xlu0 %v2486
        %v2488 = vpop.xlane.xlu0 %2487
        %v2489 = vsub.f32 %v2481, %v2485
        %v2490 = vsub.f32 %v2482, %v2488
        %v2491 = vmul.f32 %v2489, 1.442695
        %v2492 = vpow.pop %v2491
        %v2493 = vmul.f32 %v2490, 1.442695
        %v2494 = vpow.pop %v2493
        %v2495 = vsel %vm828, %v2492, 0.0
        %2496 = vadd.xlane.f32.xlu0 %v2495
        %v2497 = vpop.xlane.xlu0 %2496
        %v2498 = vsel %vm828, %v2494, 0.0
        %2499 = vadd.xlane.f32.xlu0 %v2498
        %v2500 = vpop.xlane.xlu0 %2499
        %v2501 = vrcp.pop %v2497
        %v2502 = vrcp.pop %v2500
        %v2503 = vmul.f32 %v2492, %v2501
        %v2504 = vmul.f32 %v2494, %v2502
        %v2505 = vpack.c.bf16 %v2503, %v2503
        %v2506 = vpack.c.bf16 %v2504, %v2504
        %2507 = vrot.lane.b32.xlu0 %v711, 40
        %v2508 = vpop.permute.xlu0 %2507
        %v2510 = vsel %vm828, %v2505, 0
        %v2513 = vsel %vm858, %v2508, 0
        %2515 = vmatprep.subr.bf16.mxu0 0
        %2516 = vmatpush1.bf16.msra.mxu0 0
        %2517 = vmatprep.subr.bf16.mxu0 0
        %2518 = vmatpush1.bf16.msra.mxu0 0
        %2519 = vmatprep.subr.bf16.mxu0 0
        %2520 = vmatpush1.bf16.msra.mxu0 0
        %2521 = vmatprep.subr.bf16.mxu0 0
        %2522 = vmatpush1.bf16.msra.mxu0 0
        %2523 = vmatprep.subr.bf16.mxu0 0
        %2524 = vmatpush1.bf16.msra.mxu0 0
        %2525 = vmatprep.subr.bf16.mxu0 0
        %2526 = vmatpush1.bf16.msra.mxu0 0
        %2527 = vmatprep.subr.bf16.mxu0 0
        %2528 = vmatpush1.bf16.msra.mxu0 0
        %2529 = vmatprep.subr.bf16.mxu0 0
        %2530 = vmatpush1.bf16.msra.mxu0 %v2513
        %2531 = vmatprep.subr.bf16.mxu0 0
        %2532 = vmatpush2.bf16.msra.mxu0 0
        %2533 = vmatprep.subr.bf16.mxu0 0
        %2534 = vmatpush2.bf16.msra.mxu0 0
        %2535 = vmatprep.subr.bf16.mxu0 0
        %2536 = vmatpush2.bf16.msra.mxu0 0
        %2537 = vmatprep.subr.bf16.mxu0 0
        %2538 = vmatpush2.bf16.msra.mxu0 0
        %2539 = vmatprep.subr.bf16.mxu0 0
        %2540 = vmatpush2.bf16.msra.mxu0 0
        %2541 = vmatprep.subr.bf16.mxu0 0
        %2542 = vmatpush2.bf16.msra.mxu0 0
        %2543 = vmatprep.subr.bf16.mxu0 0
        %2544 = vmatpush2.bf16.msra.mxu0 0
        %2545 = vmatprep.subr.bf16.mxu0 0
        %2546 = vmatpush2.bf16.msra.mxu0 0
        %2547 = vmatprep.mubr.bf16.mxu0 0
        %2548 = vmatmul.mubr.bf16.gmra.mxu0 %v2510
        %v2549 = vpop.f32.mrf.mxu0
        %v2550 = vadd.f32 0.0, %v2549
        %v2551 = vpop.f32.mrf.mxu0
        %v2552 = vpop.f32.mrf.mxu0
        %v2553 = vpop.f32.mrf.mxu0
        %2554 = vdwg.mxu0
        %2555 = vrot.lane.b32.xlu0 %v712, 40
        %v2556 = vpop.permute.xlu0 %2555
        %v2558 = vsel %vm828, %v2506, 0
        %v2561 = vsel %vm858, %v2556, 0
        %2563 = vmatprep.subr.bf16.mxu0 0
        %2564 = vmatpush1.bf16.msra.mxu0 0
        %2565 = vmatprep.subr.bf16.mxu0 0
        %2566 = vmatpush1.bf16.msra.mxu0 0
        %2567 = vmatprep.subr.bf16.mxu0 0
        %2568 = vmatpush1.bf16.msra.mxu0 0
        %2569 = vmatprep.subr.bf16.mxu0 0
        %2570 = vmatpush1.bf16.msra.mxu0 0
        %2571 = vmatprep.subr.bf16.mxu0 0
        %2572 = vmatpush1.bf16.msra.mxu0 0
        %2573 = vmatprep.subr.bf16.mxu0 0
        %2574 = vmatpush1.bf16.msra.mxu0 0
        %2575 = vmatprep.subr.bf16.mxu0 0
        %2576 = vmatpush1.bf16.msra.mxu0 0
        %2577 = vmatprep.subr.bf16.mxu0 0
        %2578 = vmatpush1.bf16.msra.mxu0 %v2561
        %2579 = vmatprep.subr.bf16.mxu0 0
        %2580 = vmatpush2.bf16.msra.mxu0 0
        %2581 = vmatprep.subr.bf16.mxu0 0
        %2582 = vmatpush2.bf16.msra.mxu0 0
        %2583 = vmatprep.subr.bf16.mxu0 0
        %2584 = vmatpush2.bf16.msra.mxu0 0
        %2585 = vmatprep.subr.bf16.mxu0 0
        %2586 = vmatpush2.bf16.msra.mxu0 0
        %2587 = vmatprep.subr.bf16.mxu0 0
        %2588 = vmatpush2.bf16.msra.mxu0 0
        %2589 = vmatprep.subr.bf16.mxu0 0
        %2590 = vmatpush2.bf16.msra.mxu0 0
        %2591 = vmatprep.subr.bf16.mxu0 0
        %2592 = vmatpush2.bf16.msra.mxu0 0
        %2593 = vmatprep.subr.bf16.mxu0 0
        %2594 = vmatpush2.bf16.msra.mxu0 0
        %2595 = vmatprep.mubr.bf16.mxu0 0
        %2596 = vmatmul.mubr.bf16.gmra.mxu0 %v2558
        %v2597 = vpop.f32.mrf.mxu0
        %v2598 = vadd.f32 0.0, %v2597
        %v2599 = vpop.f32.mrf.mxu0
        %v2600 = vpop.f32.mrf.mxu0
        %v2601 = vpop.f32.mrf.mxu0
        %2602 = vdwg.mxu0
        %v2603 = vpack.c.bf16 %v2598, %v2550
        %v2605 = vsel %vm716, %v2603, 0
        %v2608 = vsel %vm1183, %v710, 0
        %2610 = vmatprep.subr.bf16.mxu0 0
        %2611 = vmatpush1.bf16.msra.mxu0 0
        %2612 = vmatprep.subr.bf16.mxu0 0
        %2613 = vmatpush1.bf16.msra.mxu0 0
        %2614 = vmatprep.subr.bf16.mxu0 0
        %2615 = vmatpush1.bf16.msra.mxu0 0
        %2616 = vmatprep.subr.bf16.mxu0 0
        %2617 = vmatpush1.bf16.msra.mxu0 0
        %2618 = vmatprep.subr.bf16.mxu0 0
        %2619 = vmatpush1.bf16.msra.mxu0 0
        %2620 = vmatprep.subr.bf16.mxu0 0
        %2621 = vmatpush1.bf16.msra.mxu0 0
        %2622 = vmatprep.subr.bf16.mxu0 0
        %2623 = vmatpush1.bf16.msra.mxu0 0
        %2624 = vmatprep.subr.bf16.mxu0 0
        %2625 = vmatpush1.bf16.msra.mxu0 %v2608
        %2626 = vmatprep.subr.bf16.mxu0 0
        %2627 = vmatpush2.bf16.msra.mxu0 0
        %2628 = vmatprep.subr.bf16.mxu0 0
        %2629 = vmatpush2.bf16.msra.mxu0 0
        %2630 = vmatprep.subr.bf16.mxu0 0
        %2631 = vmatpush2.bf16.msra.mxu0 0
        %2632 = vmatprep.subr.bf16.mxu0 0
        %2633 = vmatpush2.bf16.msra.mxu0 0
        %2634 = vmatprep.subr.bf16.mxu0 0
        %2635 = vmatpush2.bf16.msra.mxu0 0
        %2636 = vmatprep.subr.bf16.mxu0 0
        %2637 = vmatpush2.bf16.msra.mxu0 0
        %2638 = vmatprep.subr.bf16.mxu0 0
        %2639 = vmatpush2.bf16.msra.mxu0 0
        %2640 = vmatprep.subr.bf16.mxu0 0
        %2641 = vmatpush2.bf16.msra.mxu0 0
        %2642 = vmatprep.mubr.bf16.mxu0 0
        %2643 = vmatmul.mubr.bf16.gmra.mxu0 %v2605
        %v2644 = vpop.f32.mrf.mxu0
        %v2645 = vadd.f32 0.0, %v2644
        %v2646 = vpop.f32.mrf.mxu0
        %v2647 = vpop.f32.mrf.mxu0
        %v2648 = vadd.f32 0.0, %v2647
        %v2649 = vpop.f32.mrf.mxu0
        %2650 = vdwg.mxu0
        %v2651 = vadd.f32 %v2377, %v2645
        %v2652 = vadd.f32 %v2378, %v2648
        %2653 = vrot.lane.b32.xlu0 %v711, 100
        %v2654 = vpop.permute.xlu0 %2653
        %2655 = vrot.lane.b32.xlu0 %v711, 68
        %v2656 = vpop.permute.xlu0 %2655
        %v2658 = vsel %vm716, %v2654, 0
        %v2661 = vsel %vm716, %v2656, 0
        %2663 = vmatprep.subr.bf16.mxu0 0
        %2664 = vmatpush1.bf16.xpose.msra.mxu0 0
        %2665 = vmatprep.subr.bf16.mxu0 0
        %2666 = vmatpush1.bf16.xpose.msra.mxu0 0
        %2667 = vmatprep.subr.bf16.mxu0 0
        %2668 = vmatpush1.bf16.xpose.msra.mxu0 0
        %2669 = vmatprep.subr.bf16.mxu0 0
        %2670 = vmatpush1.bf16.xpose.msra.mxu0 0
        %2671 = vmatprep.subr.bf16.mxu0 0
        %2672 = vmatpush1.bf16.xpose.msra.mxu0 0
        %2673 = vmatprep.subr.bf16.mxu0 0
        %2674 = vmatpush1.bf16.xpose.msra.mxu0 0
        %2675 = vmatprep.subr.bf16.mxu0 0
        %2676 = vmatpush1.bf16.xpose.msra.mxu0 0
        %2677 = vmatprep.subr.bf16.mxu0 0
        %2678 = vmatpush1.bf16.xpose.msra.mxu0 %v2661
        %2679 = vmatprep.subr.bf16.mxu0 0
        %2680 = vmatpush2.bf16.xpose.msra.mxu0 0
        %2681 = vmatprep.subr.bf16.mxu0 0
        %2682 = vmatpush2.bf16.xpose.msra.mxu0 0
        %2683 = vmatprep.subr.bf16.mxu0 0
        %2684 = vmatpush2.bf16.xpose.msra.mxu0 0
        %2685 = vmatprep.subr.bf16.mxu0 0
        %2686 = vmatpush2.bf16.xpose.msra.mxu0 0
        %2687 = vmatprep.subr.bf16.mxu0 0
        %2688 = vmatpush2.bf16.xpose.msra.mxu0 0
        %2689 = vmatprep.subr.bf16.mxu0 0
        %2690 = vmatpush2.bf16.xpose.msra.mxu0 0
        %2691 = vmatprep.subr.bf16.mxu0 0
        %2692 = vmatpush2.bf16.xpose.msra.mxu0 0
        %2693 = vmatprep.subr.bf16.mxu0 0
        %2694 = vmatpush2.bf16.xpose.msra.mxu0 0
        %2695 = vmatprep.mubr.bf16.mxu0 0
        %2696 = vmatmul.mubr.bf16.gmra.mxu0 %v2658
        %v2697 = vpop.f32.mrf.mxu0
        %v2698 = vadd.f32 0.0, %v2697
        %v2699 = vpop.f32.mrf.mxu0
        %v2700 = vpop.f32.mrf.mxu0
        %v2701 = vpop.f32.mrf.mxu0
        %2702 = vdwg.mxu0
        %2703 = vrot.lane.b32.xlu0 %v712, 100
        %v2704 = vpop.permute.xlu0 %2703
        %2705 = vrot.lane.b32.xlu0 %v712, 68
        %v2706 = vpop.permute.xlu0 %2705
        %v2708 = vsel %vm716, %v2704, 0
        %v2711 = vsel %vm716, %v2706, 0
        %2713 = vmatprep.subr.bf16.mxu0 0
        %2714 = vmatpush1.bf16.xpose.msra.mxu0 0
        %2715 = vmatprep.subr.bf16.mxu0 0
        %2716 = vmatpush1.bf16.xpose.msra.mxu0 0
        %2717 = vmatprep.subr.bf16.mxu0 0
        %2718 = vmatpush1.bf16.xpose.msra.mxu0 0
        %2719 = vmatprep.subr.bf16.mxu0 0
        %2720 = vmatpush1.bf16.xpose.msra.mxu0 0
        %2721 = vmatprep.subr.bf16.mxu0 0
        %2722 = vmatpush1.bf16.xpose.msra.mxu0 0
        %2723 = vmatprep.subr.bf16.mxu0 0
        %2724 = vmatpush1.bf16.xpose.msra.mxu0 0
        %2725 = vmatprep.subr.bf16.mxu0 0
        %2726 = vmatpush1.bf16.xpose.msra.mxu0 0
        %2727 = vmatprep.subr.bf16.mxu0 0
        %2728 = vmatpush1.bf16.xpose.msra.mxu0 %v2711
        %2729 = vmatprep.subr.bf16.mxu0 0
        %2730 = vmatpush2.bf16.xpose.msra.mxu0 0
        %2731 = vmatprep.subr.bf16.mxu0 0
        %2732 = vmatpush2.bf16.xpose.msra.mxu0 0
        %2733 = vmatprep.subr.bf16.mxu0 0
        %2734 = vmatpush2.bf16.xpose.msra.mxu0 0
        %2735 = vmatprep.subr.bf16.mxu0 0
        %2736 = vmatpush2.bf16.xpose.msra.mxu0 0
        %2737 = vmatprep.subr.bf16.mxu0 0
        %2738 = vmatpush2.bf16.xpose.msra.mxu0 0
        %2739 = vmatprep.subr.bf16.mxu0 0
        %2740 = vmatpush2.bf16.xpose.msra.mxu0 0
        %2741 = vmatprep.subr.bf16.mxu0 0
        %2742 = vmatpush2.bf16.xpose.msra.mxu0 0
        %2743 = vmatprep.subr.bf16.mxu0 0
        %2744 = vmatpush2.bf16.xpose.msra.mxu0 0
        %2745 = vmatprep.mubr.bf16.mxu0 0
        %2746 = vmatmul.mubr.bf16.gmra.mxu0 %v2708
        %v2747 = vpop.f32.mrf.mxu0
        %v2748 = vadd.f32 0.0, %v2747
        %v2749 = vpop.f32.mrf.mxu0
        %v2750 = vpop.f32.mrf.mxu0
        %v2751 = vpop.f32.mrf.mxu0
        %2752 = vdwg.mxu0
        %v2753 = vmul.f32 %v2698, 0.5
        %v2754 = vmul.f32 %v2748, 0.5
        %v2755 = vadd.f32 %v2753, %v819
        %v2756 = vadd.f32 %v2754, %v823
        %v2757 = vsel %vm828, %v2755, -inf
        %2758 = vmax.xlane.f32.xlu0 %v2757
        %v2759 = vpop.xlane.xlu0 %2758
        %v2760 = vsel %vm828, %v2756, -inf
        %2761 = vmax.xlane.f32.xlu0 %v2760
        %v2762 = vpop.xlane.xlu0 %2761
        %v2763 = vsub.f32 %v2755, %v2759
        %v2764 = vsub.f32 %v2756, %v2762
        %v2765 = vmul.f32 %v2763, 1.442695
        %v2766 = vpow.pop %v2765
        %v2767 = vmul.f32 %v2764, 1.442695
        %v2768 = vpow.pop %v2767
        %v2769 = vsel %vm828, %v2766, 0.0
        %2770 = vadd.xlane.f32.xlu0 %v2769
        %v2771 = vpop.xlane.xlu0 %2770
        %v2772 = vsel %vm828, %v2768, 0.0
        %2773 = vadd.xlane.f32.xlu0 %v2772
        %v2774 = vpop.xlane.xlu0 %2773
        %v2775 = vrcp.pop %v2771
        %v2776 = vrcp.pop %v2774
        %v2777 = vmul.f32 %v2766, %v2775
        %v2778 = vmul.f32 %v2768, %v2776
        %v2779 = vpack.c.bf16 %v2777, %v2777
        %v2780 = vpack.c.bf16 %v2778, %v2778
        %2781 = vrot.lane.b32.xlu0 %v711, 36
        %v2782 = vpop.permute.xlu0 %2781
        %v2784 = vsel %vm828, %v2779, 0
        %v2787 = vsel %vm858, %v2782, 0
        %2789 = vmatprep.subr.bf16.mxu0 0
        %2790 = vmatpush1.bf16.msra.mxu0 0
        %2791 = vmatprep.subr.bf16.mxu0 0
        %2792 = vmatpush1.bf16.msra.mxu0 0
        %2793 = vmatprep.subr.bf16.mxu0 0
        %2794 = vmatpush1.bf16.msra.mxu0 0
        %2795 = vmatprep.subr.bf16.mxu0 0
        %2796 = vmatpush1.bf16.msra.mxu0 0
        %2797 = vmatprep.subr.bf16.mxu0 0
        %2798 = vmatpush1.bf16.msra.mxu0 0
        %2799 = vmatprep.subr.bf16.mxu0 0
        %2800 = vmatpush1.bf16.msra.mxu0 0
        %2801 = vmatprep.subr.bf16.mxu0 0
        %2802 = vmatpush1.bf16.msra.mxu0 0
        %2803 = vmatprep.subr.bf16.mxu0 0
        %2804 = vmatpush1.bf16.msra.mxu0 %v2787
        %2805 = vmatprep.subr.bf16.mxu0 0
        %2806 = vmatpush2.bf16.msra.mxu0 0
        %2807 = vmatprep.subr.bf16.mxu0 0
        %2808 = vmatpush2.bf16.msra.mxu0 0
        %2809 = vmatprep.subr.bf16.mxu0 0
        %2810 = vmatpush2.bf16.msra.mxu0 0
        %2811 = vmatprep.subr.bf16.mxu0 0
        %2812 = vmatpush2.bf16.msra.mxu0 0
        %2813 = vmatprep.subr.bf16.mxu0 0
        %2814 = vmatpush2.bf16.msra.mxu0 0
        %2815 = vmatprep.subr.bf16.mxu0 0
        %2816 = vmatpush2.bf16.msra.mxu0 0
        %2817 = vmatprep.subr.bf16.mxu0 0
        %2818 = vmatpush2.bf16.msra.mxu0 0
        %2819 = vmatprep.subr.bf16.mxu0 0
        %2820 = vmatpush2.bf16.msra.mxu0 0
        %2821 = vmatprep.mubr.bf16.mxu0 0
        %2822 = vmatmul.mubr.bf16.gmra.mxu0 %v2784
        %v2823 = vpop.f32.mrf.mxu0
        %v2824 = vadd.f32 0.0, %v2823
        %v2825 = vpop.f32.mrf.mxu0
        %v2826 = vpop.f32.mrf.mxu0
        %v2827 = vpop.f32.mrf.mxu0
        %2828 = vdwg.mxu0
        %2829 = vrot.lane.b32.xlu0 %v712, 36
        %v2830 = vpop.permute.xlu0 %2829
        %v2832 = vsel %vm828, %v2780, 0
        %v2835 = vsel %vm858, %v2830, 0
        %2837 = vmatprep.subr.bf16.mxu0 0
        %2838 = vmatpush1.bf16.msra.mxu0 0
        %2839 = vmatprep.subr.bf16.mxu0 0
        %2840 = vmatpush1.bf16.msra.mxu0 0
        %2841 = vmatprep.subr.bf16.mxu0 0
        %2842 = vmatpush1.bf16.msra.mxu0 0
        %2843 = vmatprep.subr.bf16.mxu0 0
        %2844 = vmatpush1.bf16.msra.mxu0 0
        %2845 = vmatprep.subr.bf16.mxu0 0
        %2846 = vmatpush1.bf16.msra.mxu0 0
        %2847 = vmatprep.subr.bf16.mxu0 0
        %2848 = vmatpush1.bf16.msra.mxu0 0
        %2849 = vmatprep.subr.bf16.mxu0 0
        %2850 = vmatpush1.bf16.msra.mxu0 0
        %2851 = vmatprep.subr.bf16.mxu0 0
        %2852 = vmatpush1.bf16.msra.mxu0 %v2835
        %2853 = vmatprep.subr.bf16.mxu0 0
        %2854 = vmatpush2.bf16.msra.mxu0 0
        %2855 = vmatprep.subr.bf16.mxu0 0
        %2856 = vmatpush2.bf16.msra.mxu0 0
        %2857 = vmatprep.subr.bf16.mxu0 0
        %2858 = vmatpush2.bf16.msra.mxu0 0
        %2859 = vmatprep.subr.bf16.mxu0 0
        %2860 = vmatpush2.bf16.msra.mxu0 0
        %2861 = vmatprep.subr.bf16.mxu0 0
        %2862 = vmatpush2.bf16.msra.mxu0 0
        %2863 = vmatprep.subr.bf16.mxu0 0
        %2864 = vmatpush2.bf16.msra.mxu0 0
        %2865 = vmatprep.subr.bf16.mxu0 0
        %2866 = vmatpush2.bf16.msra.mxu0 0
        %2867 = vmatprep.subr.bf16.mxu0 0
        %2868 = vmatpush2.bf16.msra.mxu0 0
        %2869 = vmatprep.mubr.bf16.mxu0 0
        %2870 = vmatmul.mubr.bf16.gmra.mxu0 %v2832
        %v2871 = vpop.f32.mrf.mxu0
        %v2872 = vadd.f32 0.0, %v2871
        %v2873 = vpop.f32.mrf.mxu0
        %v2874 = vpop.f32.mrf.mxu0
        %v2875 = vpop.f32.mrf.mxu0
        %2876 = vdwg.mxu0
        %v2877 = vpack.c.bf16 %v2872, %v2824
        %v2879 = vunpack.c.l.b16 %v710
        %v2880 = vpack.c.b16 %v2879, %v2879
        %v2881 = vrot.slane %v2880, 2
        %v2883 = vsel %vm716, %v2877, 0
        %v2886 = vsel %vm1183, %v2881, 0
        %2888 = vmatprep.subr.bf16.mxu0 0
        %2889 = vmatpush1.bf16.msra.mxu0 0
        %2890 = vmatprep.subr.bf16.mxu0 0
        %2891 = vmatpush1.bf16.msra.mxu0 0
        %2892 = vmatprep.subr.bf16.mxu0 0
        %2893 = vmatpush1.bf16.msra.mxu0 0
        %2894 = vmatprep.subr.bf16.mxu0 0
        %2895 = vmatpush1.bf16.msra.mxu0 0
        %2896 = vmatprep.subr.bf16.mxu0 0
        %2897 = vmatpush1.bf16.msra.mxu0 0
        %2898 = vmatprep.subr.bf16.mxu0 0
        %2899 = vmatpush1.bf16.msra.mxu0 0
        %2900 = vmatprep.subr.bf16.mxu0 0
        %2901 = vmatpush1.bf16.msra.mxu0 0
        %2902 = vmatprep.subr.bf16.mxu0 0
        %2903 = vmatpush1.bf16.msra.mxu0 %v2886
        %2904 = vmatprep.subr.bf16.mxu0 0
        %2905 = vmatpush2.bf16.msra.mxu0 0
        %2906 = vmatprep.subr.bf16.mxu0 0
        %2907 = vmatpush2.bf16.msra.mxu0 0
        %2908 = vmatprep.subr.bf16.mxu0 0
        %2909 = vmatpush2.bf16.msra.mxu0 0
        %2910 = vmatprep.subr.bf16.mxu0 0
        %2911 = vmatpush2.bf16.msra.mxu0 0
        %2912 = vmatprep.subr.bf16.mxu0 0
        %2913 = vmatpush2.bf16.msra.mxu0 0
        %2914 = vmatprep.subr.bf16.mxu0 0
        %2915 = vmatpush2.bf16.msra.mxu0 0
        %2916 = vmatprep.subr.bf16.mxu0 0
        %2917 = vmatpush2.bf16.msra.mxu0 0
        %2918 = vmatprep.subr.bf16.mxu0 0
        %2919 = vmatpush2.bf16.msra.mxu0 0
        %2920 = vmatprep.mubr.bf16.mxu0 0
        %2921 = vmatmul.mubr.bf16.gmra.mxu0 %v2883
        %v2922 = vpop.f32.mrf.mxu0
        %v2923 = vadd.f32 0.0, %v2922
        %v2924 = vpop.f32.mrf.mxu0
        %v2925 = vpop.f32.mrf.mxu0
        %v2926 = vadd.f32 0.0, %v2925
        %v2927 = vpop.f32.mrf.mxu0
        %2928 = vdwg.mxu0
        %v2929 = vadd.f32 %v2651, %v2923
        %v2930 = vadd.f32 %v2652, %v2926
        %v2931 = vld [vmem:[%s554] sm:$0x1]
        %v2933 = vlaneseq
        %v2934 = vshrl.u32 %v2933, 7
        %v2935 = vsub.s32 0, %v2934
        %v2936 = vrot.slane %v2931, %v2935
        %v2938 = vadd.f32 %v2929, %v2936
        %v2939 = vadd.f32 %v2930, %v2936
        %v2940 = vld [vmem:[%s558] sm:$0x3]
        %v2941 = vadd.f32 %v630, %v2938
        %v2942 = vadd.f32 %v631, %v2939
        %v2943 = vsel %vm662, %v2941, 0.0
        %2944 = vadd.xlane.f32.xlu0 %v2943
        %v2945 = vpop.xlane.xlu0 %2944
        %v2946 = vsel %vm662, %v2942, 0.0
        %2947 = vadd.xlane.f32.xlu0 %v2946
        %v2948 = vpop.xlane.xlu0 %2947
        %v2949 = vrcp.pop 32.0
        %v2950 = vmul.f32 %v2945, %v2949
        %v2951 = vmul.f32 %v2948, %v2949
        %v2952 = vsub.f32 %v2941, %v2950
        %v2953 = vsub.f32 %v2942, %v2951
        %v2954 = vmul.f32 %v2952, %v2952
        %v2955 = vmul.f32 %v2953, %v2953
        %v2956 = vsel %vm662, %v2954, 0.0
        %2957 = vadd.xlane.f32.xlu0 %v2956
        %v2958 = vpop.xlane.xlu0 %2957
        %v2959 = vsel %vm662, %v2955, 0.0
        %2960 = vadd.xlane.f32.xlu0 %v2959
        %v2961 = vpop.xlane.xlu0 %2960
        %v2962 = vmul.f32 %v2958, %v2949
        %v2963 = vmul.f32 %v2961, %v2949
        %v2964 = vadd.f32 %v2962, 1e-05
        %v2965 = vadd.f32 %v2963, 1e-05
        %v2966 = vrsqrt.pop %v2964
        %v2967 = vrsqrt.pop %v2965
        %v2968 = vmul.f32 %v2952, %v2966
        %v2969 = vmul.f32 %v2953, %v2967
        %v2970 = vlaneseq
        %v2971 = vshrl.u32 %v2970, 7
        %v2972 = vsub.s32 0, %v2971
        %v2973 = vrot.slane %v2940, %v2972
        %v2974 = vmul.f32 %v2968, %v2973
        %v2975 = vmul.f32 %v2969, %v2973
        %v2976 = vlaneseq
        %v2977 = vshrl.u32 %v2976, 7
        %v2978 = vsub.s32 1, %v2977
        %v2979 = vrot.slane %v2940, %v2978
        %v2980 = vadd.f32 %v2974, %v2979
        %v2981 = vadd.f32 %v2975, %v2979
        %v2982 = vpack.c.bf16 %v2981, %v2980
        %v2983 = vld [vmem:[%s563] sm:$0xff]
        %v2984 = vld [vmem:[%s563 + $0x8] sm:$0xff]
        %v2985 = vld [vmem:[%s563 + $0x10] sm:$0xff]
        %v2986 = vld [vmem:[%s563 + $0x18] sm:$0xff]
        %v2987 = vld [vmem:[%s563 + $0x20] sm:$0xff]
        %v2988 = vld [vmem:[%s563 + $0x28] sm:$0xff]
        %v2989 = vld [vmem:[%s563 + $0x30] sm:$0xff]
        %v2990 = vld [vmem:[%s563 + $0x38] sm:$0xff]
        %v2991 = vld [vmem:[%s563 + $0x40] sm:$0xff]
        %v2992 = vld [vmem:[%s563 + $0x48] sm:$0xff]
        %v2993 = vld [vmem:[%s563 + $0x50] sm:$0xff]
        %v2994 = vld [vmem:[%s563 + $0x58] sm:$0xff]
        %v2995 = vld [vmem:[%s563 + $0x60] sm:$0xff]
        %v2996 = vld [vmem:[%s563 + $0x68] sm:$0xff]
        %v2997 = vld [vmem:[%s563 + $0x70] sm:$0xff]
        %v2998 = vld [vmem:[%s563 + $0x78] sm:$0xff]
        %v2999 = vld [vmem:[%s567] sm:$0xff]
        %v3001 = vlaneseq
        %v3002 = vshrl.u32 %v3001, 7
        %v3003 = vsub.s32 0, %v3002
        %v3004 = vrot.slane %v2999, %v3003
        %v3005 = vlaneseq
        %v3006 = vshrl.u32 %v3005, 7
        %v3007 = vsub.s32 1, %v3006
        %v3008 = vrot.slane %v2999, %v3007
        %v3009 = vlaneseq
        %v3010 = vshrl.u32 %v3009, 7
        %v3011 = vsub.s32 2, %v3010
        %v3012 = vrot.slane %v2999, %v3011
        %v3013 = vlaneseq
        %v3014 = vshrl.u32 %v3013, 7
        %v3015 = vsub.s32 3, %v3014
        %v3016 = vrot.slane %v2999, %v3015
        %v3017 = vlaneseq
        %v3018 = vshrl.u32 %v3017, 7
        %v3019 = vsub.s32 4, %v3018
        %v3020 = vrot.slane %v2999, %v3019
        %v3021 = vlaneseq
        %v3022 = vshrl.u32 %v3021, 7
        %v3023 = vsub.s32 5, %v3022
        %v3024 = vrot.slane %v2999, %v3023
        %v3025 = vlaneseq
        %v3026 = vshrl.u32 %v3025, 7
        %v3027 = vsub.s32 6, %v3026
        %v3028 = vrot.slane %v2999, %v3027
        %v3029 = vlaneseq
        %v3030 = vshrl.u32 %v3029, 7
        %v3031 = vsub.s32 7, %v3030
        %v3032 = vrot.slane %v2999, %v3031
        %v3057 = vunpack.c.l.b16 %v2983
        %v3058 = vunpack.c.h.b16 %v2983
        %v3059 = vunpack.c.l.b16 %v2984
        %v3060 = vunpack.c.h.b16 %v2984
        %v3061 = vunpack.c.l.b16 %v2985
        %v3062 = vunpack.c.h.b16 %v2985
        %v3063 = vunpack.c.l.b16 %v2986
        %v3064 = vunpack.c.h.b16 %v2986
        %v3065 = vunpack.c.l.b16 %v2987
        %v3066 = vunpack.c.h.b16 %v2987
        %v3067 = vunpack.c.l.b16 %v2988
        %v3068 = vunpack.c.h.b16 %v2988
        %v3069 = vunpack.c.l.b16 %v2989
        %v3070 = vunpack.c.h.b16 %v2989
        %v3071 = vunpack.c.l.b16 %v2990
        %v3072 = vunpack.c.h.b16 %v2990
        %v3073 = vunpack.c.l.b16 %v2991
        %v3074 = vunpack.c.h.b16 %v2991
        %v3075 = vunpack.c.l.b16 %v2992
        %v3076 = vunpack.c.h.b16 %v2992
        %v3077 = vunpack.c.l.b16 %v2993
        %v3078 = vunpack.c.h.b16 %v2993
        %v3079 = vunpack.c.l.b16 %v2994
        %v3080 = vunpack.c.h.b16 %v2994
        %v3081 = vunpack.c.l.b16 %v2995
        %v3082 = vunpack.c.h.b16 %v2995
        %v3083 = vunpack.c.l.b16 %v2996
        %v3084 = vunpack.c.h.b16 %v2996
        %v3085 = vunpack.c.l.b16 %v2997
        %v3086 = vunpack.c.h.b16 %v2997
        %v3087 = vunpack.c.l.b16 %v2998
        %v3088 = vunpack.c.h.b16 %v2998
        %v3089 = vpack.c.b16 %v3065, %v3057
        %v3090 = vpack.c.b16 %v3066, %v3058
        %v3091 = vpack.c.b16 %v3067, %v3059
        %v3092 = vpack.c.b16 %v3068, %v3060
        %v3093 = vpack.c.b16 %v3069, %v3061
        %v3094 = vpack.c.b16 %v3070, %v3062
        %v3095 = vpack.c.b16 %v3071, %v3063
        %v3096 = vpack.c.b16 %v3072, %v3064
        %v3097 = vpack.c.b16 %v3081, %v3073
        %v3098 = vpack.c.b16 %v3082, %v3074
        %v3099 = vpack.c.b16 %v3083, %v3075
        %v3100 = vpack.c.b16 %v3084, %v3076
        %v3101 = vpack.c.b16 %v3085, %v3077
        %v3102 = vpack.c.b16 %v3086, %v3078
        %v3103 = vpack.c.b16 %v3087, %v3079
        %v3104 = vpack.c.b16 %v3088, %v3080
        %v3122 = vsel %vm662, %v2982, 0
        %3124 = vmatprep.subr.bf16.mxu0 0
        %3125 = vmatpush1.bf16.msra.mxu0 0
        %3126 = vmatprep.subr.bf16.mxu0 0
        %3127 = vmatpush1.bf16.msra.mxu0 0
        %3128 = vmatprep.subr.bf16.mxu0 0
        %3129 = vmatpush1.bf16.msra.mxu0 0
        %3130 = vmatprep.subr.bf16.mxu0 0
        %3131 = vmatpush1.bf16.msra.mxu0 0
        %3132 = vmatprep.subr.bf16.mxu0 0
        %3133 = vmatpush1.bf16.msra.mxu0 0
        %3134 = vmatprep.subr.bf16.mxu0 0
        %3135 = vmatpush1.bf16.msra.mxu0 0
        %3136 = vmatprep.subr.bf16.mxu0 %v3098
        %3137 = vmatpush1.bf16.msra.mxu0 %v3097
        %3138 = vmatprep.subr.bf16.mxu0 %v3090
        %3139 = vmatpush1.bf16.msra.mxu0 %v3089
        %3140 = vmatprep.subr.bf16.mxu0 0
        %3141 = vmatpush2.bf16.msra.mxu0 0
        %3142 = vmatprep.subr.bf16.mxu0 0
        %3143 = vmatpush2.bf16.msra.mxu0 0
        %3144 = vmatprep.subr.bf16.mxu0 0
        %3145 = vmatpush2.bf16.msra.mxu0 0
        %3146 = vmatprep.subr.bf16.mxu0 0
        %3147 = vmatpush2.bf16.msra.mxu0 0
        %3148 = vmatprep.subr.bf16.mxu0 0
        %3149 = vmatpush2.bf16.msra.mxu0 0
        %3150 = vmatprep.subr.bf16.mxu0 0
        %3151 = vmatpush2.bf16.msra.mxu0 0
        %3152 = vmatprep.subr.bf16.mxu0 0
        %3153 = vmatpush2.bf16.msra.mxu0 0
        %3154 = vmatprep.subr.bf16.mxu0 0
        %3155 = vmatpush2.bf16.msra.mxu0 0
        %3156 = vmatprep.mubr.bf16.mxu0 0
        %3157 = vmatmul.mubr.bf16.gmra.mxu0 %v3122
        %v3158 = vpop.f32.mrf.mxu0
        %v3159 = vadd.f32 %v3004, %v3158
        %v3160 = vpop.f32.mrf.mxu0
        %v3161 = vadd.f32 %v3008, %v3160
        %v3162 = vpop.f32.mrf.mxu0
        %v3163 = vadd.f32 %v3004, %v3162
        %v3164 = vpop.f32.mrf.mxu0
        %v3165 = vadd.f32 %v3008, %v3164
        %3166 = vdwg.mxu0
        %3167 = vmatprep.subr.bf16.mxu0 0
        %3168 = vmatpush1.bf16.msra.mxu0 0
        %3169 = vmatprep.subr.bf16.mxu0 0
        %3170 = vmatpush1.bf16.msra.mxu0 0
        %3171 = vmatprep.subr.bf16.mxu0 0
        %3172 = vmatpush1.bf16.msra.mxu0 0
        %3173 = vmatprep.subr.bf16.mxu0 0
        %3174 = vmatpush1.bf16.msra.mxu0 0
        %3175 = vmatprep.subr.bf16.mxu0 0
        %3176 = vmatpush1.bf16.msra.mxu0 0
        %3177 = vmatprep.subr.bf16.mxu0 0
        %3178 = vmatpush1.bf16.msra.mxu0 0
        %3179 = vmatprep.subr.bf16.mxu0 %v3100
        %3180 = vmatpush1.bf16.msra.mxu0 %v3099
        %3181 = vmatprep.subr.bf16.mxu0 %v3092
        %3182 = vmatpush1.bf16.msra.mxu0 %v3091
        %3183 = vmatprep.subr.bf16.mxu0 0
        %3184 = vmatpush2.bf16.msra.mxu0 0
        %3185 = vmatprep.subr.bf16.mxu0 0
        %3186 = vmatpush2.bf16.msra.mxu0 0
        %3187 = vmatprep.subr.bf16.mxu0 0
        %3188 = vmatpush2.bf16.msra.mxu0 0
        %3189 = vmatprep.subr.bf16.mxu0 0
        %3190 = vmatpush2.bf16.msra.mxu0 0
        %3191 = vmatprep.subr.bf16.mxu0 0
        %3192 = vmatpush2.bf16.msra.mxu0 0
        %3193 = vmatprep.subr.bf16.mxu0 0
        %3194 = vmatpush2.bf16.msra.mxu0 0
        %3195 = vmatprep.subr.bf16.mxu0 0
        %3196 = vmatpush2.bf16.msra.mxu0 0
        %3197 = vmatprep.subr.bf16.mxu0 0
        %3198 = vmatpush2.bf16.msra.mxu0 0
        %3199 = vmatprep.mubr.bf16.mxu0 0
        %3200 = vmatmul.mubr.bf16.gmra.mxu0 %v3122
        %v3201 = vpop.f32.mrf.mxu0
        %v3202 = vadd.f32 %v3012, %v3201
        %v3203 = vpop.f32.mrf.mxu0
        %v3204 = vadd.f32 %v3016, %v3203
        %v3205 = vpop.f32.mrf.mxu0
        %v3206 = vadd.f32 %v3012, %v3205
        %v3207 = vpop.f32.mrf.mxu0
        %v3208 = vadd.f32 %v3016, %v3207
        %3209 = vdwg.mxu0
        %3210 = vmatprep.subr.bf16.mxu0 0
        %3211 = vmatpush1.bf16.msra.mxu0 0
        %3212 = vmatprep.subr.bf16.mxu0 0
        %3213 = vmatpush1.bf16.msra.mxu0 0
        %3214 = vmatprep.subr.bf16.mxu0 0
        %3215 = vmatpush1.bf16.msra.mxu0 0
        %3216 = vmatprep.subr.bf16.mxu0 0
        %3217 = vmatpush1.bf16.msra.mxu0 0
        %3218 = vmatprep.subr.bf16.mxu0 0
        %3219 = vmatpush1.bf16.msra.mxu0 0
        %3220 = vmatprep.subr.bf16.mxu0 0
        %3221 = vmatpush1.bf16.msra.mxu0 0
        %3222 = vmatprep.subr.bf16.mxu0 %v3102
        %3223 = vmatpush1.bf16.msra.mxu0 %v3101
        %3224 = vmatprep.subr.bf16.mxu0 %v3094
        %3225 = vmatpush1.bf16.msra.mxu0 %v3093
        %3226 = vmatprep.subr.bf16.mxu0 0
        %3227 = vmatpush2.bf16.msra.mxu0 0
        %3228 = vmatprep.subr.bf16.mxu0 0
        %3229 = vmatpush2.bf16.msra.mxu0 0
        %3230 = vmatprep.subr.bf16.mxu0 0
        %3231 = vmatpush2.bf16.msra.mxu0 0
        %3232 = vmatprep.subr.bf16.mxu0 0
        %3233 = vmatpush2.bf16.msra.mxu0 0
        %3234 = vmatprep.subr.bf16.mxu0 0
        %3235 = vmatpush2.bf16.msra.mxu0 0
        %3236 = vmatprep.subr.bf16.mxu0 0
        %3237 = vmatpush2.bf16.msra.mxu0 0
        %3238 = vmatprep.subr.bf16.mxu0 0
        %3239 = vmatpush2.bf16.msra.mxu0 0
        %3240 = vmatprep.subr.bf16.mxu0 0
        %3241 = vmatpush2.bf16.msra.mxu0 0
        %3242 = vmatprep.mubr.bf16.mxu0 0
        %3243 = vmatmul.mubr.bf16.gmra.mxu0 %v3122
        %v3244 = vpop.f32.mrf.mxu0
        %v3245 = vadd.f32 %v3020, %v3244
        %v3246 = vpop.f32.mrf.mxu0
        %v3247 = vadd.f32 %v3024, %v3246
        %v3248 = vpop.f32.mrf.mxu0
        %v3249 = vadd.f32 %v3020, %v3248
        %v3250 = vpop.f32.mrf.mxu0
        %v3251 = vadd.f32 %v3024, %v3250
        %3252 = vdwg.mxu0
        %3253 = vmatprep.subr.bf16.mxu0 0
        %3254 = vmatpush1.bf16.msra.mxu0 0
        %3255 = vmatprep.subr.bf16.mxu0 0
        %3256 = vmatpush1.bf16.msra.mxu0 0
        %3257 = vmatprep.subr.bf16.mxu0 0
        %3258 = vmatpush1.bf16.msra.mxu0 0
        %3259 = vmatprep.subr.bf16.mxu0 0
        %3260 = vmatpush1.bf16.msra.mxu0 0
        %3261 = vmatprep.subr.bf16.mxu0 0
        %3262 = vmatpush1.bf16.msra.mxu0 0
        %3263 = vmatprep.subr.bf16.mxu0 0
        %3264 = vmatpush1.bf16.msra.mxu0 0
        %3265 = vmatprep.subr.bf16.mxu0 %v3104
        %3266 = vmatpush1.bf16.msra.mxu0 %v3103
        %3267 = vmatprep.subr.bf16.mxu0 %v3096
        %3268 = vmatpush1.bf16.msra.mxu0 %v3095
        %3269 = vmatprep.subr.bf16.mxu0 0
        %3270 = vmatpush2.bf16.msra.mxu0 0
        %3271 = vmatprep.subr.bf16.mxu0 0
        %3272 = vmatpush2.bf16.msra.mxu0 0
        %3273 = vmatprep.subr.bf16.mxu0 0
        %3274 = vmatpush2.bf16.msra.mxu0 0
        %3275 = vmatprep.subr.bf16.mxu0 0
        %3276 = vmatpush2.bf16.msra.mxu0 0
        %3277 = vmatprep.subr.bf16.mxu0 0
        %3278 = vmatpush2.bf16.msra.mxu0 0
        %3279 = vmatprep.subr.bf16.mxu0 0
        %3280 = vmatpush2.bf16.msra.mxu0 0
        %3281 = vmatprep.subr.bf16.mxu0 0
        %3282 = vmatpush2.bf16.msra.mxu0 0
        %3283 = vmatprep.subr.bf16.mxu0 0
        %3284 = vmatpush2.bf16.msra.mxu0 0
        %3285 = vmatprep.mubr.bf16.mxu0 0
        %3286 = vmatmul.mubr.bf16.gmra.mxu0 %v3122
        %v3287 = vpop.f32.mrf.mxu0
        %v3288 = vadd.f32 %v3028, %v3287
        %v3289 = vpop.f32.mrf.mxu0
        %v3290 = vadd.f32 %v3032, %v3289
        %v3291 = vpop.f32.mrf.mxu0
        %v3292 = vadd.f32 %v3028, %v3291
        %v3293 = vpop.f32.mrf.mxu0
        %v3294 = vadd.f32 %v3032, %v3293
        %3295 = vdwg.mxu0
        %v3296 = vmul.f32 %v3159, 0.5
        %v3297 = vmul.f32 %v3161, 0.5
        %v3298 = vmul.f32 %v3202, 0.5
        %v3299 = vmul.f32 %v3204, 0.5
        %v3300 = vmul.f32 %v3245, 0.5
        %v3301 = vmul.f32 %v3247, 0.5
        %v3302 = vmul.f32 %v3288, 0.5
        %v3303 = vmul.f32 %v3290, 0.5
        %v3304 = vmul.f32 %v3163, 0.5
        %v3305 = vmul.f32 %v3165, 0.5
        %v3306 = vmul.f32 %v3206, 0.5
        %v3307 = vmul.f32 %v3208, 0.5
        %v3308 = vmul.f32 %v3249, 0.5
        %v3309 = vmul.f32 %v3251, 0.5
        %v3310 = vmul.f32 %v3292, 0.5
        %v3311 = vmul.f32 %v3294, 0.5
        %v3312 = vmul.f32 %v3159, 0.70710677
        %v3313 = vmul.f32 %v3161, 0.70710677
        %v3314 = vmul.f32 %v3202, 0.70710677
        %v3315 = vmul.f32 %v3204, 0.70710677
        %v3316 = vmul.f32 %v3245, 0.70710677
        %v3317 = vmul.f32 %v3247, 0.70710677
        %v3318 = vmul.f32 %v3288, 0.70710677
        %v3319 = vmul.f32 %v3290, 0.70710677
        %v3320 = vmul.f32 %v3163, 0.70710677
        %v3321 = vmul.f32 %v3165, 0.70710677
        %v3322 = vmul.f32 %v3206, 0.70710677
        %v3323 = vmul.f32 %v3208, 0.70710677
        %v3324 = vmul.f32 %v3249, 0.70710677
        %v3325 = vmul.f32 %v3251, 0.70710677
        %v3326 = vmul.f32 %v3292, 0.70710677
        %v3327 = vmul.f32 %v3294, 0.70710677
        %v3328 = verf.f32.pop %v3312
        %v3329 = verf.f32.pop %v3313
        %v3330 = verf.f32.pop %v3314
        %v3331 = verf.f32.pop %v3315
        %v3332 = verf.f32.pop %v3316
        %v3333 = verf.f32.pop %v3317
        %v3334 = verf.f32.pop %v3318
        %v3335 = verf.f32.pop %v3319
        %v3336 = verf.f32.pop %v3320
        %v3337 = verf.f32.pop %v3321
        %v3338 = verf.f32.pop %v3322
        %v3339 = verf.f32.pop %v3323
        %v3340 = verf.f32.pop %v3324
        %v3341 = verf.f32.pop %v3325
        %v3342 = verf.f32.pop %v3326
        %v3343 = verf.f32.pop %v3327
        %v3344 = vadd.f32 %v3328, 1.0
        %v3345 = vadd.f32 %v3329, 1.0
        %v3346 = vadd.f32 %v3330, 1.0
        %v3347 = vadd.f32 %v3331, 1.0
        %v3348 = vadd.f32 %v3332, 1.0
        %v3349 = vadd.f32 %v3333, 1.0
        %v3350 = vadd.f32 %v3334, 1.0
        %v3351 = vadd.f32 %v3335, 1.0
        %v3352 = vadd.f32 %v3336, 1.0
        %v3353 = vadd.f32 %v3337, 1.0
        %v3354 = vadd.f32 %v3338, 1.0
        %v3355 = vadd.f32 %v3339, 1.0
        %v3356 = vadd.f32 %v3340, 1.0
        %v3357 = vadd.f32 %v3341, 1.0
        %v3358 = vadd.f32 %v3342, 1.0
        %v3359 = vadd.f32 %v3343, 1.0
        %v3360 = vmul.f32 %v3296, %v3344
        %v3361 = vmul.f32 %v3297, %v3345
        %v3362 = vmul.f32 %v3298, %v3346
        %v3363 = vmul.f32 %v3299, %v3347
        %v3364 = vmul.f32 %v3300, %v3348
        %v3365 = vmul.f32 %v3301, %v3349
        %v3366 = vmul.f32 %v3302, %v3350
        %v3367 = vmul.f32 %v3303, %v3351
        %v3368 = vmul.f32 %v3304, %v3352
        %v3369 = vmul.f32 %v3305, %v3353
        %v3370 = vmul.f32 %v3306, %v3354
        %v3371 = vmul.f32 %v3307, %v3355
        %v3372 = vmul.f32 %v3308, %v3356
        %v3373 = vmul.f32 %v3309, %v3357
        %v3374 = vmul.f32 %v3310, %v3358
        %v3375 = vmul.f32 %v3311, %v3359
        %v3376 = vpack.c.bf16 %v3368, %v3360
        %v3377 = vpack.c.bf16 %v3369, %v3361
        %v3378 = vpack.c.bf16 %v3370, %v3362
        %v3379 = vpack.c.bf16 %v3371, %v3363
        %v3380 = vpack.c.bf16 %v3372, %v3364
        %v3381 = vpack.c.bf16 %v3373, %v3365
        %v3382 = vpack.c.bf16 %v3374, %v3366
        %v3383 = vpack.c.bf16 %v3375, %v3367
        %v3384 = vld [vmem:[%s572] sm:$0xf]
        %v3385 = vld [vmem:[%s572 + $0x4] sm:$0xf]
        %v3386 = vld [vmem:[%s572 + $0x8] sm:$0xf]
        %v3387 = vld [vmem:[%s572 + $0xc] sm:$0xf]
        %v3388 = vld [vmem:[%s572 + $0x10] sm:$0xf]
        %v3389 = vld [vmem:[%s572 + $0x14] sm:$0xf]
        %v3390 = vld [vmem:[%s572 + $0x18] sm:$0xf]
        %v3391 = vld [vmem:[%s572 + $0x1c] sm:$0xf]
        %v3392 = vld [vmem:[%s572 + $0x20] sm:$0xf]
        %v3393 = vld [vmem:[%s572 + $0x24] sm:$0xf]
        %v3394 = vld [vmem:[%s572 + $0x28] sm:$0xf]
        %v3395 = vld [vmem:[%s572 + $0x2c] sm:$0xf]
        %v3396 = vld [vmem:[%s572 + $0x30] sm:$0xf]
        %v3397 = vld [vmem:[%s572 + $0x34] sm:$0xf]
        %v3398 = vld [vmem:[%s572 + $0x38] sm:$0xf]
        %v3399 = vld [vmem:[%s572 + $0x3c] sm:$0xf]
        %v3400 = vld [vmem:[%s572 + $0x40] sm:$0xf]
        %v3401 = vld [vmem:[%s572 + $0x44] sm:$0xf]
        %v3402 = vld [vmem:[%s572 + $0x48] sm:$0xf]
        %v3403 = vld [vmem:[%s572 + $0x4c] sm:$0xf]
        %v3404 = vld [vmem:[%s572 + $0x50] sm:$0xf]
        %v3405 = vld [vmem:[%s572 + $0x54] sm:$0xf]
        %v3406 = vld [vmem:[%s572 + $0x58] sm:$0xf]
        %v3407 = vld [vmem:[%s572 + $0x5c] sm:$0xf]
        %v3408 = vld [vmem:[%s572 + $0x60] sm:$0xf]
        %v3409 = vld [vmem:[%s572 + $0x64] sm:$0xf]
        %v3410 = vld [vmem:[%s572 + $0x68] sm:$0xf]
        %v3411 = vld [vmem:[%s572 + $0x6c] sm:$0xf]
        %v3412 = vld [vmem:[%s572 + $0x70] sm:$0xf]
        %v3413 = vld [vmem:[%s572 + $0x74] sm:$0xf]
        %v3414 = vld [vmem:[%s572 + $0x78] sm:$0xf]
        %v3415 = vld [vmem:[%s572 + $0x7c] sm:$0xf]
        %v3416 = vld [vmem:[%s572 + $0x80] sm:$0xf]
        %v3417 = vld [vmem:[%s572 + $0x84] sm:$0xf]
        %v3418 = vld [vmem:[%s572 + $0x88] sm:$0xf]
        %v3419 = vld [vmem:[%s572 + $0x8c] sm:$0xf]
        %v3420 = vld [vmem:[%s572 + $0x90] sm:$0xf]
        %v3421 = vld [vmem:[%s572 + $0x94] sm:$0xf]
        %v3422 = vld [vmem:[%s572 + $0x98] sm:$0xf]
        %v3423 = vld [vmem:[%s572 + $0x9c] sm:$0xf]
        %v3424 = vld [vmem:[%s572 + $0xa0] sm:$0xf]
        %v3425 = vld [vmem:[%s572 + $0xa4] sm:$0xf]
        %v3426 = vld [vmem:[%s572 + $0xa8] sm:$0xf]
        %v3427 = vld [vmem:[%s572 + $0xac] sm:$0xf]
        %v3428 = vld [vmem:[%s572 + $0xb0] sm:$0xf]
        %v3429 = vld [vmem:[%s572 + $0xb4] sm:$0xf]
        %v3430 = vld [vmem:[%s572 + $0xb8] sm:$0xf]
        %v3431 = vld [vmem:[%s572 + $0xbc] sm:$0xf]
        %v3432 = vld [vmem:[%s572 + $0xc0] sm:$0xf]
        %v3433 = vld [vmem:[%s572 + $0xc4] sm:$0xf]
        %v3434 = vld [vmem:[%s572 + $0xc8] sm:$0xf]
        %v3435 = vld [vmem:[%s572 + $0xcc] sm:$0xf]
        %v3436 = vld [vmem:[%s572 + $0xd0] sm:$0xf]
        %v3437 = vld [vmem:[%s572 + $0xd4] sm:$0xf]
        %v3438 = vld [vmem:[%s572 + $0xd8] sm:$0xf]
        %v3439 = vld [vmem:[%s572 + $0xdc] sm:$0xf]
        %v3440 = vld [vmem:[%s572 + $0xe0] sm:$0xf]
        %v3441 = vld [vmem:[%s572 + $0xe4] sm:$0xf]
        %v3442 = vld [vmem:[%s572 + $0xe8] sm:$0xf]
        %v3443 = vld [vmem:[%s572 + $0xec] sm:$0xf]
        %v3444 = vld [vmem:[%s572 + $0xf0] sm:$0xf]
        %v3445 = vld [vmem:[%s572 + $0xf4] sm:$0xf]
        %v3446 = vld [vmem:[%s572 + $0xf8] sm:$0xf]
        %v3447 = vld [vmem:[%s572 + $0xfc] sm:$0xf]
        %v3448 = vld [vmem:[%s572 + $0x100] sm:$0xf]
        %v3449 = vld [vmem:[%s572 + $0x104] sm:$0xf]
        %v3450 = vld [vmem:[%s572 + $0x108] sm:$0xf]
        %v3451 = vld [vmem:[%s572 + $0x10c] sm:$0xf]
        %v3452 = vld [vmem:[%s572 + $0x110] sm:$0xf]
        %v3453 = vld [vmem:[%s572 + $0x114] sm:$0xf]
        %v3454 = vld [vmem:[%s572 + $0x118] sm:$0xf]
        %v3455 = vld [vmem:[%s572 + $0x11c] sm:$0xf]
        %v3456 = vld [vmem:[%s572 + $0x120] sm:$0xf]
        %v3457 = vld [vmem:[%s572 + $0x124] sm:$0xf]
        %v3458 = vld [vmem:[%s572 + $0x128] sm:$0xf]
        %v3459 = vld [vmem:[%s572 + $0x12c] sm:$0xf]
        %v3460 = vld [vmem:[%s572 + $0x130] sm:$0xf]
        %v3461 = vld [vmem:[%s572 + $0x134] sm:$0xf]
        %v3462 = vld [vmem:[%s572 + $0x138] sm:$0xf]
        %v3463 = vld [vmem:[%s572 + $0x13c] sm:$0xf]
        %v3464 = vld [vmem:[%s572 + $0x140] sm:$0xf]
        %v3465 = vld [vmem:[%s572 + $0x144] sm:$0xf]
        %v3466 = vld [vmem:[%s572 + $0x148] sm:$0xf]
        %v3467 = vld [vmem:[%s572 + $0x14c] sm:$0xf]
        %v3468 = vld [vmem:[%s572 + $0x150] sm:$0xf]
        %v3469 = vld [vmem:[%s572 + $0x154] sm:$0xf]
        %v3470 = vld [vmem:[%s572 + $0x158] sm:$0xf]
        %v3471 = vld [vmem:[%s572 + $0x15c] sm:$0xf]
        %v3472 = vld [vmem:[%s572 + $0x160] sm:$0xf]
        %v3473 = vld [vmem:[%s572 + $0x164] sm:$0xf]
        %v3474 = vld [vmem:[%s572 + $0x168] sm:$0xf]
        %v3475 = vld [vmem:[%s572 + $0x16c] sm:$0xf]
        %v3476 = vld [vmem:[%s572 + $0x170] sm:$0xf]
        %v3477 = vld [vmem:[%s572 + $0x174] sm:$0xf]
        %v3478 = vld [vmem:[%s572 + $0x178] sm:$0xf]
        %v3479 = vld [vmem:[%s572 + $0x17c] sm:$0xf]
        %v3480 = vld [vmem:[%s572 + $0x180] sm:$0xf]
        %v3481 = vld [vmem:[%s572 + $0x184] sm:$0xf]
        %v3482 = vld [vmem:[%s572 + $0x188] sm:$0xf]
        %v3483 = vld [vmem:[%s572 + $0x18c] sm:$0xf]
        %v3484 = vld [vmem:[%s572 + $0x190] sm:$0xf]
        %v3485 = vld [vmem:[%s572 + $0x194] sm:$0xf]
        %v3486 = vld [vmem:[%s572 + $0x198] sm:$0xf]
        %v3487 = vld [vmem:[%s572 + $0x19c] sm:$0xf]
        %v3488 = vld [vmem:[%s572 + $0x1a0] sm:$0xf]
        %v3489 = vld [vmem:[%s572 + $0x1a4] sm:$0xf]
        %v3490 = vld [vmem:[%s572 + $0x1a8] sm:$0xf]
        %v3491 = vld [vmem:[%s572 + $0x1ac] sm:$0xf]
        %v3492 = vld [vmem:[%s572 + $0x1b0] sm:$0xf]
        %v3493 = vld [vmem:[%s572 + $0x1b4] sm:$0xf]
        %v3494 = vld [vmem:[%s572 + $0x1b8] sm:$0xf]
        %v3495 = vld [vmem:[%s572 + $0x1bc] sm:$0xf]
        %v3496 = vld [vmem:[%s572 + $0x1c0] sm:$0xf]
        %v3497 = vld [vmem:[%s572 + $0x1c4] sm:$0xf]
        %v3498 = vld [vmem:[%s572 + $0x1c8] sm:$0xf]
        %v3499 = vld [vmem:[%s572 + $0x1cc] sm:$0xf]
        %v3500 = vld [vmem:[%s572 + $0x1d0] sm:$0xf]
        %v3501 = vld [vmem:[%s572 + $0x1d4] sm:$0xf]
        %v3502 = vld [vmem:[%s572 + $0x1d8] sm:$0xf]
        %v3503 = vld [vmem:[%s572 + $0x1dc] sm:$0xf]
        %v3504 = vld [vmem:[%s572 + $0x1e0] sm:$0xf]
        %v3505 = vld [vmem:[%s572 + $0x1e4] sm:$0xf]
        %v3506 = vld [vmem:[%s572 + $0x1e8] sm:$0xf]
        %v3507 = vld [vmem:[%s572 + $0x1ec] sm:$0xf]
        %v3508 = vld [vmem:[%s572 + $0x1f0] sm:$0xf]
        %v3509 = vld [vmem:[%s572 + $0x1f4] sm:$0xf]
        %v3510 = vld [vmem:[%s572 + $0x1f8] sm:$0xf]
        %v3511 = vld [vmem:[%s572 + $0x1fc] sm:$0xf]
        %v3512 = vld [vmem:[%s575] sm:$0x1]
        %v3514 = vlaneseq
        %v3515 = vshrl.u32 %v3514, 7
        %v3516 = vsub.s32 0, %v3515
        %v3517 = vrot.slane %v3512, %v3516
        %v3647 = vunpack.c.l.b16 %v3384
        %v3648 = vunpack.c.l.b16 %v3385
        %v3649 = vunpack.c.l.b16 %v3386
        %v3650 = vunpack.c.l.b16 %v3387
        %v3651 = vunpack.c.l.b16 %v3388
        %v3652 = vunpack.c.l.b16 %v3389
        %v3653 = vunpack.c.l.b16 %v3390
        %v3654 = vunpack.c.l.b16 %v3391
        %v3655 = vunpack.c.l.b16 %v3392
        %v3656 = vunpack.c.l.b16 %v3393
        %v3657 = vunpack.c.l.b16 %v3394
        %v3658 = vunpack.c.l.b16 %v3395
        %v3659 = vunpack.c.l.b16 %v3396
        %v3660 = vunpack.c.l.b16 %v3397
        %v3661 = vunpack.c.l.b16 %v3398
        %v3662 = vunpack.c.l.b16 %v3399
        %v3663 = vunpack.c.l.b16 %v3400
        %v3664 = vunpack.c.l.b16 %v3401
        %v3665 = vunpack.c.l.b16 %v3402
        %v3666 = vunpack.c.l.b16 %v3403
        %v3667 = vunpack.c.l.b16 %v3404
        %v3668 = vunpack.c.l.b16 %v3405
        %v3669 = vunpack.c.l.b16 %v3406
        %v3670 = vunpack.c.l.b16 %v3407
        %v3671 = vunpack.c.l.b16 %v3408
        %v3672 = vunpack.c.l.b16 %v3409
        %v3673 = vunpack.c.l.b16 %v3410
        %v3674 = vunpack.c.l.b16 %v3411
        %v3675 = vunpack.c.l.b16 %v3412
        %v3676 = vunpack.c.l.b16 %v3413
        %v3677 = vunpack.c.l.b16 %v3414
        %v3678 = vunpack.c.l.b16 %v3415
        %v3679 = vunpack.c.l.b16 %v3416
        %v3680 = vunpack.c.l.b16 %v3417
        %v3681 = vunpack.c.l.b16 %v3418
        %v3682 = vunpack.c.l.b16 %v3419
        %v3683 = vunpack.c.l.b16 %v3420
        %v3684 = vunpack.c.l.b16 %v3421
        %v3685 = vunpack.c.l.b16 %v3422
        %v3686 = vunpack.c.l.b16 %v3423
        %v3687 = vunpack.c.l.b16 %v3424
        %v3688 = vunpack.c.l.b16 %v3425
        %v3689 = vunpack.c.l.b16 %v3426
        %v3690 = vunpack.c.l.b16 %v3427
        %v3691 = vunpack.c.l.b16 %v3428
        %v3692 = vunpack.c.l.b16 %v3429
        %v3693 = vunpack.c.l.b16 %v3430
        %v3694 = vunpack.c.l.b16 %v3431
        %v3695 = vunpack.c.l.b16 %v3432
        %v3696 = vunpack.c.l.b16 %v3433
        %v3697 = vunpack.c.l.b16 %v3434
        %v3698 = vunpack.c.l.b16 %v3435
        %v3699 = vunpack.c.l.b16 %v3436
        %v3700 = vunpack.c.l.b16 %v3437
        %v3701 = vunpack.c.l.b16 %v3438
        %v3702 = vunpack.c.l.b16 %v3439
        %v3703 = vunpack.c.l.b16 %v3440
        %v3704 = vunpack.c.l.b16 %v3441
        %v3705 = vunpack.c.l.b16 %v3442
        %v3706 = vunpack.c.l.b16 %v3443
        %v3707 = vunpack.c.l.b16 %v3444
        %v3708 = vunpack.c.l.b16 %v3445
        %v3709 = vunpack.c.l.b16 %v3446
        %v3710 = vunpack.c.l.b16 %v3447
        %v3711 = vunpack.c.l.b16 %v3448
        %v3712 = vunpack.c.l.b16 %v3449
        %v3713 = vunpack.c.l.b16 %v3450
        %v3714 = vunpack.c.l.b16 %v3451
        %v3715 = vunpack.c.l.b16 %v3452
        %v3716 = vunpack.c.l.b16 %v3453
        %v3717 = vunpack.c.l.b16 %v3454
        %v3718 = vunpack.c.l.b16 %v3455
        %v3719 = vunpack.c.l.b16 %v3456
        %v3720 = vunpack.c.l.b16 %v3457
        %v3721 = vunpack.c.l.b16 %v3458
        %v3722 = vunpack.c.l.b16 %v3459
        %v3723 = vunpack.c.l.b16 %v3460
        %v3724 = vunpack.c.l.b16 %v3461
        %v3725 = vunpack.c.l.b16 %v3462
        %v3726 = vunpack.c.l.b16 %v3463
        %v3727 = vunpack.c.l.b16 %v3464
        %v3728 = vunpack.c.l.b16 %v3465
        %v3729 = vunpack.c.l.b16 %v3466
        %v3730 = vunpack.c.l.b16 %v3467
        %v3731 = vunpack.c.l.b16 %v3468
        %v3732 = vunpack.c.l.b16 %v3469
        %v3733 = vunpack.c.l.b16 %v3470
        %v3734 = vunpack.c.l.b16 %v3471
        %v3735 = vunpack.c.l.b16 %v3472
        %v3736 = vunpack.c.l.b16 %v3473
        %v3737 = vunpack.c.l.b16 %v3474
        %v3738 = vunpack.c.l.b16 %v3475
        %v3739 = vunpack.c.l.b16 %v3476
        %v3740 = vunpack.c.l.b16 %v3477
        %v3741 = vunpack.c.l.b16 %v3478
        %v3742 = vunpack.c.l.b16 %v3479
        %v3743 = vunpack.c.l.b16 %v3480
        %v3744 = vunpack.c.l.b16 %v3481
        %v3745 = vunpack.c.l.b16 %v3482
        %v3746 = vunpack.c.l.b16 %v3483
        %v3747 = vunpack.c.l.b16 %v3484
        %v3748 = vunpack.c.l.b16 %v3485
        %v3749 = vunpack.c.l.b16 %v3486
        %v3750 = vunpack.c.l.b16 %v3487
        %v3751 = vunpack.c.l.b16 %v3488
        %v3752 = vunpack.c.l.b16 %v3489
        %v3753 = vunpack.c.l.b16 %v3490
        %v3754 = vunpack.c.l.b16 %v3491
        %v3755 = vunpack.c.l.b16 %v3492
        %v3756 = vunpack.c.l.b16 %v3493
        %v3757 = vunpack.c.l.b16 %v3494
        %v3758 = vunpack.c.l.b16 %v3495
        %v3759 = vunpack.c.l.b16 %v3496
        %v3760 = vunpack.c.l.b16 %v3497
        %v3761 = vunpack.c.l.b16 %v3498
        %v3762 = vunpack.c.l.b16 %v3499
        %v3763 = vunpack.c.l.b16 %v3500
        %v3764 = vunpack.c.l.b16 %v3501
        %v3765 = vunpack.c.l.b16 %v3502
        %v3766 = vunpack.c.l.b16 %v3503
        %v3767 = vunpack.c.l.b16 %v3504
        %v3768 = vunpack.c.l.b16 %v3505
        %v3769 = vunpack.c.l.b16 %v3506
        %v3770 = vunpack.c.l.b16 %v3507
        %v3771 = vunpack.c.l.b16 %v3508
        %v3772 = vunpack.c.l.b16 %v3509
        %v3773 = vunpack.c.l.b16 %v3510
        %v3774 = vunpack.c.l.b16 %v3511
        %v3775 = vpack.c.b16 %v3648, %v3647
        %v3776 = vpack.c.b16 %v3650, %v3649
        %v3777 = vpack.c.b16 %v3652, %v3651
        %v3778 = vpack.c.b16 %v3654, %v3653
        %v3779 = vpack.c.b16 %v3656, %v3655
        %v3780 = vpack.c.b16 %v3658, %v3657
        %v3781 = vpack.c.b16 %v3660, %v3659
        %v3782 = vpack.c.b16 %v3662, %v3661
        %v3783 = vpack.c.b16 %v3664, %v3663
        %v3784 = vpack.c.b16 %v3666, %v3665
        %v3785 = vpack.c.b16 %v3668, %v3667
        %v3786 = vpack.c.b16 %v3670, %v3669
        %v3787 = vpack.c.b16 %v3672, %v3671
        %v3788 = vpack.c.b16 %v3674, %v3673
        %v3789 = vpack.c.b16 %v3676, %v3675
        %v3790 = vpack.c.b16 %v3678, %v3677
        %v3791 = vpack.c.b16 %v3680, %v3679
        %v3792 = vpack.c.b16 %v3682, %v3681
        %v3793 = vpack.c.b16 %v3684, %v3683
        %v3794 = vpack.c.b16 %v3686, %v3685
        %v3795 = vpack.c.b16 %v3688, %v3687
        %v3796 = vpack.c.b16 %v3690, %v3689
        %v3797 = vpack.c.b16 %v3692, %v3691
        %v3798 = vpack.c.b16 %v3694, %v3693
        %v3799 = vpack.c.b16 %v3696, %v3695
        %v3800 = vpack.c.b16 %v3698, %v3697
        %v3801 = vpack.c.b16 %v3700, %v3699
        %v3802 = vpack.c.b16 %v3702, %v3701
        %v3803 = vpack.c.b16 %v3704, %v3703
        %v3804 = vpack.c.b16 %v3706, %v3705
        %v3805 = vpack.c.b16 %v3708, %v3707
        %v3806 = vpack.c.b16 %v3710, %v3709
        %v3807 = vpack.c.b16 %v3712, %v3711
        %v3808 = vpack.c.b16 %v3714, %v3713
        %v3809 = vpack.c.b16 %v3716, %v3715
        %v3810 = vpack.c.b16 %v3718, %v3717
        %v3811 = vpack.c.b16 %v3720, %v3719
        %v3812 = vpack.c.b16 %v3722, %v3721
        %v3813 = vpack.c.b16 %v3724, %v3723
        %v3814 = vpack.c.b16 %v3726, %v3725
        %v3815 = vpack.c.b16 %v3728, %v3727
        %v3816 = vpack.c.b16 %v3730, %v3729
        %v3817 = vpack.c.b16 %v3732, %v3731
        %v3818 = vpack.c.b16 %v3734, %v3733
        %v3819 = vpack.c.b16 %v3736, %v3735
        %v3820 = vpack.c.b16 %v3738, %v3737
        %v3821 = vpack.c.b16 %v3740, %v3739
        %v3822 = vpack.c.b16 %v3742, %v3741
        %v3823 = vpack.c.b16 %v3744, %v3743
        %v3824 = vpack.c.b16 %v3746, %v3745
        %v3825 = vpack.c.b16 %v3748, %v3747
        %v3826 = vpack.c.b16 %v3750, %v3749
        %v3827 = vpack.c.b16 %v3752, %v3751
        %v3828 = vpack.c.b16 %v3754, %v3753
        %v3829 = vpack.c.b16 %v3756, %v3755
        %v3830 = vpack.c.b16 %v3758, %v3757
        %v3831 = vpack.c.b16 %v3760, %v3759
        %v3832 = vpack.c.b16 %v3762, %v3761
        %v3833 = vpack.c.b16 %v3764, %v3763
        %v3834 = vpack.c.b16 %v3766, %v3765
        %v3835 = vpack.c.b16 %v3768, %v3767
        %v3836 = vpack.c.b16 %v3770, %v3769
        %v3837 = vpack.c.b16 %v3772, %v3771
        %v3838 = vpack.c.b16 %v3774, %v3773
        %3903 = vmatprep.subr.bf16.mxu0 0
        %3904 = vmatpush1.bf16.msra.mxu0 %v3782
        %3905 = vmatprep.subr.bf16.mxu0 0
        %3906 = vmatpush1.bf16.msra.mxu0 %v3781
        %3907 = vmatprep.subr.bf16.mxu0 0
        %3908 = vmatpush1.bf16.msra.mxu0 %v3780
        %3909 = vmatprep.subr.bf16.mxu0 0
        %3910 = vmatpush1.bf16.msra.mxu0 %v3779
        %3911 = vmatprep.subr.bf16.mxu0 0
        %3912 = vmatpush1.bf16.msra.mxu0 %v3778
        %3913 = vmatprep.subr.bf16.mxu0 0
        %3914 = vmatpush1.bf16.msra.mxu0 %v3777
        %3915 = vmatprep.subr.bf16.mxu0 0
        %3916 = vmatpush1.bf16.msra.mxu0 %v3776
        %3917 = vmatprep.subr.bf16.mxu0 0
        %3918 = vmatpush1.bf16.msra.mxu0 %v3775
        %3919 = vmatprep.subr.bf16.mxu0 0
        %3920 = vmatpush2.bf16.msra.mxu0 %v3790
        %3921 = vmatprep.subr.bf16.mxu0 0
        %3922 = vmatpush2.bf16.msra.mxu0 %v3789
        %3923 = vmatprep.subr.bf16.mxu0 0
        %3924 = vmatpush2.bf16.msra.mxu0 %v3788
        %3925 = vmatprep.subr.bf16.mxu0 0
        %3926 = vmatpush2.bf16.msra.mxu0 %v3787
        %3927 = vmatprep.subr.bf16.mxu0 0
        %3928 = vmatpush2.bf16.msra.mxu0 %v3786
        %3929 = vmatprep.subr.bf16.mxu0 0
        %3930 = vmatpush2.bf16.msra.mxu0 %v3785
        %3931 = vmatprep.subr.bf16.mxu0 0
        %3932 = vmatpush2.bf16.msra.mxu0 %v3784
        %3933 = vmatprep.subr.bf16.mxu0 0
        %3934 = vmatpush2.bf16.msra.mxu0 %v3783
        %3935 = vmatprep.mubr.bf16.mxu0 %v3377
        %3936 = vmatmul.mubr.bf16.gmra.mxu0 %v3376
        %v3937 = vpop.f32.mrf.mxu0
        %v3938 = vadd.f32 %v3517, %v3937
        %v3939 = vpop.f32.mrf.mxu0
        %v3940 = vpop.f32.mrf.mxu0
        %v3941 = vadd.f32 %v3517, %v3940
        %v3942 = vpop.f32.mrf.mxu0
        %3943 = vdwg.mxu0
        %3944 = vmatprep.subr.bf16.mxu0 0
        %3945 = vmatpush1.bf16.msra.mxu0 %v3798
        %3946 = vmatprep.subr.bf16.mxu0 0
        %3947 = vmatpush1.bf16.msra.mxu0 %v3797
        %3948 = vmatprep.subr.bf16.mxu0 0
        %3949 = vmatpush1.bf16.msra.mxu0 %v3796
        %3950 = vmatprep.subr.bf16.mxu0 0
        %3951 = vmatpush1.bf16.msra.mxu0 %v3795
        %3952 = vmatprep.subr.bf16.mxu0 0
        %3953 = vmatpush1.bf16.msra.mxu0 %v3794
        %3954 = vmatprep.subr.bf16.mxu0 0
        %3955 = vmatpush1.bf16.msra.mxu0 %v3793
        %3956 = vmatprep.subr.bf16.mxu0 0
        %3957 = vmatpush1.bf16.msra.mxu0 %v3792
        %3958 = vmatprep.subr.bf16.mxu0 0
        %3959 = vmatpush1.bf16.msra.mxu0 %v3791
        %3960 = vmatprep.subr.bf16.mxu0 0
        %3961 = vmatpush2.bf16.msra.mxu0 %v3806
        %3962 = vmatprep.subr.bf16.mxu0 0
        %3963 = vmatpush2.bf16.msra.mxu0 %v3805
        %3964 = vmatprep.subr.bf16.mxu0 0
        %3965 = vmatpush2.bf16.msra.mxu0 %v3804
        %3966 = vmatprep.subr.bf16.mxu0 0
        %3967 = vmatpush2.bf16.msra.mxu0 %v3803
        %3968 = vmatprep.subr.bf16.mxu0 0
        %3969 = vmatpush2.bf16.msra.mxu0 %v3802
        %3970 = vmatprep.subr.bf16.mxu0 0
        %3971 = vmatpush2.bf16.msra.mxu0 %v3801
        %3972 = vmatprep.subr.bf16.mxu0 0
        %3973 = vmatpush2.bf16.msra.mxu0 %v3800
        %3974 = vmatprep.subr.bf16.mxu0 0
        %3975 = vmatpush2.bf16.msra.mxu0 %v3799
        %3976 = vmatprep.mubr.bf16.mxu0 %v3379
        %3977 = vmatmul.mubr.bf16.gmra.mxu0 %v3378
        %v3978 = vpop.f32.mrf.mxu0
        %v3979 = vadd.f32 %v3938, %v3978
        %v3980 = vpop.f32.mrf.mxu0
        %v3981 = vpop.f32.mrf.mxu0
        %v3982 = vadd.f32 %v3941, %v3981
        %v3983 = vpop.f32.mrf.mxu0
        %3984 = vdwg.mxu0
        %3985 = vmatprep.subr.bf16.mxu0 0
        %3986 = vmatpush1.bf16.msra.mxu0 %v3814
        %3987 = vmatprep.subr.bf16.mxu0 0
        %3988 = vmatpush1.bf16.msra.mxu0 %v3813
        %3989 = vmatprep.subr.bf16.mxu0 0
        %3990 = vmatpush1.bf16.msra.mxu0 %v3812
        %3991 = vmatprep.subr.bf16.mxu0 0
        %3992 = vmatpush1.bf16.msra.mxu0 %v3811
        %3993 = vmatprep.subr.bf16.mxu0 0
        %3994 = vmatpush1.bf16.msra.mxu0 %v3810
        %3995 = vmatprep.subr.bf16.mxu0 0
        %3996 = vmatpush1.bf16.msra.mxu0 %v3809
        %3997 = vmatprep.subr.bf16.mxu0 0
        %3998 = vmatpush1.bf16.msra.mxu0 %v3808
        %3999 = vmatprep.subr.bf16.mxu0 0
        %4000 = vmatpush1.bf16.msra.mxu0 %v3807
        %4001 = vmatprep.subr.bf16.mxu0 0
        %4002 = vmatpush2.bf16.msra.mxu0 %v3822
        %4003 = vmatprep.subr.bf16.mxu0 0
        %4004 = vmatpush2.bf16.msra.mxu0 %v3821
        %4005 = vmatprep.subr.bf16.mxu0 0
        %4006 = vmatpush2.bf16.msra.mxu0 %v3820
        %4007 = vmatprep.subr.bf16.mxu0 0
        %4008 = vmatpush2.bf16.msra.mxu0 %v3819
        %4009 = vmatprep.subr.bf16.mxu0 0
        %4010 = vmatpush2.bf16.msra.mxu0 %v3818
        %4011 = vmatprep.subr.bf16.mxu0 0
        %4012 = vmatpush2.bf16.msra.mxu0 %v3817
        %4013 = vmatprep.subr.bf16.mxu0 0
        %4014 = vmatpush2.bf16.msra.mxu0 %v3816
        %4015 = vmatprep.subr.bf16.mxu0 0
        %4016 = vmatpush2.bf16.msra.mxu0 %v3815
        %4017 = vmatprep.mubr.bf16.mxu0 %v3381
        %4018 = vmatmul.mubr.bf16.gmra.mxu0 %v3380
        %v4019 = vpop.f32.mrf.mxu0
        %v4020 = vadd.f32 %v3979, %v4019
        %v4021 = vpop.f32.mrf.mxu0
        %v4022 = vpop.f32.mrf.mxu0
        %v4023 = vadd.f32 %v3982, %v4022
        %v4024 = vpop.f32.mrf.mxu0
        %4025 = vdwg.mxu0
        %4026 = vmatprep.subr.bf16.mxu0 0
        %4027 = vmatpush1.bf16.msra.mxu0 %v3830
        %4028 = vmatprep.subr.bf16.mxu0 0
        %4029 = vmatpush1.bf16.msra.mxu0 %v3829
        %4030 = vmatprep.subr.bf16.mxu0 0
        %4031 = vmatpush1.bf16.msra.mxu0 %v3828
        %4032 = vmatprep.subr.bf16.mxu0 0
        %4033 = vmatpush1.bf16.msra.mxu0 %v3827
        %4034 = vmatprep.subr.bf16.mxu0 0
        %4035 = vmatpush1.bf16.msra.mxu0 %v3826
        %4036 = vmatprep.subr.bf16.mxu0 0
        %4037 = vmatpush1.bf16.msra.mxu0 %v3825
        %4038 = vmatprep.subr.bf16.mxu0 0
        %4039 = vmatpush1.bf16.msra.mxu0 %v3824
        %4040 = vmatprep.subr.bf16.mxu0 0
        %4041 = vmatpush1.bf16.msra.mxu0 %v3823
        %4042 = vmatprep.subr.bf16.mxu0 0
        %4043 = vmatpush2.bf16.msra.mxu0 %v3838
        %4044 = vmatprep.subr.bf16.mxu0 0
        %4045 = vmatpush2.bf16.msra.mxu0 %v3837
        %4046 = vmatprep.subr.bf16.mxu0 0
        %4047 = vmatpush2.bf16.msra.mxu0 %v3836
        %4048 = vmatprep.subr.bf16.mxu0 0
        %4049 = vmatpush2.bf16.msra.mxu0 %v3835
        %4050 = vmatprep.subr.bf16.mxu0 0
        %4051 = vmatpush2.bf16.msra.mxu0 %v3834
        %4052 = vmatprep.subr.bf16.mxu0 0
        %4053 = vmatpush2.bf16.msra.mxu0 %v3833
        %4054 = vmatprep.subr.bf16.mxu0 0
        %4055 = vmatpush2.bf16.msra.mxu0 %v3832
        %4056 = vmatprep.subr.bf16.mxu0 0
        %4057 = vmatpush2.bf16.msra.mxu0 %v3831
        %4058 = vmatprep.mubr.bf16.mxu0 %v3383
        %4059 = vmatmul.mubr.bf16.gmra.mxu0 %v3382
        %v4060 = vpop.f32.mrf.mxu0
        %v4061 = vadd.f32 %v4020, %v4060
        %v4062 = vpop.f32.mrf.mxu0
        %v4063 = vpop.f32.mrf.mxu0
        %v4064 = vadd.f32 %v4023, %v4063
        %v4065 = vpop.f32.mrf.mxu0
        %4066 = vdwg.mxu0
        %v4067 = vld [vmem:[%s579] sm:$0x3]
        %v4068 = vadd.f32 %v2980, %v4061
        %v4069 = vadd.f32 %v2981, %v4064
        %v4070 = vsel %vm662, %v4068, 0.0
        %4071 = vadd.xlane.f32.xlu0 %v4070
        %v4072 = vpop.xlane.xlu0 %4071
        %v4073 = vsel %vm662, %v4069, 0.0
        %4074 = vadd.xlane.f32.xlu0 %v4073
        %v4075 = vpop.xlane.xlu0 %4074
        %v4076 = vmul.f32 %v4072, %v2949
        %v4077 = vmul.f32 %v4075, %v2949
        %v4078 = vsub.f32 %v4068, %v4076
        %v4079 = vsub.f32 %v4069, %v4077
        %v4080 = vmul.f32 %v4078, %v4078
        %v4081 = vmul.f32 %v4079, %v4079
        %v4082 = vsel %vm662, %v4080, 0.0
        %4083 = vadd.xlane.f32.xlu0 %v4082
        %v4084 = vpop.xlane.xlu0 %4083
        %v4085 = vsel %vm662, %v4081, 0.0
        %4086 = vadd.xlane.f32.xlu0 %v4085
        %v4087 = vpop.xlane.xlu0 %4086
        %v4088 = vmul.f32 %v4084, %v2949
        %v4089 = vmul.f32 %v4087, %v2949
        %v4090 = vadd.f32 %v4088, 1e-05
        %v4091 = vadd.f32 %v4089, 1e-05
        %v4092 = vrsqrt.pop %v4090
        %v4093 = vrsqrt.pop %v4091
        %v4094 = vmul.f32 %v4078, %v4092
        %v4095 = vmul.f32 %v4079, %v4093
        %v4096 = vlaneseq
        %v4097 = vshrl.u32 %v4096, 7
        %v4098 = vsub.s32 0, %v4097
        %v4099 = vrot.slane %v4067, %v4098
        %v4100 = vmul.f32 %v4094, %v4099
        %v4101 = vmul.f32 %v4095, %v4099
        %v4102 = vlaneseq
        %v4103 = vshrl.u32 %v4102, 7
        %v4104 = vsub.s32 1, %v4103
        %v4105 = vrot.slane %v4067, %v4104
        %v4106 = vadd.f32 %v4100, %v4105
        %v4107 = vadd.f32 %v4101, %v4105
        %4108 = vst.msk [vmem:[#allocation2] sm:$0xff] %vm662, %v4106
        %4109 = vst.msk [vmem:[#allocation2 + $0x8] sm:$0xff] %vm662, %v4107
        %p4110 = scmp.eq.s32.totalorder %s25, 1
        // Predicated region
        $region77: #{tpu_custom_call.1} parent=71 // pred_check
          %p4111 = pneg %p4110
        $region78: #{tpu_custom_call.1} parent=71 // pred_check_branch
          %4113 = sbr.rel (%p4111) target = $region80
        $region79: #{tpu_custom_call.1} parent=71 // pred_region
          %4114 = vst.msk [vmem:[#allocation3] sm:$0xff] %vm662, %v4106
          %4115 = vst.msk [vmem:[#allocation3 + $0x8] sm:$0xff] %vm662, %v4107
        $region80: #{tpu_custom_call.1} parent=71 // pred_fallthru
          _
        // Predicated region
        $region81: #{tpu_custom_call.1} parent=71 // pred_check
          %p4116 = pneg %p361
        $region82: #{tpu_custom_call.1} parent=71 // pred_check_branch
          %4118 = sbr.rel (%p4116) target = $region84
        $region83: #{tpu_custom_call.1} parent=71 // pred_region
          %s4120 = ssub.s32 256, 256
          %4121 = vsyncadd [#allocation4], %s4120
          %s4122 = sshll.u32 [#allocation3], 4
          %s4123 = int_to_ptr.vmem [resolvable:$true] %s4122
          %4128 = dma.vmem_to_hbm [thread:$0]  %s4123, 256, %s13, [#allocation4], 128, 128, 8
        $region84: #{tpu_custom_call.1} parent=71 // pred_fallthru
          _
        // Predicated region
        $region85: #{tpu_custom_call.1} parent=71 // pred_check
          %p4129 = pneg %p361
        $region86: #{tpu_custom_call.1} parent=71 // pred_check_branch
          %4131 = sbr.rel (%p4129) target = $region88
        $region87: #{tpu_custom_call.1} parent=71 // pred_region
          %4132 = dma.done [#allocation4], 256
        $region88: #{tpu_custom_call.1} parent=71 // pred_fallthru
          _
      $region72: #{tpu_custom_call.1} parent=5 // pred_fallthru
        _
      %p4133 = scmp.le.s32.totalorder 2, %s20
      // Predicated region
      $region89: #{tpu_custom_call.1} parent=5 // pred_check
        %p4134 = pneg %p4133
      $region90: #{tpu_custom_call.1} parent=5 // pred_check_branch
        %4136 = sbr.rel (%p4134) target = $region92
      $region91: #{tpu_custom_call.1} parent=5 // pred_region
        %s4137 = ssub.s32 %s20, 2
      $region92: #{tpu_custom_call.1} parent=5 // pred_fallthru
        _
    $region6: #{tpu_custom_call.1} parent=1 // loop_footer
      %s24 = sadd.s32 1, %s20
    $region7: #{tpu_custom_call.1} parent=1 // loop_footer_branch
      %19 = sbr.rel target = $region3
    $region8: #{tpu_custom_call.1} parent=1 // loop_exit
      _
    %4138 = vsyncpa [#allocation4], 1
    %s4139 = scalar_lea.sflag [#allocation4], 1
    %4140 = vsyncpa %s4139, 1

</llo_original>
